<compile_context>
chip_gen: v7x
topology: tpu7x:2x2x1
jax: 0.10.0
libtpu: 0.0.40
codegen_flags: <defaults>
</compile_context>

<pallas_src>
import functools
import math

import jax
import jax.numpy as jnp
from jax.experimental import pallas as pl
from jax.experimental.pallas import tpu as pltpu


# --------------------------------------------------------------------------
# Fused encoder kernel: one grid step == one MultiHeadAttentionLayer
# --------------------------------------------------------------------------
def _encoder_layers_kernel(x_ref, wq_ref, wk_ref, wv_ref, wo_ref,
                           bn1g_ref, bn1b_ref,
                           ff1w_ref, ff1b_ref, ff2w_ref, ff2b_ref,
                           bn2g_ref, bn2b_ref,
                           h_ref, gmean_ref, *, n_heads, batch):
    layer = pl.program_id(0)

    # h_ref (output block, constant index map) is the layer-to-layer carry.
    @pl.when(layer == 0)
    def _():
        h_ref[...] = x_ref[...]

    BS, D = h_ref.shape
    B = batch
    S = BS // B
    H = n_heads
    dk = D // H
    norm = 1.0 / math.sqrt(dk)
    eps = 1e-5
    bf16 = jnp.bfloat16

    h = h_ref[...]                      # (B*S, D) f32, VMEM-resident carry
    hb = h.astype(bf16)

    # ---- fused Q/K/V projections: one D-wide matmul each (bf16 x bf16 -> f32) ----
    q = jnp.dot(hb, wq_ref[0], preferred_element_type=jnp.float32)    # (BS, D)
    k = jnp.dot(hb, wk_ref[0], preferred_element_type=jnp.float32)
    v = jnp.dot(hb, wv_ref[0], preferred_element_type=jnp.float32)

    # ---- all heads folded into one batched-matmul batch dim: (B*H, S, dk) ----
    def to_heads(t):
        return (t.reshape(B, S, H, dk)
                 .transpose(0, 2, 1, 3)
                 .reshape(B * H, S, dk)
                 .astype(bf16))

    qh, kh, vh = to_heads(q), to_heads(k), to_heads(v)

    # scores for every (batch, head) pair in ONE batched matmul (f32 accumulate)
    scores = jnp.einsum('gik,gjk->gij', qh, kh,
                        preferred_element_type=jnp.float32) * norm    # (B*H, S, S)

    # ---- one softmax over all heads (f32) ----
    m = jnp.max(scores, axis=-1, keepdims=True)
    e = jnp.exp(scores - m)
    attn = e / jnp.sum(e, axis=-1, keepdims=True)

    ctx = jnp.einsum('gij,gjk->gik', attn.astype(bf16), vh,
                     preferred_element_type=jnp.float32)              # (B*H, S, dk)

    # head-major rows -> (BS, H*dk); matches torch heads.permute(1,2,0,3).view
    heads = (ctx.reshape(B, H, S, dk)
                .transpose(0, 2, 1, 3)
                .reshape(BS, D))

    # ---- fused output projection (one [BS,D] @ [D,D] matmul) + residual ----
    mha = jnp.dot(heads.astype(bf16), wo_ref[0],
                  preferred_element_type=jnp.float32)
    y = h + mha

    # ---- BatchNorm1d #1 (training-mode batch stats, one-pass, biased var) ----
    mean1 = jnp.mean(y, axis=0, keepdims=True)
    var1 = jnp.mean(y * y, axis=0, keepdims=True) - mean1 * mean1
    y = (y - mean1) * jax.lax.rsqrt(var1 + eps) * bn1g_ref[0] + bn1b_ref[0]

    # ---- feed-forward (Linear -> ReLU -> Linear) + residual ----
    f = jnp.dot(y.astype(bf16), ff1w_ref[0],
                preferred_element_type=jnp.float32) + ff1b_ref[0]
    f = jnp.maximum(f, 0.0)
    f = jnp.dot(f.astype(bf16), ff2w_ref[0],
                preferred_element_type=jnp.float32) + ff2b_ref[0]
    z = y + f

    # ---- BatchNorm1d #2 (one-pass stats) ----
    mean2 = jnp.mean(z, axis=0, keepdims=True)
    var2 = jnp.mean(z * z, axis=0, keepdims=True) - mean2 * mean2
    z = (z - mean2) * jax.lax.rsqrt(var2 + eps) * bn2g_ref[0] + bn2b_ref[0]

    h_ref[...] = z

    # graph embedding h.mean(dim=1): only the last layer's value survives,
    # so compute it only there (saves L-1 cross-sublane reductions).
    @pl.when(layer == pl.num_programs(0) - 1)
    def _():
        gmean_ref[...] = jnp.mean(z.reshape(B, S, D), axis=1)


# --------------------------------------------------------------------------
# Wrapper: single pallas_call over all layers, flat [B*S, D] carry
# --------------------------------------------------------------------------
def graph_attention_encoder(x, p, *, n_heads):
    B, S, D = x.shape
    BS = B * S
    L = p['wq'].shape[0]
    FF = p['ff1_w'].shape[-1]

    x2 = x.reshape(BS, D)             # flatten once in the wrapper (free in HBM)

    w3 = lambda l: (l, 0, 0)          # per-layer weight blocks
    full2 = lambda l: (0, 0)          # whole-array / carried blocks

    kernel = functools.partial(_encoder_layers_kernel, n_heads=n_heads, batch=B)
    # Note: x could be HBM-aliased to the h output (input_output_aliases);
    # skipped here since it only saves one tiny buffer at these shapes.
    h2, gmean = pl.pallas_call(
        kernel,
        grid=(L,),
        in_specs=[
            pl.BlockSpec((BS, D), full2),         # x (flat, loaded once)
            pl.BlockSpec((1, D, D), w3),          # wq (heads fused on columns)
            pl.BlockSpec((1, D, D), w3),          # wk
            pl.BlockSpec((1, D, D), w3),          # wv
            pl.BlockSpec((1, D, D), w3),          # wo (H*dv, D), head-major rows
            pl.BlockSpec((1, 1, D), w3),          # bn1 gamma
            pl.BlockSpec((1, 1, D), w3),          # bn1 beta
            pl.BlockSpec((1, D, FF), w3),         # ff1 weight
            pl.BlockSpec((1, 1, FF), w3),         # ff1 bias
            pl.BlockSpec((1, FF, D), w3),         # ff2 weight
            pl.BlockSpec((1, 1, D), w3),          # ff2 bias
            pl.BlockSpec((1, 1, D), w3),          # bn2 gamma
            pl.BlockSpec((1, 1, D), w3),          # bn2 beta
        ],
        out_specs=(pl.BlockSpec((BS, D), full2),
                   pl.BlockSpec((B, D), full2)),
        out_shape=(jax.ShapeDtypeStruct((BS, D), jnp.float32),
                   jax.ShapeDtypeStruct((B, D), jnp.float32)),
        # Layer axis carries h -> sequential ("arbitrary").
        compiler_params=pltpu.CompilerParams(
            dimension_semantics=("arbitrary",)),
    )(x2, p['wq'], p['wk'], p['wv'], p['wo'],
      p['bn1_g'], p['bn1_b'], p['ff1_w'], p['ff1_b'],
      p['ff2_w'], p['ff2_b'], p['bn2_g'], p['bn2_b'])
    return h2.reshape(B, S, D), gmean


# --------------------------------------------------------------------------
# Parameter init (PyTorch-native shapes) + packing into fused/stacked layout
# --------------------------------------------------------------------------
def init_params(key, *, n_layers, n_heads, embed_dim, ff_hidden):
    D, H, FF = embed_dim, n_heads, ff_hidden
    dk = D // H

    def u(k, shape, stdv):
        return jax.random.uniform(k, shape, jnp.float32, -stdv, stdv)

    layers = []
    for i in range(n_layers):
        ks = jax.random.split(jax.random.fold_in(key, i), 12)
        layers.append(dict(
            W_query=u(ks[0], (H, D, dk), 1 / math.sqrt(dk)),
            W_key=u(ks[1], (H, D, dk), 1 / math.sqrt(dk)),
            W_val=u(ks[2], (H, D, dk), 1 / math.sqrt(dk)),
            W_out=u(ks[3], (H, dk, D), 1 / math.sqrt(D)),
            bn1_g=u(ks[4], (D,), 1 / math.sqrt(D)),
            bn1_b=u(ks[5], (D,), 1 / math.sqrt(D)),
            ff1_w=u(ks[6], (D, FF), 1 / math.sqrt(D)),
            ff1_b=u(ks[7], (FF,), 1 / math.sqrt(D)),
            ff2_w=u(ks[8], (FF, D), 1 / math.sqrt(FF)),
            ff2_b=u(ks[9], (D,), 1 / math.sqrt(FF)),
            bn2_g=u(ks[10], (D,), 1 / math.sqrt(D)),
            bn2_b=u(ks[11], (D,), 1 / math.sqrt(D)),
        ))

    def stack(name):
        return jnp.stack([l[name] for l in layers])

    # (L,H,D,dk) -> (L,D,H*dk): head h occupies output cols [h*dk, (h+1)*dk)
    def fuse_qkv(w):
        return w.transpose(0, 2, 1, 3).reshape(n_layers, D, H * dk)

    bf16 = jnp.bfloat16
    return dict(
        wq=fuse_qkv(stack('W_query')).astype(bf16),
        wk=fuse_qkv(stack('W_key')).astype(bf16),
        wv=fuse_qkv(stack('W_val')).astype(bf16),
        wo=stack('W_out').reshape(n_layers, H * dk, D).astype(bf16),  # head-major rows
        bn1_g=stack('bn1_g').reshape(n_layers, 1, D),
        bn1_b=stack('bn1_b').reshape(n_layers, 1, D),
        ff1_w=stack('ff1_w').astype(bf16),
        ff1_b=stack('ff1_b').reshape(n_layers, 1, FF),
        ff2_w=stack('ff2_w').astype(bf16),
        ff2_b=stack('ff2_b').reshape(n_layers, 1, D),
        bn2_g=stack('bn2_g').reshape(n_layers, 1, D),
        bn2_b=stack('bn2_b').reshape(n_layers, 1, D),
    )


if __name__ == "__main__":
    # Small shapes consistent with the module: batch=2, graph_size=8,
    # embed_dim=32, n_heads=8 (dk=4), feed_forward_hidden=512, n_layers=2.
    B, S, D, H, FF, L = 2, 8, 32, 8, 512, 2

    key = jax.random.PRNGKey(0)
    kx, kp = jax.random.split(key)
    x = jax.random.normal(kx, (B, S, D), jnp.float32)
    params = init_params(kp, n_layers=L, n_heads=H, embed_dim=D, ff_hidden=FF)

    fwd = jax.jit(functools.partial(graph_attention_encoder, n_heads=H))
    h, graph_embed = fwd(x, params)
    jax.block_until_ready((h, graph_embed))

    assert h.shape == (B, S, D)
    assert graph_embed.shape == (B, D)
    assert bool(jnp.all(jnp.isfinite(h))) and bool(jnp.all(jnp.isfinite(graph_embed)))
    print("KERNEL_OK")
</pallas_src>

<mosaic_0001>
module attributes {stable_mosaic.version = 11 : i64} {
  func.func @_encoder_layers_kernel(%arg0: i32, %arg1: memref<16x32xf32, #tpu.memory_space<vmem>>, %arg2: memref<1x32x32xbf16, #tpu.memory_space<vmem>>, %arg3: memref<1x32x32xbf16, #tpu.memory_space<vmem>>, %arg4: memref<1x32x32xbf16, #tpu.memory_space<vmem>>, %arg5: memref<1x32x32xbf16, #tpu.memory_space<vmem>>, %arg6: memref<1x1x32xf32, #tpu.memory_space<vmem>>, %arg7: memref<1x1x32xf32, #tpu.memory_space<vmem>>, %arg8: memref<1x32x512xbf16, #tpu.memory_space<vmem>>, %arg9: memref<1x1x512xf32, #tpu.memory_space<vmem>>, %arg10: memref<1x512x32xbf16, #tpu.memory_space<vmem>>, %arg11: memref<1x1x32xf32, #tpu.memory_space<vmem>>, %arg12: memref<1x1x32xf32, #tpu.memory_space<vmem>>, %arg13: memref<1x1x32xf32, #tpu.memory_space<vmem>>, %arg14: memref<16x32xf32, #tpu.memory_space<vmem>>, %arg15: memref<2x32xf32, #tpu.memory_space<vmem>>) attributes {dimension_semantics = [#tpu.dimension_semantics<arbitrary>], iteration_bounds = array<i64: 2>, scalar_prefetch = 0 : i64, scratch_operands = 0 : i64, tpu.core_type = #tpu.core_type<tc>, window_params = [{pipeline_mode = #tpu.pipeline_mode<synchronous>, transform_indices = @transform_0, window_bounds = array<i64: 16, 32>}, {transform_indices = @transform_1, window_bounds = array<i64: 1, 32, 32>}, {transform_indices = @transform_2, window_bounds = array<i64: 1, 32, 32>}, {transform_indices = @transform_3, window_bounds = array<i64: 1, 32, 32>}, {transform_indices = @transform_4, window_bounds = array<i64: 1, 32, 32>}, {transform_indices = @transform_5, window_bounds = array<i64: 1, 1, 32>}, {transform_indices = @transform_6, window_bounds = array<i64: 1, 1, 32>}, {transform_indices = @transform_7, window_bounds = array<i64: 1, 32, 512>}, {transform_indices = @transform_8, window_bounds = array<i64: 1, 1, 512>}, {transform_indices = @transform_9, window_bounds = array<i64: 1, 512, 32>}, {transform_indices = @transform_10, window_bounds = array<i64: 1, 1, 32>}, {transform_indices = @transform_11, window_bounds = array<i64: 1, 1, 32>}, {transform_indices = @transform_12, window_bounds = array<i64: 1, 1, 32>}, {pipeline_mode = #tpu.pipeline_mode<synchronous>, transform_indices = @transform_13, window_bounds = array<i64: 16, 32>}, {pipeline_mode = #tpu.pipeline_mode<synchronous>, transform_indices = @transform_14, window_bounds = array<i64: 2, 32>}]} {
    %c0_i32 = arith.constant 0 : i32
    %0 = arith.cmpi eq, %arg0, %c0_i32 : i32
    %1 = arith.extui %0 : i1 to i32
    %c0_i32_0 = arith.constant 0 : i32
    %2 = arith.cmpi ne, %1, %c0_i32_0 : i32
    scf.if %2 {
      %c0_62 = arith.constant 0 : index
      %c0_63 = arith.constant 0 : index
      %123 = vector.load %arg1[%c0_62, %c0_63] : memref<16x32xf32, #tpu.memory_space<vmem>>, vector<16x32xf32>
      %c0_64 = arith.constant 0 : index
      %c0_65 = arith.constant 0 : index
      %124 = vector.load %arg14[%c0_64, %c0_65] : memref<16x32xf32, #tpu.memory_space<vmem>>, vector<16x32xf32>
      tpu.vector_store %arg14[%c0_64, %c0_65], %123 {strides = array<i32>} : memref<16x32xf32, #tpu.memory_space<vmem>>, vector<16x32xf32>,
    } else {
    }
    %c0 = arith.constant 0 : index
    %c0_1 = arith.constant 0 : index
    %3 = vector.load %arg14[%c0, %c0_1] : memref<16x32xf32, #tpu.memory_space<vmem>>, vector<16x32xf32>
    %4 = arith.truncf %3 : vector<16x32xf32> to vector<16x32xbf16>
    %c0_2 = arith.constant 0 : index
    %c0_3 = arith.constant 0 : index
    %c0_4 = arith.constant 0 : index
    %5 = vector.load %arg2[%c0_2, %c0_3, %c0_4] : memref<1x32x32xbf16, #tpu.memory_space<vmem>>, vector<1x32x32xbf16>
    %6 = vector.shape_cast %5 : vector<1x32x32xbf16> to vector<32x32xbf16>
    %cst = arith.constant dense<0.000000e+00> : vector<16x32xf32>
    %7 = tpu.matmul %4, %6, %cst {dimension_numbers = #tpu.dot_dimension_numbers<[1], [0], [0], [1], [0, 0, 1, 1], [], []>} : vector<16x32xbf16>, vector<32x32xbf16>, vector<16x32xf32> -> vector<16x32xf32>
    %c0_5 = arith.constant 0 : index
    %c0_6 = arith.constant 0 : index
    %c0_7 = arith.constant 0 : index
    %8 = vector.load %arg3[%c0_5, %c0_6, %c0_7] : memref<1x32x32xbf16, #tpu.memory_space<vmem>>, vector<1x32x32xbf16>
    %9 = vector.shape_cast %8 : vector<1x32x32xbf16> to vector<32x32xbf16>
    %cst_8 = arith.constant dense<0.000000e+00> : vector<16x32xf32>
    %10 = tpu.matmul %4, %9, %cst_8 {dimension_numbers = #tpu.dot_dimension_numbers<[1], [0], [0], [1], [0, 0, 1, 1], [], []>} : vector<16x32xbf16>, vector<32x32xbf16>, vector<16x32xf32> -> vector<16x32xf32>
    %c0_9 = arith.constant 0 : index
    %c0_10 = arith.constant 0 : index
    %c0_11 = arith.constant 0 : index
    %11 = vector.load %arg4[%c0_9, %c0_10, %c0_11] : memref<1x32x32xbf16, #tpu.memory_space<vmem>>, vector<1x32x32xbf16>
    %12 = vector.shape_cast %11 : vector<1x32x32xbf16> to vector<32x32xbf16>
    %cst_12 = arith.constant dense<0.000000e+00> : vector<16x32xf32>
    %13 = tpu.matmul %4, %12, %cst_12 {dimension_numbers = #tpu.dot_dimension_numbers<[1], [0], [0], [1], [0, 0, 1, 1], [], []>} : vector<16x32xbf16>, vector<32x32xbf16>, vector<16x32xf32> -> vector<16x32xf32>
    %14 = vector.shape_cast %7 : vector<16x32xf32> to vector<2x8x8x4xf32>
    %15 = tpu.transpose %14, [0, 2, 1, 3] : vector<2x8x8x4xf32> -> vector<2x8x8x4xf32>
    %16 = vector.shape_cast %15 : vector<2x8x8x4xf32> to vector<16x8x4xf32>
    %17 = arith.truncf %16 : vector<16x8x4xf32> to vector<16x8x4xbf16>
    %18 = vector.shape_cast %10 : vector<16x32xf32> to vector<2x8x8x4xf32>
    %19 = tpu.transpose %18, [0, 2, 1, 3] : vector<2x8x8x4xf32> -> vector<2x8x8x4xf32>
    %20 = vector.shape_cast %19 : vector<2x8x8x4xf32> to vector<16x8x4xf32>
    %21 = arith.truncf %20 : vector<16x8x4xf32> to vector<16x8x4xbf16>
    %22 = vector.shape_cast %13 : vector<16x32xf32> to vector<2x8x8x4xf32>
    %23 = tpu.transpose %22, [0, 2, 1, 3] : vector<2x8x8x4xf32> -> vector<2x8x8x4xf32>
    %24 = vector.shape_cast %23 : vector<2x8x8x4xf32> to vector<16x8x4xf32>
    %25 = arith.truncf %24 : vector<16x8x4xf32> to vector<16x8x4xbf16>
    "tpu.trace_start"() <{level = 10 : i32, message = "gik,gjk->gij"}> : () -> ()
    %cst_13 = arith.constant dense<0.000000e+00> : vector<16x8x8xf32>
    %26 = tpu.matmul %17, %21, %cst_13 {dimension_numbers = #tpu.dot_dimension_numbers<[2], [2], [1], [1], [0, 0, 0, 1, 1, 1], [0], [0]>} : vector<16x8x4xbf16>, vector<16x8x4xbf16>, vector<16x8x8xf32> -> vector<16x8x8xf32>
    "tpu.trace_stop"() : () -> ()
    %cst_14 = arith.constant 5.000000e-01 : f32
    %27 = vector.broadcast %cst_14 : f32 to vector<16x8x8xf32>
    %28 = arith.mulf %26, %27 : vector<16x8x8xf32>
    %cst_15 = arith.constant dense<0xFF800000> : vector<16x8xf32>
    %29 = vector.multi_reduction <maximumf>, %28, %cst_15 [2] : vector<16x8x8xf32> to vector<16x8xf32>
    %30 = vector.shape_cast %29 : vector<16x8xf32> to vector<16x8x1xf32>
    %31 = vector.broadcast %30 : vector<16x8x1xf32> to vector<16x8x8xf32>
    %32 = arith.subf %28, %31 : vector<16x8x8xf32>
    %33 = math.exp %32 : vector<16x8x8xf32>
    %cst_16 = arith.constant dense<0.000000e+00> : vector<16x8xf32>
    %34 = vector.multi_reduction <add>, %33, %cst_16 [2] : vector<16x8x8xf32> to vector<16x8xf32>
    %35 = vector.shape_cast %34 : vector<16x8xf32> to vector<16x8x1xf32>
    %36 = vector.broadcast %35 : vector<16x8x1xf32> to vector<16x8x8xf32>
    %37 = arith.divf %33, %36 : vector<16x8x8xf32>
    %38 = arith.truncf %37 : vector<16x8x8xf32> to vector<16x8x8xbf16>
    "tpu.trace_start"() <{level = 10 : i32, message = "gij,gjk->gik"}> : () -> ()
    %cst_17 = arith.constant dense<0.000000e+00> : vector<16x8x4xf32>
    %39 = tpu.matmul %38, %25, %cst_17 {dimension_numbers = #tpu.dot_dimension_numbers<[2], [1], [1], [2], [0, 0, 0, 1, 1, 2], [0], [0]>} : vector<16x8x8xbf16>, vector<16x8x4xbf16>, vector<16x8x4xf32> -> vector<16x8x4xf32>
    "tpu.trace_stop"() : () -> ()
    %40 = vector.shape_cast %39 : vector<16x8x4xf32> to vector<2x8x8x4xf32>
    %41 = tpu.transpose %40, [0, 2, 1, 3] : vector<2x8x8x4xf32> -> vector<2x8x8x4xf32>
    %42 = vector.shape_cast %41 : vector<2x8x8x4xf32> to vector<16x32xf32>
    %43 = arith.truncf %42 : vector<16x32xf32> to vector<16x32xbf16>
    %c0_18 = arith.constant 0 : index
    %c0_19 = arith.constant 0 : index
    %c0_20 = arith.constant 0 : index
    %44 = vector.load %arg5[%c0_18, %c0_19, %c0_20] : memref<1x32x32xbf16, #tpu.memory_space<vmem>>, vector<1x32x32xbf16>
    %45 = vector.shape_cast %44 : vector<1x32x32xbf16> to vector<32x32xbf16>
    %cst_21 = arith.constant dense<0.000000e+00> : vector<16x32xf32>
    %46 = tpu.matmul %43, %45, %cst_21 {dimension_numbers = #tpu.dot_dimension_numbers<[1], [0], [0], [1], [0, 0, 1, 1], [], []>} : vector<16x32xbf16>, vector<32x32xbf16>, vector<16x32xf32> -> vector<16x32xf32>
    %47 = arith.addf %3, %46 : vector<16x32xf32>
    %cst_22 = arith.constant dense<0.000000e+00> : vector<32xf32>
    %48 = vector.multi_reduction <add>, %47, %cst_22 [0] : vector<16x32xf32> to vector<32xf32>
    %49 = vector.shape_cast %48 : vector<32xf32> to vector<1x32xf32>
    %cst_23 = arith.constant 1.600000e+01 : f32
    %50 = vector.broadcast %cst_23 : f32 to vector<1x32xf32>
    %51 = arith.divf %49, %50 : vector<1x32xf32>
    %52 = arith.mulf %47, %47 : vector<16x32xf32>
    %cst_24 = arith.constant dense<0.000000e+00> : vector<32xf32>
    %53 = vector.multi_reduction <add>, %52, %cst_24 [0] : vector<16x32xf32> to vector<32xf32>
    %54 = vector.shape_cast %53 : vector<32xf32> to vector<1x32xf32>
    %cst_25 = arith.constant 1.600000e+01 : f32
    %55 = vector.broadcast %cst_25 : f32 to vector<1x32xf32>
    %56 = arith.divf %54, %55 : vector<1x32xf32>
    %57 = arith.mulf %51, %51 : vector<1x32xf32>
    %58 = arith.subf %56, %57 : vector<1x32xf32>
    %59 = vector.broadcast %51 : vector<1x32xf32> to vector<16x32xf32>
    %60 = arith.subf %47, %59 : vector<16x32xf32>
    %cst_26 = arith.constant 9.99999974E-6 : f32
    %61 = vector.broadcast %cst_26 : f32 to vector<1x32xf32>
    %62 = arith.addf %58, %61 : vector<1x32xf32>
    %63 = math.rsqrt %62 : vector<1x32xf32>
    %64 = vector.broadcast %63 : vector<1x32xf32> to vector<16x32xf32>
    %65 = arith.mulf %60, %64 : vector<16x32xf32>
    %c0_27 = arith.constant 0 : index
    %c0_28 = arith.constant 0 : index
    %c0_29 = arith.constant 0 : index
    %66 = vector.load %arg6[%c0_27, %c0_28, %c0_29] : memref<1x1x32xf32, #tpu.memory_space<vmem>>, vector<1x1x32xf32>
    %67 = vector.shape_cast %66 : vector<1x1x32xf32> to vector<1x32xf32>
    %68 = vector.broadcast %67 : vector<1x32xf32> to vector<16x32xf32>
    %69 = arith.mulf %65, %68 : vector<16x32xf32>
    %c0_30 = arith.constant 0 : index
    %c0_31 = arith.constant 0 : index
    %c0_32 = arith.constant 0 : index
    %70 = vector.load %arg7[%c0_30, %c0_31, %c0_32] : memref<1x1x32xf32, #tpu.memory_space<vmem>>, vector<1x1x32xf32>
    %71 = vector.shape_cast %70 : vector<1x1x32xf32> to vector<1x32xf32>
    %72 = vector.broadcast %71 : vector<1x32xf32> to vector<16x32xf32>
    %73 = arith.addf %69, %72 : vector<16x32xf32>
    %74 = arith.truncf %73 : vector<16x32xf32> to vector<16x32xbf16>
    %c0_33 = arith.constant 0 : index
    %c0_34 = arith.constant 0 : index
    %c0_35 = arith.constant 0 : index
    %75 = vector.load %arg8[%c0_33, %c0_34, %c0_35] : memref<1x32x512xbf16, #tpu.memory_space<vmem>>, vector<1x32x512xbf16>
    %76 = vector.shape_cast %75 : vector<1x32x512xbf16> to vector<32x512xbf16>
    %cst_36 = arith.constant dense<0.000000e+00> : vector<16x512xf32>
    %77 = tpu.matmul %74, %76, %cst_36 {dimension_numbers = #tpu.dot_dimension_numbers<[1], [0], [0], [1], [0, 0, 1, 1], [], []>} : vector<16x32xbf16>, vector<32x512xbf16>, vector<16x512xf32> -> vector<16x512xf32>
    %c0_37 = arith.constant 0 : index
    %c0_38 = arith.constant 0 : index
    %c0_39 = arith.constant 0 : index
    %78 = vector.load %arg9[%c0_37, %c0_38, %c0_39] : memref<1x1x512xf32, #tpu.memory_space<vmem>>, vector<1x1x512xf32>
    %79 = vector.shape_cast %78 : vector<1x1x512xf32> to vector<1x512xf32>
    %80 = vector.broadcast %79 : vector<1x512xf32> to vector<16x512xf32>
    %81 = arith.addf %77, %80 : vector<16x512xf32>
    %cst_40 = arith.constant 0.000000e+00 : f32
    %82 = vector.broadcast %cst_40 : f32 to vector<16x512xf32>
    %83 = arith.maximumf %81, %82 : vector<16x512xf32>
    %84 = arith.truncf %83 : vector<16x512xf32> to vector<16x512xbf16>
    %c0_41 = arith.constant 0 : index
    %c0_42 = arith.constant 0 : index
    %c0_43 = arith.constant 0 : index
    %85 = vector.load %arg10[%c0_41, %c0_42, %c0_43] : memref<1x512x32xbf16, #tpu.memory_space<vmem>>, vector<1x512x32xbf16>
    %86 = vector.shape_cast %85 : vector<1x512x32xbf16> to vector<512x32xbf16>
    %cst_44 = arith.constant dense<0.000000e+00> : vector<16x32xf32>
    %87 = tpu.matmul %84, %86, %cst_44 {dimension_numbers = #tpu.dot_dimension_numbers<[1], [0], [0], [1], [0, 0, 1, 1], [], []>} : vector<16x512xbf16>, vector<512x32xbf16>, vector<16x32xf32> -> vector<16x32xf32>
    %c0_45 = arith.constant 0 : index
    %c0_46 = arith.constant 0 : index
    %c0_47 = arith.constant 0 : index
    %88 = vector.load %arg11[%c0_45, %c0_46, %c0_47] : memref<1x1x32xf32, #tpu.memory_space<vmem>>, vector<1x1x32xf32>
    %89 = vector.shape_cast %88 : vector<1x1x32xf32> to vector<1x32xf32>
    %90 = vector.broadcast %89 : vector<1x32xf32> to vector<16x32xf32>
    %91 = arith.addf %87, %90 : vector<16x32xf32>
    %92 = arith.addf %73, %91 : vector<16x32xf32>
    %cst_48 = arith.constant dense<0.000000e+00> : vector<32xf32>
    %93 = vector.multi_reduction <add>, %92, %cst_48 [0] : vector<16x32xf32> to vector<32xf32>
    %94 = vector.shape_cast %93 : vector<32xf32> to vector<1x32xf32>
    %cst_49 = arith.constant 1.600000e+01 : f32
    %95 = vector.broadcast %cst_49 : f32 to vector<1x32xf32>
    %96 = arith.divf %94, %95 : vector<1x32xf32>
    %97 = arith.mulf %92, %92 : vector<16x32xf32>
    %cst_50 = arith.constant dense<0.000000e+00> : vector<32xf32>
    %98 = vector.multi_reduction <add>, %97, %cst_50 [0] : vector<16x32xf32> to vector<32xf32>
    %99 = vector.shape_cast %98 : vector<32xf32> to vector<1x32xf32>
    %cst_51 = arith.constant 1.600000e+01 : f32
    %100 = vector.broadcast %cst_51 : f32 to vector<1x32xf32>
    %101 = arith.divf %99, %100 : vector<1x32xf32>
    %102 = arith.mulf %96, %96 : vector<1x32xf32>
    %103 = arith.subf %101, %102 : vector<1x32xf32>
    %104 = vector.broadcast %96 : vector<1x32xf32> to vector<16x32xf32>
    %105 = arith.subf %92, %104 : vector<16x32xf32>
    %cst_52 = arith.constant 9.99999974E-6 : f32
    %106 = vector.broadcast %cst_52 : f32 to vector<1x32xf32>
    %107 = arith.addf %103, %106 : vector<1x32xf32>
    %108 = math.rsqrt %107 : vector<1x32xf32>
    %109 = vector.broadcast %108 : vector<1x32xf32> to vector<16x32xf32>
    %110 = arith.mulf %105, %109 : vector<16x32xf32>
    %c0_53 = arith.constant 0 : index
    %c0_54 = arith.constant 0 : index
    %c0_55 = arith.constant 0 : index
    %111 = vector.load %arg12[%c0_53, %c0_54, %c0_55] : memref<1x1x32xf32, #tpu.memory_space<vmem>>, vector<1x1x32xf32>
    %112 = vector.shape_cast %111 : vector<1x1x32xf32> to vector<1x32xf32>
    %113 = vector.broadcast %112 : vector<1x32xf32> to vector<16x32xf32>
    %114 = arith.mulf %110, %113 : vector<16x32xf32>
    %c0_56 = arith.constant 0 : index
    %c0_57 = arith.constant 0 : index
    %c0_58 = arith.constant 0 : index
    %115 = vector.load %arg13[%c0_56, %c0_57, %c0_58] : memref<1x1x32xf32, #tpu.memory_space<vmem>>, vector<1x1x32xf32>
    %116 = vector.shape_cast %115 : vector<1x1x32xf32> to vector<1x32xf32>
    %117 = vector.broadcast %116 : vector<1x32xf32> to vector<16x32xf32>
    %118 = arith.addf %114, %117 : vector<16x32xf32>
    %c0_59 = arith.constant 0 : index
    %c0_60 = arith.constant 0 : index
    %119 = vector.load %arg14[%c0_59, %c0_60] : memref<16x32xf32, #tpu.memory_space<vmem>>, vector<16x32xf32>
    tpu.vector_store %arg14[%c0_59, %c0_60], %118 {strides = array<i32>} : memref<16x32xf32, #tpu.memory_space<vmem>>, vector<16x32xf32>,
    %c1_i32 = arith.constant 1 : i32
    %120 = arith.cmpi eq, %arg0, %c1_i32 : i32
    %121 = arith.extui %120 : i1 to i32
    %c0_i32_61 = arith.constant 0 : i32
    %122 = arith.cmpi ne, %121, %c0_i32_61 : i32
    scf.if %122 {
      %123 = vector.shape_cast %118 : vector<16x32xf32> to vector<2x8x32xf32>
      %cst_62 = arith.constant dense<0.000000e+00> : vector<2x32xf32>
      %124 = vector.multi_reduction <add>, %123, %cst_62 [1] : vector<2x8x32xf32> to vector<2x32xf32>
      %cst_63 = arith.constant 8.000000e+00 : f32
      %125 = vector.broadcast %cst_63 : f32 to vector<2x32xf32>
      %126 = arith.divf %124, %125 : vector<2x32xf32>
      %c0_64 = arith.constant 0 : index
      %c0_65 = arith.constant 0 : index
      %127 = vector.load %arg15[%c0_64, %c0_65] : memref<2x32xf32, #tpu.memory_space<vmem>>, vector<2x32xf32>
      tpu.vector_store %arg15[%c0_64, %c0_65], %126 {strides = array<i32>} : memref<2x32xf32, #tpu.memory_space<vmem>>, vector<2x32xf32>,
    } else {
    }
    return
  }
  func.func @transform_0(%arg0: i32) -> (i32, i32) {
    %c0_i32 = arith.constant 0 : i32
    %c0_i32_0 = arith.constant 0 : i32
    %c0_i32_1 = arith.constant 0 : i32
    return %c0_i32, %c0_i32_0 : i32, i32
  }
  func.func @transform_1(%arg0: i32) -> (i32, i32, i32) {
    %c0_i32 = arith.constant 0 : i32
    %c0_i32_0 = arith.constant 0 : i32
    %c0_i32_1 = arith.constant 0 : i32
    return %arg0, %c0_i32, %c0_i32_0 : i32, i32, i32
  }
  func.func @transform_2(%arg0: i32) -> (i32, i32, i32) {
    %c0_i32 = arith.constant 0 : i32
    %c0_i32_0 = arith.constant 0 : i32
    %c0_i32_1 = arith.constant 0 : i32
    return %arg0, %c0_i32, %c0_i32_0 : i32, i32, i32
  }
  func.func @transform_3(%arg0: i32) -> (i32, i32, i32) {
    %c0_i32 = arith.constant 0 : i32
    %c0_i32_0 = arith.constant 0 : i32
    %c0_i32_1 = arith.constant 0 : i32
    return %arg0, %c0_i32, %c0_i32_0 : i32, i32, i32
  }
  func.func @transform_4(%arg0: i32) -> (i32, i32, i32) {
    %c0_i32 = arith.constant 0 : i32
    %c0_i32_0 = arith.constant 0 : i32
    %c0_i32_1 = arith.constant 0 : i32
    return %arg0, %c0_i32, %c0_i32_0 : i32, i32, i32
  }
  func.func @transform_5(%arg0: i32) -> (i32, i32, i32) {
    %c0_i32 = arith.constant 0 : i32
    %c0_i32_0 = arith.constant 0 : i32
    %c0_i32_1 = arith.constant 0 : i32
    return %arg0, %c0_i32, %c0_i32_0 : i32, i32, i32
  }
  func.func @transform_6(%arg0: i32) -> (i32, i32, i32) {
    %c0_i32 = arith.constant 0 : i32
    %c0_i32_0 = arith.constant 0 : i32
    %c0_i32_1 = arith.constant 0 : i32
    return %arg0, %c0_i32, %c0_i32_0 : i32, i32, i32
  }
  func.func @transform_7(%arg0: i32) -> (i32, i32, i32) {
    %c0_i32 = arith.constant 0 : i32
    %c0_i32_0 = arith.constant 0 : i32
    %c0_i32_1 = arith.constant 0 : i32
    return %arg0, %c0_i32, %c0_i32_0 : i32, i32, i32
  }
  func.func @transform_8(%arg0: i32) -> (i32, i32, i32) {
    %c0_i32 = arith.constant 0 : i32
    %c0_i32_0 = arith.constant 0 : i32
    %c0_i32_1 = arith.constant 0 : i32
    return %arg0, %c0_i32, %c0_i32_0 : i32, i32, i32
  }
  func.func @transform_9(%arg0: i32) -> (i32, i32, i32) {
    %c0_i32 = arith.constant 0 : i32
    %c0_i32_0 = arith.constant 0 : i32
    %c0_i32_1 = arith.constant 0 : i32
    return %arg0, %c0_i32, %c0_i32_0 : i32, i32, i32
  }
  func.func @transform_10(%arg0: i32) -> (i32, i32, i32) {
    %c0_i32 = arith.constant 0 : i32
    %c0_i32_0 = arith.constant 0 : i32
    %c0_i32_1 = arith.constant 0 : i32
    return %arg0, %c0_i32, %c0_i32_0 : i32, i32, i32
  }
  func.func @transform_11(%arg0: i32) -> (i32, i32, i32) {
    %c0_i32 = arith.constant 0 : i32
    %c0_i32_0 = arith.constant 0 : i32
    %c0_i32_1 = arith.constant 0 : i32
    return %arg0, %c0_i32, %c0_i32_0 : i32, i32, i32
  }
  func.func @transform_12(%arg0: i32) -> (i32, i32, i32) {
    %c0_i32 = arith.constant 0 : i32
    %c0_i32_0 = arith.constant 0 : i32
    %c0_i32_1 = arith.constant 0 : i32
    return %arg0, %c0_i32, %c0_i32_0 : i32, i32, i32
  }
  func.func @transform_13(%arg0: i32) -> (i32, i32) {
    %c0_i32 = arith.constant 0 : i32
    %c0_i32_0 = arith.constant 0 : i32
    %c0_i32_1 = arith.constant 0 : i32
    return %c0_i32, %c0_i32_0 : i32, i32
  }
  func.func @transform_14(%arg0: i32) -> (i32, i32) {
    %c0_i32 = arith.constant 0 : i32
    %c0_i32_0 = arith.constant 0 : i32
    %c0_i32_1 = arith.constant 0 : i32
    return %c0_i32, %c0_i32_0 : i32, i32
  }
}

</mosaic_0001>

<llo_original>
// kernel: graph_attention_encoder.1
$region0: #{graph_attention_encoder.1}
  #allocation0 [shape = 'u32[]', space=smem, size = 0x4, offset = 0x4, fixed_abs, tag = 'smem constant byte address 0x4 - core index']
  #allocation1 [shape = 'u32[144,128]{1,0:T(1,128)}', space=vmem, size = 0x12000, scoped, tag = 'internal scratch']
  %s0 = inlined_call_operand.vmem [shape: f32[16,32], index: 0, kind: input, shape index: {}]
  %s1 = inlined_call_operand.vmem [shape: bf16[2,32,32], index: 1, kind: input, shape index: {}]
  %s2 = inlined_call_operand.vmem [shape: bf16[2,32,32], index: 2, kind: input, shape index: {}]
  %s3 = inlined_call_operand.vmem [shape: bf16[2,32,32], index: 3, kind: input, shape index: {}]
  %s4 = inlined_call_operand.vmem [shape: bf16[2,32,32], index: 4, kind: input, shape index: {}]
  %s5 = inlined_call_operand.vmem [shape: f32[2,1,32], index: 5, kind: input, shape index: {}]
  %s6 = inlined_call_operand.vmem [shape: f32[2,1,32], index: 6, kind: input, shape index: {}]
  %s7 = inlined_call_operand.vmem [shape: bf16[2,32,512], index: 7, kind: input, shape index: {}]
  %s8 = inlined_call_operand.vmem [shape: f32[2,1,512], index: 8, kind: input, shape index: {}]
  %s9 = inlined_call_operand.vmem [shape: bf16[2,512,32], index: 9, kind: input, shape index: {}]
  %s10 = inlined_call_operand.vmem [shape: f32[2,1,32], index: 10, kind: input, shape index: {}]
  %s11 = inlined_call_operand.vmem [shape: f32[2,1,32], index: 11, kind: input, shape index: {}]
  %s12 = inlined_call_operand.vmem [shape: f32[2,1,32], index: 12, kind: input, shape index: {}]
  %s13 = inlined_call_operand.hbm [shape: f32[16,32], index: 13, kind: output, shape index: {0}]
  %s14 = inlined_call_operand.hbm [shape: f32[2,32], index: 14, kind: output, shape index: {1}]
  %15 = xla_tuple %s13, %s14
  %s16 = sld [smem:[#allocation0]]
  $region101: #{graph_attention_encoder.1} parent=0
    _
  %s18 = ssub.s32 1, %s16
  %s19 = scalar_select 0, %s18, %s16
  $region1: #{graph_attention_encoder.1} parent=0
    #allocation2 [shape = 'u8[8192]{0}', space=vmem, size = 0x2000, scoped, tag = 'output window, operand 0, single buffered']
    #allocation3 [shape = 's32[2]{0}', space=sflag, size = 0x8, scoped, tag = 'scoped memory for graph_attention_encoder.1']
    #allocation4 [shape = 'u8[1024]{0}', space=vmem, size = 0x400, scoped, tag = 'output window, operand 1, single buffered']
    #allocation5 [shape = 's32[1]{0}', space=sflag, size = 0x4, scoped, tag = 'scoped memory for graph_attention_encoder.1']
    %20 = vsyncpa [#allocation3], 0
    %21 = vsyncpa [#allocation5], 0
    loop: start=0, step=1, limit=4
    $region2: #{graph_attention_encoder.1} parent=1 // loop_pre_header
      _
    $region3: #{graph_attention_encoder.1} parent=1 // loop_header
      %s23 = sphi 0, %s27
      %p24 = scmp.ge.s32.totalorder %s23, 4
      %s31 = sphi 0, %s31
      %s33 = sphi 0, %s31
      %s34 = sphi 0, %s33
      %s48 = sphi 0, %s34
      %s54 = sphi 0, %s56
      %s57 = sphi 0, %s54
      %s58 = sphi 0, %s57
      %s74 = sphi 0, %s58
      %s80 = sphi 0, %s82
      %s83 = sphi 0, %s80
      %s84 = sphi 0, %s83
      %s100 = sphi 0, %s84
      %s106 = sphi 0, %s108
      %s109 = sphi 0, %s106
      %s110 = sphi 0, %s109
      %s126 = sphi 0, %s110
      %s132 = sphi 0, %s134
      %s135 = sphi 0, %s132
      %s136 = sphi 0, %s135
      %s152 = sphi 0, %s136
      %s158 = sphi 0, %s160
      %s161 = sphi 0, %s158
      %s162 = sphi 0, %s161
      %s178 = sphi 0, %s162
      %s184 = sphi 0, %s186
      %s187 = sphi 0, %s184
      %s188 = sphi 0, %s187
      %s204 = sphi 0, %s188
      %s210 = sphi 0, %s212
      %s213 = sphi 0, %s210
      %s214 = sphi 0, %s213
      %s230 = sphi 0, %s214
      %s236 = sphi 0, %s238
      %s239 = sphi 0, %s236
      %s240 = sphi 0, %s239
      %s256 = sphi 0, %s240
      %s262 = sphi 0, %s264
      %s265 = sphi 0, %s262
      %s266 = sphi 0, %s265
      %s282 = sphi 0, %s266
      %s288 = sphi 0, %s290
      %s291 = sphi 0, %s288
      %s292 = sphi 0, %s291
      %s308 = sphi 0, %s292
      %s314 = sphi 0, %s316
      %s317 = sphi 0, %s314
      %s318 = sphi 0, %s317
      %s334 = sphi 0, %s318
      %s340 = sphi 0, %s342
      %s343 = sphi 0, %s340
      %s344 = sphi 0, %s343
      %s360 = sphi 0, %s344
      %s364 = sphi 0, %s364
      %s366 = sphi 0, %s364
      %s367 = sphi 0, %s366
      %s381 = sphi 0, %s367
      %s385 = sphi 0, %s385
      %s387 = sphi 0, %s385
      %s388 = sphi 0, %s387
      %s402 = sphi 0, %s388
    $region4: #{graph_attention_encoder.1} parent=1 // loop_header_branch
      %26 = sbr.rel (%p24) target = $region8
    $region5: #{graph_attention_encoder.1} parent=1 // loop_body
      %s28 = ssub.s32 %s23, 1
      %s29 = ssub.s32 %s23, 2
      %s30 = sadd.s32 %s23, 1
      %s32 = sadd.s32 %s31, 1
      %p35 = scmp.eq.s32.totalorder %s23, 1
      %p36 = scmp.ne.s32.totalorder %s31, %s33
      %p37 = scmp.eq.s32.totalorder %s23, 0
      %p38 = por %p36, %p37
      %p39 = scmp.ne.s32.totalorder %s31, %s33
      %p40 = scmp.eq.s32.totalorder %s28, 1
      %p41 = por %p39, %p40
      %p42 = scmp.ne.s32.totalorder %s33, %s34
      %p43 = scmp.eq.s32.totalorder %s28, 0
      %p44 = por %p42, %p43
      %p45 = scmp.ne.s32.totalorder %s33, %s34
      %p46 = scmp.eq.s32.totalorder %s29, 1
      %p47 = por %p45, %p46
      %p49 = scmp.ne.s32.totalorder %s34, %s48
      %p50 = scmp.eq.s32.totalorder %s29, 0
      %p51 = por %p49, %p50
      %s52 = ssub.s32 %s23, %s30
      %p53 = scmp.eq.s32.totalorder %s52, 0
      %s55 = sadd.s32 %s54, 1
      %s56 = scalar_select %p53, %s54, %s55
      %p59 = pneg %p53
      %p60 = scmp.eq.s32.totalorder %s23, 1
      %p61 = por %p59, %p60
      %p62 = scmp.ne.s32.totalorder %s54, %s57
      %p63 = scmp.eq.s32.totalorder %s23, 0
      %p64 = por %p62, %p63
      %p65 = scmp.ne.s32.totalorder %s54, %s57
      %p66 = scmp.eq.s32.totalorder %s28, 1
      %p67 = por %p65, %p66
      %p68 = scmp.ne.s32.totalorder %s57, %s58
      %p69 = scmp.eq.s32.totalorder %s28, 0
      %p70 = por %p68, %p69
      %p71 = scmp.ne.s32.totalorder %s57, %s58
      %p72 = scmp.eq.s32.totalorder %s29, 1
      %p73 = por %p71, %p72
      %p75 = scmp.ne.s32.totalorder %s58, %s74
      %p76 = scmp.eq.s32.totalorder %s29, 0
      %p77 = por %p75, %p76
      %s78 = ssub.s32 %s23, %s30
      %p79 = scmp.eq.s32.totalorder %s78, 0
      %s81 = sadd.s32 %s80, 1
      %s82 = scalar_select %p79, %s80, %s81
      %p85 = pneg %p79
      %p86 = scmp.eq.s32.totalorder %s23, 1
      %p87 = por %p85, %p86
      %p88 = scmp.ne.s32.totalorder %s80, %s83
      %p89 = scmp.eq.s32.totalorder %s23, 0
      %p90 = por %p88, %p89
      %p91 = scmp.ne.s32.totalorder %s80, %s83
      %p92 = scmp.eq.s32.totalorder %s28, 1
      %p93 = por %p91, %p92
      %p94 = scmp.ne.s32.totalorder %s83, %s84
      %p95 = scmp.eq.s32.totalorder %s28, 0
      %p96 = por %p94, %p95
      %p97 = scmp.ne.s32.totalorder %s83, %s84
      %p98 = scmp.eq.s32.totalorder %s29, 1
      %p99 = por %p97, %p98
      %p101 = scmp.ne.s32.totalorder %s84, %s100
      %p102 = scmp.eq.s32.totalorder %s29, 0
      %p103 = por %p101, %p102
      %s104 = ssub.s32 %s23, %s30
      %p105 = scmp.eq.s32.totalorder %s104, 0
      %s107 = sadd.s32 %s106, 1
      %s108 = scalar_select %p105, %s106, %s107
      %p111 = pneg %p105
      %p112 = scmp.eq.s32.totalorder %s23, 1
      %p113 = por %p111, %p112
      %p114 = scmp.ne.s32.totalorder %s106, %s109
      %p115 = scmp.eq.s32.totalorder %s23, 0
      %p116 = por %p114, %p115
      %p117 = scmp.ne.s32.totalorder %s106, %s109
      %p118 = scmp.eq.s32.totalorder %s28, 1
      %p119 = por %p117, %p118
      %p120 = scmp.ne.s32.totalorder %s109, %s110
      %p121 = scmp.eq.s32.totalorder %s28, 0
      %p122 = por %p120, %p121
      %p123 = scmp.ne.s32.totalorder %s109, %s110
      %p124 = scmp.eq.s32.totalorder %s29, 1
      %p125 = por %p123, %p124
      %p127 = scmp.ne.s32.totalorder %s110, %s126
      %p128 = scmp.eq.s32.totalorder %s29, 0
      %p129 = por %p127, %p128
      %s130 = ssub.s32 %s23, %s30
      %p131 = scmp.eq.s32.totalorder %s130, 0
      %s133 = sadd.s32 %s132, 1
      %s134 = scalar_select %p131, %s132, %s133
      %p137 = pneg %p131
      %p138 = scmp.eq.s32.totalorder %s23, 1
      %p139 = por %p137, %p138
      %p140 = scmp.ne.s32.totalorder %s132, %s135
      %p141 = scmp.eq.s32.totalorder %s23, 0
      %p142 = por %p140, %p141
      %p143 = scmp.ne.s32.totalorder %s132, %s135
      %p144 = scmp.eq.s32.totalorder %s28, 1
      %p145 = por %p143, %p144
      %p146 = scmp.ne.s32.totalorder %s135, %s136
      %p147 = scmp.eq.s32.totalorder %s28, 0
      %p148 = por %p146, %p147
      %p149 = scmp.ne.s32.totalorder %s135, %s136
      %p150 = scmp.eq.s32.totalorder %s29, 1
      %p151 = por %p149, %p150
      %p153 = scmp.ne.s32.totalorder %s136, %s152
      %p154 = scmp.eq.s32.totalorder %s29, 0
      %p155 = por %p153, %p154
      %s156 = ssub.s32 %s23, %s30
      %p157 = scmp.eq.s32.totalorder %s156, 0
      %s159 = sadd.s32 %s158, 1
      %s160 = scalar_select %p157, %s158, %s159
      %p163 = pneg %p157
      %p164 = scmp.eq.s32.totalorder %s23, 1
      %p165 = por %p163, %p164
      %p166 = scmp.ne.s32.totalorder %s158, %s161
      %p167 = scmp.eq.s32.totalorder %s23, 0
      %p168 = por %p166, %p167
      %p169 = scmp.ne.s32.totalorder %s158, %s161
      %p170 = scmp.eq.s32.totalorder %s28, 1
      %p171 = por %p169, %p170
      %p172 = scmp.ne.s32.totalorder %s161, %s162
      %p173 = scmp.eq.s32.totalorder %s28, 0
      %p174 = por %p172, %p173
      %p175 = scmp.ne.s32.totalorder %s161, %s162
      %p176 = scmp.eq.s32.totalorder %s29, 1
      %p177 = por %p175, %p176
      %p179 = scmp.ne.s32.totalorder %s162, %s178
      %p180 = scmp.eq.s32.totalorder %s29, 0
      %p181 = por %p179, %p180
      %s182 = ssub.s32 %s23, %s30
      %p183 = scmp.eq.s32.totalorder %s182, 0
      %s185 = sadd.s32 %s184, 1
      %s186 = scalar_select %p183, %s184, %s185
      %p189 = pneg %p183
      %p190 = scmp.eq.s32.totalorder %s23, 1
      %p191 = por %p189, %p190
      %p192 = scmp.ne.s32.totalorder %s184, %s187
      %p193 = scmp.eq.s32.totalorder %s23, 0
      %p194 = por %p192, %p193
      %p195 = scmp.ne.s32.totalorder %s184, %s187
      %p196 = scmp.eq.s32.totalorder %s28, 1
      %p197 = por %p195, %p196
      %p198 = scmp.ne.s32.totalorder %s187, %s188
      %p199 = scmp.eq.s32.totalorder %s28, 0
      %p200 = por %p198, %p199
      %p201 = scmp.ne.s32.totalorder %s187, %s188
      %p202 = scmp.eq.s32.totalorder %s29, 1
      %p203 = por %p201, %p202
      %p205 = scmp.ne.s32.totalorder %s188, %s204
      %p206 = scmp.eq.s32.totalorder %s29, 0
      %p207 = por %p205, %p206
      %s208 = ssub.s32 %s23, %s30
      %p209 = scmp.eq.s32.totalorder %s208, 0
      %s211 = sadd.s32 %s210, 1
      %s212 = scalar_select %p209, %s210, %s211
      %p215 = pneg %p209
      %p216 = scmp.eq.s32.totalorder %s23, 1
      %p217 = por %p215, %p216
      %p218 = scmp.ne.s32.totalorder %s210, %s213
      %p219 = scmp.eq.s32.totalorder %s23, 0
      %p220 = por %p218, %p219
      %p221 = scmp.ne.s32.totalorder %s210, %s213
      %p222 = scmp.eq.s32.totalorder %s28, 1
      %p223 = por %p221, %p222
      %p224 = scmp.ne.s32.totalorder %s213, %s214
      %p225 = scmp.eq.s32.totalorder %s28, 0
      %p226 = por %p224, %p225
      %p227 = scmp.ne.s32.totalorder %s213, %s214
      %p228 = scmp.eq.s32.totalorder %s29, 1
      %p229 = por %p227, %p228
      %p231 = scmp.ne.s32.totalorder %s214, %s230
      %p232 = scmp.eq.s32.totalorder %s29, 0
      %p233 = por %p231, %p232
      %s234 = ssub.s32 %s23, %s30
      %p235 = scmp.eq.s32.totalorder %s234, 0
      %s237 = sadd.s32 %s236, 1
      %s238 = scalar_select %p235, %s236, %s237
      %p241 = pneg %p235
      %p242 = scmp.eq.s32.totalorder %s23, 1
      %p243 = por %p241, %p242
      %p244 = scmp.ne.s32.totalorder %s236, %s239
      %p245 = scmp.eq.s32.totalorder %s23, 0
      %p246 = por %p244, %p245
      %p247 = scmp.ne.s32.totalorder %s236, %s239
      %p248 = scmp.eq.s32.totalorder %s28, 1
      %p249 = por %p247, %p248
      %p250 = scmp.ne.s32.totalorder %s239, %s240
      %p251 = scmp.eq.s32.totalorder %s28, 0
      %p252 = por %p250, %p251
      %p253 = scmp.ne.s32.totalorder %s239, %s240
      %p254 = scmp.eq.s32.totalorder %s29, 1
      %p255 = por %p253, %p254
      %p257 = scmp.ne.s32.totalorder %s240, %s256
      %p258 = scmp.eq.s32.totalorder %s29, 0
      %p259 = por %p257, %p258
      %s260 = ssub.s32 %s23, %s30
      %p261 = scmp.eq.s32.totalorder %s260, 0
      %s263 = sadd.s32 %s262, 1
      %s264 = scalar_select %p261, %s262, %s263
      %p267 = pneg %p261
      %p268 = scmp.eq.s32.totalorder %s23, 1
      %p269 = por %p267, %p268
      %p270 = scmp.ne.s32.totalorder %s262, %s265
      %p271 = scmp.eq.s32.totalorder %s23, 0
      %p272 = por %p270, %p271
      %p273 = scmp.ne.s32.totalorder %s262, %s265
      %p274 = scmp.eq.s32.totalorder %s28, 1
      %p275 = por %p273, %p274
      %p276 = scmp.ne.s32.totalorder %s265, %s266
      %p277 = scmp.eq.s32.totalorder %s28, 0
      %p278 = por %p276, %p277
      %p279 = scmp.ne.s32.totalorder %s265, %s266
      %p280 = scmp.eq.s32.totalorder %s29, 1
      %p281 = por %p279, %p280
      %p283 = scmp.ne.s32.totalorder %s266, %s282
      %p284 = scmp.eq.s32.totalorder %s29, 0
      %p285 = por %p283, %p284
      %s286 = ssub.s32 %s23, %s30
      %p287 = scmp.eq.s32.totalorder %s286, 0
      %s289 = sadd.s32 %s288, 1
      %s290 = scalar_select %p287, %s288, %s289
      %p293 = pneg %p287
      %p294 = scmp.eq.s32.totalorder %s23, 1
      %p295 = por %p293, %p294
      %p296 = scmp.ne.s32.totalorder %s288, %s291
      %p297 = scmp.eq.s32.totalorder %s23, 0
      %p298 = por %p296, %p297
      %p299 = scmp.ne.s32.totalorder %s288, %s291
      %p300 = scmp.eq.s32.totalorder %s28, 1
      %p301 = por %p299, %p300
      %p302 = scmp.ne.s32.totalorder %s291, %s292
      %p303 = scmp.eq.s32.totalorder %s28, 0
      %p304 = por %p302, %p303
      %p305 = scmp.ne.s32.totalorder %s291, %s292
      %p306 = scmp.eq.s32.totalorder %s29, 1
      %p307 = por %p305, %p306
      %p309 = scmp.ne.s32.totalorder %s292, %s308
      %p310 = scmp.eq.s32.totalorder %s29, 0
      %p311 = por %p309, %p310
      %s312 = ssub.s32 %s23, %s30
      %p313 = scmp.eq.s32.totalorder %s312, 0
      %s315 = sadd.s32 %s314, 1
      %s316 = scalar_select %p313, %s314, %s315
      %p319 = pneg %p313
      %p320 = scmp.eq.s32.totalorder %s23, 1
      %p321 = por %p319, %p320
      %p322 = scmp.ne.s32.totalorder %s314, %s317
      %p323 = scmp.eq.s32.totalorder %s23, 0
      %p324 = por %p322, %p323
      %p325 = scmp.ne.s32.totalorder %s314, %s317
      %p326 = scmp.eq.s32.totalorder %s28, 1
      %p327 = por %p325, %p326
      %p328 = scmp.ne.s32.totalorder %s317, %s318
      %p329 = scmp.eq.s32.totalorder %s28, 0
      %p330 = por %p328, %p329
      %p331 = scmp.ne.s32.totalorder %s317, %s318
      %p332 = scmp.eq.s32.totalorder %s29, 1
      %p333 = por %p331, %p332
      %p335 = scmp.ne.s32.totalorder %s318, %s334
      %p336 = scmp.eq.s32.totalorder %s29, 0
      %p337 = por %p335, %p336
      %s338 = ssub.s32 %s23, %s30
      %p339 = scmp.eq.s32.totalorder %s338, 0
      %s341 = sadd.s32 %s340, 1
      %s342 = scalar_select %p339, %s340, %s341
      %p345 = pneg %p339
      %p346 = scmp.eq.s32.totalorder %s23, 1
      %p347 = por %p345, %p346
      %p348 = scmp.ne.s32.totalorder %s340, %s343
      %p349 = scmp.eq.s32.totalorder %s23, 0
      %p350 = por %p348, %p349
      %p351 = scmp.ne.s32.totalorder %s340, %s343
      %p352 = scmp.eq.s32.totalorder %s28, 1
      %p353 = por %p351, %p352
      %p354 = scmp.ne.s32.totalorder %s343, %s344
      %p355 = scmp.eq.s32.totalorder %s28, 0
      %p356 = por %p354, %p355
      %p357 = scmp.ne.s32.totalorder %s343, %s344
      %p358 = scmp.eq.s32.totalorder %s29, 1
      %p359 = por %p357, %p358
      %p361 = scmp.ne.s32.totalorder %s344, %s360
      %p362 = scmp.eq.s32.totalorder %s29, 0
      %p363 = por %p361, %p362
      %s365 = sadd.s32 %s364, 1
      %p368 = scmp.eq.s32.totalorder %s23, 1
      %p369 = scmp.ne.s32.totalorder %s364, %s366
      %p370 = scmp.eq.s32.totalorder %s23, 0
      %p371 = por %p369, %p370
      %p372 = scmp.ne.s32.totalorder %s364, %s366
      %p373 = scmp.eq.s32.totalorder %s28, 1
      %p374 = por %p372, %p373
      %p375 = scmp.ne.s32.totalorder %s366, %s367
      %p376 = scmp.eq.s32.totalorder %s28, 0
      %p377 = por %p375, %p376
      %p378 = scmp.ne.s32.totalorder %s366, %s367
      %p379 = scmp.eq.s32.totalorder %s29, 1
      %p380 = por %p378, %p379
      %p382 = scmp.ne.s32.totalorder %s367, %s381
      %p383 = scmp.eq.s32.totalorder %s29, 0
      %p384 = por %p382, %p383
      %s386 = sadd.s32 %s385, 1
      %p389 = scmp.eq.s32.totalorder %s23, 1
      %p390 = scmp.ne.s32.totalorder %s385, %s387
      %p391 = scmp.eq.s32.totalorder %s23, 0
      %p392 = por %p390, %p391
      %p393 = scmp.ne.s32.totalorder %s385, %s387
      %p394 = scmp.eq.s32.totalorder %s28, 1
      %p395 = por %p393, %p394
      %p396 = scmp.ne.s32.totalorder %s387, %s388
      %p397 = scmp.eq.s32.totalorder %s28, 0
      %p398 = por %p396, %p397
      %p399 = scmp.ne.s32.totalorder %s387, %s388
      %p400 = scmp.eq.s32.totalorder %s29, 1
      %p401 = por %p399, %p400
      %p403 = scmp.ne.s32.totalorder %s388, %s402
      %p404 = scmp.eq.s32.totalorder %s29, 0
      %p405 = por %p403, %p404
      %p406 = scmp.le.s32.totalorder 1, %s23
      %p407 = scmp.lt.s32.totalorder %s23, 3
      %p408 = pnand %p406, %p407
      %p409 = pneg %p408
      // Predicated region
      $region9: #{graph_attention_encoder.1} parent=5 // pred_check
        _
      $region10: #{graph_attention_encoder.1} parent=5 // pred_check_branch
        %411 = sbr.rel (%p408) target = $region12
      $region11: #{graph_attention_encoder.1} parent=5 // pred_region
        %s412 = ssub.s32 %s23, 1
        // Predicated region
        $region13: #{graph_attention_encoder.1} parent=11 // pred_check
          %p413 = pneg %p44
        $region14: #{graph_attention_encoder.1} parent=11 // pred_check_branch
          %415 = sbr.rel (%p413) target = $region16
        $region15: #{graph_attention_encoder.1} parent=11 // pred_region
          _
        $region16: #{graph_attention_encoder.1} parent=11 // pred_fallthru
          _
      $region12: #{graph_attention_encoder.1} parent=5 // pred_fallthru
        _
      %p416 = scmp.lt.s32.totalorder %s23, 2
      // Predicated region
      $region17: #{graph_attention_encoder.1} parent=5 // pred_check
        %p417 = pneg %p416
      $region18: #{graph_attention_encoder.1} parent=5 // pred_check_branch
        %419 = sbr.rel (%p417) target = $region20
      $region19: #{graph_attention_encoder.1} parent=5 // pred_region
        // Predicated region
        $region21: #{graph_attention_encoder.1} parent=19 // pred_check
          %p420 = pneg %p64
        $region22: #{graph_attention_encoder.1} parent=19 // pred_check_branch
          %422 = sbr.rel (%p420) target = $region24
        $region23: #{graph_attention_encoder.1} parent=19 // pred_region
          %p423 = scmp.lt.s32.totalorder %s23, 1
          %s424 = scalar_select %p423, %s23, 1
          %s425 = smul.addr %s424, 4
          %s426 = smul.addr %s425, 4
          %s427 = scalar_lea.vmem %s1, %s426
        $region24: #{graph_attention_encoder.1} parent=19 // pred_fallthru
          _
        // Predicated region
        $region25: #{graph_attention_encoder.1} parent=19 // pred_check
          %p428 = pneg %p90
        $region26: #{graph_attention_encoder.1} parent=19 // pred_check_branch
          %430 = sbr.rel (%p428) target = $region28
        $region27: #{graph_attention_encoder.1} parent=19 // pred_region
          %p431 = scmp.lt.s32.totalorder %s23, 1
          %s432 = scalar_select %p431, %s23, 1
          %s433 = smul.addr %s432, 4
          %s434 = smul.addr %s433, 4
          %s435 = scalar_lea.vmem %s2, %s434
        $region28: #{graph_attention_encoder.1} parent=19 // pred_fallthru
          _
        // Predicated region
        $region29: #{graph_attention_encoder.1} parent=19 // pred_check
          %p436 = pneg %p116
        $region30: #{graph_attention_encoder.1} parent=19 // pred_check_branch
          %438 = sbr.rel (%p436) target = $region32
        $region31: #{graph_attention_encoder.1} parent=19 // pred_region
          %p439 = scmp.lt.s32.totalorder %s23, 1
          %s440 = scalar_select %p439, %s23, 1
          %s441 = smul.addr %s440, 4
          %s442 = smul.addr %s441, 4
          %s443 = scalar_lea.vmem %s3, %s442
        $region32: #{graph_attention_encoder.1} parent=19 // pred_fallthru
          _
        // Predicated region
        $region33: #{graph_attention_encoder.1} parent=19 // pred_check
          %p444 = pneg %p142
        $region34: #{graph_attention_encoder.1} parent=19 // pred_check_branch
          %446 = sbr.rel (%p444) target = $region36
        $region35: #{graph_attention_encoder.1} parent=19 // pred_region
          %p447 = scmp.lt.s32.totalorder %s23, 1
          %s448 = scalar_select %p447, %s23, 1
          %s449 = smul.addr %s448, 4
          %s450 = smul.addr %s449, 4
          %s451 = scalar_lea.vmem %s4, %s450
        $region36: #{graph_attention_encoder.1} parent=19 // pred_fallthru
          _
        // Predicated region
        $region37: #{graph_attention_encoder.1} parent=19 // pred_check
          %p452 = pneg %p168
        $region38: #{graph_attention_encoder.1} parent=19 // pred_check_branch
          %454 = sbr.rel (%p452) target = $region40
        $region39: #{graph_attention_encoder.1} parent=19 // pred_region
          %p455 = scmp.lt.s32.totalorder %s23, 1
          %s456 = scalar_select %p455, %s23, 1
          %s457 = scalar_lea.vmem %s5, %s456
        $region40: #{graph_attention_encoder.1} parent=19 // pred_fallthru
          _
        // Predicated region
        $region41: #{graph_attention_encoder.1} parent=19 // pred_check
          %p458 = pneg %p194
        $region42: #{graph_attention_encoder.1} parent=19 // pred_check_branch
          %460 = sbr.rel (%p458) target = $region44
        $region43: #{graph_attention_encoder.1} parent=19 // pred_region
          %p461 = scmp.lt.s32.totalorder %s23, 1
          %s462 = scalar_select %p461, %s23, 1
          %s463 = scalar_lea.vmem %s6, %s462
        $region44: #{graph_attention_encoder.1} parent=19 // pred_fallthru
          _
        // Predicated region
        $region45: #{graph_attention_encoder.1} parent=19 // pred_check
          %p464 = pneg %p220
        $region46: #{graph_attention_encoder.1} parent=19 // pred_check_branch
          %466 = sbr.rel (%p464) target = $region48
        $region47: #{graph_attention_encoder.1} parent=19 // pred_region
          %p467 = scmp.lt.s32.totalorder %s23, 1
          %s468 = scalar_select %p467, %s23, 1
          %s469 = smul.addr %s468, 16
          %s470 = smul.addr %s469, 4
          %s471 = scalar_lea.vmem %s7, %s470
        $region48: #{graph_attention_encoder.1} parent=19 // pred_fallthru
          _
        // Predicated region
        $region49: #{graph_attention_encoder.1} parent=19 // pred_check
          %p472 = pneg %p246
        $region50: #{graph_attention_encoder.1} parent=19 // pred_check_branch
          %474 = sbr.rel (%p472) target = $region52
        $region51: #{graph_attention_encoder.1} parent=19 // pred_region
          %p475 = scmp.lt.s32.totalorder %s23, 1
          %s476 = scalar_select %p475, %s23, 1
          %s477 = smul.addr %s476, 4
          %s478 = scalar_lea.vmem %s8, %s477
        $region52: #{graph_attention_encoder.1} parent=19 // pred_fallthru
          _
        // Predicated region
        $region53: #{graph_attention_encoder.1} parent=19 // pred_check
          %p479 = pneg %p272
        $region54: #{graph_attention_encoder.1} parent=19 // pred_check_branch
          %481 = sbr.rel (%p479) target = $region56
        $region55: #{graph_attention_encoder.1} parent=19 // pred_region
          %p482 = scmp.lt.s32.totalorder %s23, 1
          %s483 = scalar_select %p482, %s23, 1
          %s484 = smul.addr %s483, 64
          %s485 = smul.addr %s484, 4
          %s486 = scalar_lea.vmem %s9, %s485
        $region56: #{graph_attention_encoder.1} parent=19 // pred_fallthru
          _
        // Predicated region
        $region57: #{graph_attention_encoder.1} parent=19 // pred_check
          %p487 = pneg %p298
        $region58: #{graph_attention_encoder.1} parent=19 // pred_check_branch
          %489 = sbr.rel (%p487) target = $region60
        $region59: #{graph_attention_encoder.1} parent=19 // pred_region
          %p490 = scmp.lt.s32.totalorder %s23, 1
          %s491 = scalar_select %p490, %s23, 1
          %s492 = scalar_lea.vmem %s10, %s491
        $region60: #{graph_attention_encoder.1} parent=19 // pred_fallthru
          _
        // Predicated region
        $region61: #{graph_attention_encoder.1} parent=19 // pred_check
          %p493 = pneg %p324
        $region62: #{graph_attention_encoder.1} parent=19 // pred_check_branch
          %495 = sbr.rel (%p493) target = $region64
        $region63: #{graph_attention_encoder.1} parent=19 // pred_region
          %p496 = scmp.lt.s32.totalorder %s23, 1
          %s497 = scalar_select %p496, %s23, 1
          %s498 = scalar_lea.vmem %s11, %s497
        $region64: #{graph_attention_encoder.1} parent=19 // pred_fallthru
          _
        // Predicated region
        $region65: #{graph_attention_encoder.1} parent=19 // pred_check
          %p499 = pneg %p350
        $region66: #{graph_attention_encoder.1} parent=19 // pred_check_branch
          %501 = sbr.rel (%p499) target = $region68
        $region67: #{graph_attention_encoder.1} parent=19 // pred_region
          %p502 = scmp.lt.s32.totalorder %s23, 1
          %s503 = scalar_select %p502, %s23, 1
          %s504 = scalar_lea.vmem %s12, %s503
        $region68: #{graph_attention_encoder.1} parent=19 // pred_fallthru
          _
      $region20: #{graph_attention_encoder.1} parent=5 // pred_fallthru
        _
      %p505 = scmp.le.s32.totalorder 1, %s23
      %p506 = scmp.lt.s32.totalorder %s23, 3
      %p507 = pnand %p505, %p506
      %p508 = pneg %p507
      // Predicated region
      $region69: #{graph_attention_encoder.1} parent=5 // pred_check
        _
      $region70: #{graph_attention_encoder.1} parent=5 // pred_check_branch
        %510 = sbr.rel (%p507) target = $region72
      $region71: #{graph_attention_encoder.1} parent=5 // pred_region
        %s511 = ssub.s32 %s23, 1
        %p512 = pneg %p44
        %p513 = pneg %p41
        %p514 = scmp.lt.s32.totalorder %s28, 1
        %s515 = scalar_select %p514, %s28, 1
        %s516 = smul.addr %s515, 4
        %s517 = smul.addr %s516, 4
        %s518 = scalar_lea.vmem %s1, %s517
        %p519 = pneg %p70
        %p520 = pneg %p67
        %p521 = scmp.lt.s32.totalorder %s28, 1
        %s522 = scalar_select %p521, %s28, 1
        %s523 = smul.addr %s522, 4
        %s524 = smul.addr %s523, 4
        %s525 = scalar_lea.vmem %s2, %s524
        %p526 = pneg %p96
        %p527 = pneg %p93
        %p528 = scmp.lt.s32.totalorder %s28, 1
        %s529 = scalar_select %p528, %s28, 1
        %s530 = smul.addr %s529, 4
        %s531 = smul.addr %s530, 4
        %s532 = scalar_lea.vmem %s3, %s531
        %p533 = pneg %p122
        %p534 = pneg %p119
        %p535 = scmp.lt.s32.totalorder %s28, 1
        %s536 = scalar_select %p535, %s28, 1
        %s537 = smul.addr %s536, 4
        %s538 = smul.addr %s537, 4
        %s539 = scalar_lea.vmem %s4, %s538
        %p540 = pneg %p148
        %p541 = pneg %p145
        %p542 = scmp.lt.s32.totalorder %s28, 1
        %s543 = scalar_select %p542, %s28, 1
        %s544 = scalar_lea.vmem %s5, %s543
        %p545 = pneg %p174
        %p546 = pneg %p171
        %p547 = scmp.lt.s32.totalorder %s28, 1
        %s548 = scalar_select %p547, %s28, 1
        %s549 = scalar_lea.vmem %s6, %s548
        %p550 = pneg %p200
        %p551 = pneg %p197
        %p552 = scmp.lt.s32.totalorder %s28, 1
        %s553 = scalar_select %p552, %s28, 1
        %s554 = smul.addr %s553, 16
        %s555 = smul.addr %s554, 4
        %s556 = scalar_lea.vmem %s7, %s555
        %p557 = pneg %p226
        %p558 = pneg %p223
        %p559 = scmp.lt.s32.totalorder %s28, 1
        %s560 = scalar_select %p559, %s28, 1
        %s561 = smul.addr %s560, 4
        %s562 = scalar_lea.vmem %s8, %s561
        %p563 = pneg %p252
        %p564 = pneg %p249
        %p565 = scmp.lt.s32.totalorder %s28, 1
        %s566 = scalar_select %p565, %s28, 1
        %s567 = smul.addr %s566, 64
        %s568 = smul.addr %s567, 4
        %s569 = scalar_lea.vmem %s9, %s568
        %p570 = pneg %p278
        %p571 = pneg %p275
        %p572 = scmp.lt.s32.totalorder %s28, 1
        %s573 = scalar_select %p572, %s28, 1
        %s574 = scalar_lea.vmem %s10, %s573
        %p575 = pneg %p304
        %p576 = pneg %p301
        %p577 = scmp.lt.s32.totalorder %s28, 1
        %s578 = scalar_select %p577, %s28, 1
        %s579 = scalar_lea.vmem %s11, %s578
        %p580 = pneg %p330
        %p581 = pneg %p327
        %p582 = scmp.lt.s32.totalorder %s28, 1
        %s583 = scalar_select %p582, %s28, 1
        %s584 = scalar_lea.vmem %s12, %s583
        %p585 = pneg %p356
        %p586 = pneg %p353
        %p587 = pneg %p377
        %p588 = pneg %p374
        %p589 = pneg %p398
        %p590 = pneg %p395
        %p591 = scmp.lt.s32.totalorder %s28, 1
        %s592 = scalar_select %p591, %s28, 1
        %s593 = smul.addr %s592, 4
        %s594 = smul.addr %s593, 4
        %s595 = scalar_lea.vmem %s1, %s594
        %p596 = scmp.lt.s32.totalorder %s28, 1
        %s597 = scalar_select %p596, %s28, 1
        %s598 = smul.addr %s597, 4
        %s599 = smul.addr %s598, 4
        %s600 = scalar_lea.vmem %s2, %s599
        %p601 = scmp.lt.s32.totalorder %s28, 1
        %s602 = scalar_select %p601, %s28, 1
        %s603 = smul.addr %s602, 4
        %s604 = smul.addr %s603, 4
        %s605 = scalar_lea.vmem %s3, %s604
        %p606 = scmp.lt.s32.totalorder %s28, 1
        %s607 = scalar_select %p606, %s28, 1
        %s608 = smul.addr %s607, 4
        %s609 = smul.addr %s608, 4
        %s610 = scalar_lea.vmem %s4, %s609
        %p611 = scmp.lt.s32.totalorder %s28, 1
        %s612 = scalar_select %p611, %s28, 1
        %s613 = scalar_lea.vmem %s5, %s612
        %p614 = scmp.lt.s32.totalorder %s28, 1
        %s615 = scalar_select %p614, %s28, 1
        %s616 = scalar_lea.vmem %s6, %s615
        %p617 = scmp.lt.s32.totalorder %s28, 1
        %s618 = scalar_select %p617, %s28, 1
        %s619 = smul.addr %s618, 16
        %s620 = smul.addr %s619, 4
        %s621 = scalar_lea.vmem %s7, %s620
        %p622 = scmp.lt.s32.totalorder %s28, 1
        %s623 = scalar_select %p622, %s28, 1
        %s624 = smul.addr %s623, 4
        %s625 = scalar_lea.vmem %s8, %s624
        %p626 = scmp.lt.s32.totalorder %s28, 1
        %s627 = scalar_select %p626, %s28, 1
        %s628 = smul.addr %s627, 64
        %s629 = smul.addr %s628, 4
        %s630 = scalar_lea.vmem %s9, %s629
        %p631 = scmp.lt.s32.totalorder %s28, 1
        %s632 = scalar_select %p631, %s28, 1
        %s633 = scalar_lea.vmem %s10, %s632
        %p634 = scmp.lt.s32.totalorder %s28, 1
        %s635 = scalar_select %p634, %s28, 1
        %s636 = scalar_lea.vmem %s11, %s635
        %p637 = scmp.lt.s32.totalorder %s28, 1
        %s638 = scalar_select %p637, %s28, 1
        %s639 = scalar_lea.vmem %s12, %s638
        %p641 = scmp.eq.s32.totalorder %s28, 0
        // Predicated region
        $region73: #{graph_attention_encoder.1} parent=71 // pred_check
          %p642 = pneg %p641
        $region74: #{graph_attention_encoder.1} parent=71 // pred_check_branch
          %644 = sbr.rel (%p642) target = $region76
        $region75: #{graph_attention_encoder.1} parent=71 // pred_region
          %v645 = vld [vmem:[%s0] sm:$0xff]
          %v646 = vld [vmem:[%s0 + $0x8] sm:$0xff]
          %vm647 = vcmask 261120
          %648 = vst.msk [vmem:[#allocation2] sm:$0xff] %vm647, %v645
          %649 = vst.msk [vmem:[#allocation2 + $0x8] sm:$0xff] %vm647, %v646
        $region76: #{graph_attention_encoder.1} parent=71 // pred_fallthru
          _
        %v650 = vld [vmem:[#allocation2] sm:$0xff]
        %v651 = vld [vmem:[#allocation2 + $0x8] sm:$0xff]
        %v652 = vpack.c.bf16 %v651, %v650
        %v653 = vld [vmem:[%s595] sm:$0xf]
        %v654 = vld [vmem:[%s595 + $0x4] sm:$0xf]
        %v655 = vld [vmem:[%s595 + $0x8] sm:$0xf]
        %v656 = vld [vmem:[%s595 + $0xc] sm:$0xf]
        %v661 = vunpack.c.l.b16 %v653
        %v662 = vunpack.c.l.b16 %v654
        %v663 = vunpack.c.l.b16 %v655
        %v664 = vunpack.c.l.b16 %v656
        %v665 = vpack.c.b16 %v662, %v661
        %v666 = vpack.c.b16 %v664, %v663
        %vm669 = vcmask 261120
        %v671 = vsel %vm669, %v652, 0
        %673 = vmatprep.subr.bf16.mxu0 0
        %674 = vmatpush1.bf16.msra.mxu0 %v665
        %675 = vmatprep.subr.bf16.mxu0 0
        %676 = vmatpush1.bf16.msra.mxu0 %v666
        %677 = vmatprep.subr.bf16.mxu0 0
        %678 = vmatpush1.bf16.msra.mxu0 0
        %679 = vmatprep.subr.bf16.mxu0 0
        %680 = vmatpush1.bf16.msra.mxu0 0
        %681 = vmatprep.subr.bf16.mxu0 0
        %682 = vmatpush1.bf16.msra.mxu0 0
        %683 = vmatprep.subr.bf16.mxu0 0
        %684 = vmatpush1.bf16.msra.mxu0 0
        %685 = vmatprep.subr.bf16.mxu0 0
        %686 = vmatpush1.bf16.msra.mxu0 0
        %687 = vmatprep.subr.bf16.mxu0 0
        %688 = vmatpush1.bf16.msra.mxu0 0
        %689 = vmatprep.subr.bf16.mxu0 0
        %690 = vmatpush1.bf16.msra.mxu0 0
        %691 = vmatprep.subr.bf16.mxu0 0
        %692 = vmatpush1.bf16.msra.mxu0 0
        %693 = vmatprep.subr.bf16.mxu0 0
        %694 = vmatpush1.bf16.msra.mxu0 0
        %695 = vmatprep.subr.bf16.mxu0 0
        %696 = vmatpush1.bf16.msra.mxu0 0
        %697 = vmatprep.subr.bf16.mxu0 0
        %698 = vmatpush1.bf16.msra.mxu0 0
        %699 = vmatprep.subr.bf16.mxu0 0
        %700 = vmatpush1.bf16.msra.mxu0 0
        %701 = vmatprep.subr.bf16.mxu0 0
        %702 = vmatpush1.bf16.msra.mxu0 0
        %703 = vmatprep.subr.bf16.mxu0 0
        %704 = vmatpush1.bf16.msra.mxu0 0
        %705 = vmatprep.mubr.bf16.mxu0 0
        %706 = vmatmul.mubr.bf16.gmra.mrb[0].mxu0 %v671
        %v707 = vpop.f32.mrb[0].mxu0
        %v708 = vadd.f32 0.0, %v707
        %v709 = vpop.f32.mrb[0].mxu0
        %v710 = vpop.f32.mrb[0].mxu0
        %v711 = vadd.f32 0.0, %v710
        %v712 = vpop.f32.mrb[0].mxu0
        %713 = vdwg.mxu0
        %v714 = vld [vmem:[%s600] sm:$0xf]
        %v715 = vld [vmem:[%s600 + $0x4] sm:$0xf]
        %v716 = vld [vmem:[%s600 + $0x8] sm:$0xf]
        %v717 = vld [vmem:[%s600 + $0xc] sm:$0xf]
        %v722 = vunpack.c.l.b16 %v714
        %v723 = vunpack.c.l.b16 %v715
        %v724 = vunpack.c.l.b16 %v716
        %v725 = vunpack.c.l.b16 %v717
        %v726 = vpack.c.b16 %v723, %v722
        %v727 = vpack.c.b16 %v725, %v724
        %730 = vmatprep.subr.bf16.mxu0 0
        %731 = vmatpush1.bf16.msra.mxu0 %v726
        %732 = vmatprep.subr.bf16.mxu0 0
        %733 = vmatpush1.bf16.msra.mxu0 %v727
        %734 = vmatprep.subr.bf16.mxu0 0
        %735 = vmatpush1.bf16.msra.mxu0 0
        %736 = vmatprep.subr.bf16.mxu0 0
        %737 = vmatpush1.bf16.msra.mxu0 0
        %738 = vmatprep.subr.bf16.mxu0 0
        %739 = vmatpush1.bf16.msra.mxu0 0
        %740 = vmatprep.subr.bf16.mxu0 0
        %741 = vmatpush1.bf16.msra.mxu0 0
        %742 = vmatprep.subr.bf16.mxu0 0
        %743 = vmatpush1.bf16.msra.mxu0 0
        %744 = vmatprep.subr.bf16.mxu0 0
        %745 = vmatpush1.bf16.msra.mxu0 0
        %746 = vmatprep.subr.bf16.mxu0 0
        %747 = vmatpush1.bf16.msra.mxu0 0
        %748 = vmatprep.subr.bf16.mxu0 0
        %749 = vmatpush1.bf16.msra.mxu0 0
        %750 = vmatprep.subr.bf16.mxu0 0
        %751 = vmatpush1.bf16.msra.mxu0 0
        %752 = vmatprep.subr.bf16.mxu0 0
        %753 = vmatpush1.bf16.msra.mxu0 0
        %754 = vmatprep.subr.bf16.mxu0 0
        %755 = vmatpush1.bf16.msra.mxu0 0
        %756 = vmatprep.subr.bf16.mxu0 0
        %757 = vmatpush1.bf16.msra.mxu0 0
        %758 = vmatprep.subr.bf16.mxu0 0
        %759 = vmatpush1.bf16.msra.mxu0 0
        %760 = vmatprep.subr.bf16.mxu0 0
        %761 = vmatpush1.bf16.msra.mxu0 0
        %762 = vmatprep.mubr.bf16.mxu0 0
        %763 = vmatmul.mubr.bf16.gmra.mrb[0].mxu0 %v671
        %v764 = vpop.f32.mrb[0].mxu0
        %v765 = vadd.f32 0.0, %v764
        %v766 = vpop.f32.mrb[0].mxu0
        %v767 = vpop.f32.mrb[0].mxu0
        %v768 = vadd.f32 0.0, %v767
        %v769 = vpop.f32.mrb[0].mxu0
        %770 = vdwg.mxu0
        %v771 = vld [vmem:[%s605] sm:$0xf]
        %v772 = vld [vmem:[%s605 + $0x4] sm:$0xf]
        %v773 = vld [vmem:[%s605 + $0x8] sm:$0xf]
        %v774 = vld [vmem:[%s605 + $0xc] sm:$0xf]
        %v779 = vunpack.c.l.b16 %v771
        %v780 = vunpack.c.l.b16 %v772
        %v781 = vunpack.c.l.b16 %v773
        %v782 = vunpack.c.l.b16 %v774
        %v783 = vpack.c.b16 %v780, %v779
        %v784 = vpack.c.b16 %v782, %v781
        %787 = vmatprep.subr.bf16.mxu0 0
        %788 = vmatpush1.bf16.msra.mxu0 %v783
        %789 = vmatprep.subr.bf16.mxu0 0
        %790 = vmatpush1.bf16.msra.mxu0 %v784
        %791 = vmatprep.subr.bf16.mxu0 0
        %792 = vmatpush1.bf16.msra.mxu0 0
        %793 = vmatprep.subr.bf16.mxu0 0
        %794 = vmatpush1.bf16.msra.mxu0 0
        %795 = vmatprep.subr.bf16.mxu0 0
        %796 = vmatpush1.bf16.msra.mxu0 0
        %797 = vmatprep.subr.bf16.mxu0 0
        %798 = vmatpush1.bf16.msra.mxu0 0
        %799 = vmatprep.subr.bf16.mxu0 0
        %800 = vmatpush1.bf16.msra.mxu0 0
        %801 = vmatprep.subr.bf16.mxu0 0
        %802 = vmatpush1.bf16.msra.mxu0 0
        %803 = vmatprep.subr.bf16.mxu0 0
        %804 = vmatpush1.bf16.msra.mxu0 0
        %805 = vmatprep.subr.bf16.mxu0 0
        %806 = vmatpush1.bf16.msra.mxu0 0
        %807 = vmatprep.subr.bf16.mxu0 0
        %808 = vmatpush1.bf16.msra.mxu0 0
        %809 = vmatprep.subr.bf16.mxu0 0
        %810 = vmatpush1.bf16.msra.mxu0 0
        %811 = vmatprep.subr.bf16.mxu0 0
        %812 = vmatpush1.bf16.msra.mxu0 0
        %813 = vmatprep.subr.bf16.mxu0 0
        %814 = vmatpush1.bf16.msra.mxu0 0
        %815 = vmatprep.subr.bf16.mxu0 0
        %816 = vmatpush1.bf16.msra.mxu0 0
        %817 = vmatprep.subr.bf16.mxu0 0
        %818 = vmatpush1.bf16.msra.mxu0 0
        %819 = vmatprep.mubr.bf16.mxu0 0
        %820 = vmatmul.mubr.bf16.gmra.mrb[0].mxu0 %v671
        %v821 = vpop.f32.mrb[0].mxu0
        %v822 = vadd.f32 0.0, %v821
        %v823 = vpop.f32.mrb[0].mxu0
        %v824 = vpop.f32.mrb[0].mxu0
        %v825 = vadd.f32 0.0, %v824
        %v826 = vpop.f32.mrb[0].mxu0
        %827 = vdwg.mxu0
        %830 = vrot.lane.b32.xlu0 %v708, 124
        %v831 = vpop.permute.xlu0 %830
        %832 = vrot.lane.b32.xlu0 %v711, 124
        %v833 = vpop.permute.xlu0 %832
        %836 = vrot.lane.b32.xlu0 %v708, 120
        %v837 = vpop.permute.xlu0 %836
        %838 = vrot.lane.b32.xlu0 %v711, 120
        %v839 = vpop.permute.xlu0 %838
        %842 = vrot.lane.b32.xlu0 %v708, 116
        %v843 = vpop.permute.xlu0 %842
        %844 = vrot.lane.b32.xlu0 %v711, 116
        %v845 = vpop.permute.xlu0 %844
        %848 = vrot.lane.b32.xlu0 %v708, 112
        %v849 = vpop.permute.xlu0 %848
        %850 = vrot.lane.b32.xlu0 %v711, 112
        %v851 = vpop.permute.xlu0 %850
        %854 = vrot.lane.b32.xlu0 %v708, 108
        %v855 = vpop.permute.xlu0 %854
        %856 = vrot.lane.b32.xlu0 %v711, 108
        %v857 = vpop.permute.xlu0 %856
        %860 = vrot.lane.b32.xlu0 %v708, 104
        %v861 = vpop.permute.xlu0 %860
        %862 = vrot.lane.b32.xlu0 %v711, 104
        %v863 = vpop.permute.xlu0 %862
        %866 = vrot.lane.b32.xlu0 %v708, 100
        %v867 = vpop.permute.xlu0 %866
        %868 = vrot.lane.b32.xlu0 %v711, 100
        %v869 = vpop.permute.xlu0 %868
        %v872 = vcombine.low %v708, %v837
        %v873 = vcombine.high %v708, %v837
        %v875 = vunpack.c.l.s4 1983009808
        %v876 = vunpack.c.0.s8 %v875
        %v877 = vlaneseq
        %v878 = vshrl.u32 %v877, 7
        %v879 = vsub.s32 %v876, %v878
        %v880 = vrot.slane %v872, %v879
        %v882 = vunpack.c.l.s4 1983009808
        %v883 = vunpack.c.0.s8 %v882
        %v884 = vlaneseq
        %v885 = vshrl.u32 %v884, 7
        %v886 = vsub.s32 %v883, %v885
        %v887 = vrot.slane %v873, %v886
        %v888 = vcombine.low %v831, %v843
        %v889 = vcombine.high %v831, %v843
        %v891 = vunpack.c.l.s4 1983009808
        %v892 = vunpack.c.0.s8 %v891
        %v893 = vlaneseq
        %v894 = vshrl.u32 %v893, 7
        %v895 = vsub.s32 %v892, %v894
        %v896 = vrot.slane %v888, %v895
        %v898 = vunpack.c.l.s4 1983009808
        %v899 = vunpack.c.0.s8 %v898
        %v900 = vlaneseq
        %v901 = vshrl.u32 %v900, 7
        %v902 = vsub.s32 %v899, %v901
        %v903 = vrot.slane %v889, %v902
        %v904 = vcombine.low %v849, %v861
        %v905 = vcombine.high %v849, %v861
        %v907 = vunpack.c.l.s4 1983009808
        %v908 = vunpack.c.0.s8 %v907
        %v909 = vlaneseq
        %v910 = vshrl.u32 %v909, 7
        %v911 = vsub.s32 %v908, %v910
        %v912 = vrot.slane %v904, %v911
        %v914 = vunpack.c.l.s4 1983009808
        %v915 = vunpack.c.0.s8 %v914
        %v916 = vlaneseq
        %v917 = vshrl.u32 %v916, 7
        %v918 = vsub.s32 %v915, %v917
        %v919 = vrot.slane %v905, %v918
        %v920 = vcombine.low %v855, %v867
        %v921 = vcombine.high %v855, %v867
        %v923 = vunpack.c.l.s4 1983009808
        %v924 = vunpack.c.0.s8 %v923
        %v925 = vlaneseq
        %v926 = vshrl.u32 %v925, 7
        %v927 = vsub.s32 %v924, %v926
        %v928 = vrot.slane %v920, %v927
        %v930 = vunpack.c.l.s4 1983009808
        %v931 = vunpack.c.0.s8 %v930
        %v932 = vlaneseq
        %v933 = vshrl.u32 %v932, 7
        %v934 = vsub.s32 %v931, %v933
        %v935 = vrot.slane %v921, %v934
        %v936 = vcombine.low %v880, %v896
        %v937 = vcombine.high %v880, %v896
        %v939 = vunpack.c.l.s4 1934713408
        %v940 = vunpack.c.0.s8 %v939
        %v941 = vlaneseq
        %v942 = vshrl.u32 %v941, 7
        %v943 = vsub.s32 %v940, %v942
        %v944 = vrot.slane %v936, %v943
        %v946 = vunpack.c.l.s4 1934713408
        %v947 = vunpack.c.0.s8 %v946
        %v948 = vlaneseq
        %v949 = vshrl.u32 %v948, 7
        %v950 = vsub.s32 %v947, %v949
        %v951 = vrot.slane %v937, %v950
        %v952 = vcombine.low %v887, %v903
        %v953 = vcombine.high %v887, %v903
        %v955 = vunpack.c.l.s4 1934713408
        %v956 = vunpack.c.0.s8 %v955
        %v957 = vlaneseq
        %v958 = vshrl.u32 %v957, 7
        %v959 = vsub.s32 %v956, %v958
        %v960 = vrot.slane %v952, %v959
        %v962 = vunpack.c.l.s4 1934713408
        %v963 = vunpack.c.0.s8 %v962
        %v964 = vlaneseq
        %v965 = vshrl.u32 %v964, 7
        %v966 = vsub.s32 %v963, %v965
        %v967 = vrot.slane %v953, %v966
        %v968 = vcombine.low %v912, %v928
        %v969 = vcombine.high %v912, %v928
        %v971 = vunpack.c.l.s4 1934713408
        %v972 = vunpack.c.0.s8 %v971
        %v973 = vlaneseq
        %v974 = vshrl.u32 %v973, 7
        %v975 = vsub.s32 %v972, %v974
        %v976 = vrot.slane %v968, %v975
        %v978 = vunpack.c.l.s4 1934713408
        %v979 = vunpack.c.0.s8 %v978
        %v980 = vlaneseq
        %v981 = vshrl.u32 %v980, 7
        %v982 = vsub.s32 %v979, %v981
        %v983 = vrot.slane %v969, %v982
        %v984 = vcombine.low %v919, %v935
        %v985 = vcombine.high %v919, %v935
        %v987 = vunpack.c.l.s4 1934713408
        %v988 = vunpack.c.0.s8 %v987
        %v989 = vlaneseq
        %v990 = vshrl.u32 %v989, 7
        %v991 = vsub.s32 %v988, %v990
        %v992 = vrot.slane %v984, %v991
        %v994 = vunpack.c.l.s4 1934713408
        %v995 = vunpack.c.0.s8 %v994
        %v996 = vlaneseq
        %v997 = vshrl.u32 %v996, 7
        %v998 = vsub.s32 %v995, %v997
        %v999 = vrot.slane %v985, %v998
        %v1000 = vcombine.low %v944, %v976
        %v1001 = vcombine.high %v944, %v976
        %v1002 = vcombine.low %v951, %v983
        %v1003 = vcombine.high %v951, %v983
        %v1004 = vcombine.low %v960, %v992
        %v1005 = vcombine.high %v960, %v992
        %v1006 = vcombine.low %v967, %v999
        %v1007 = vcombine.high %v967, %v999
        %v1008 = vcombine.low %v711, %v839
        %v1009 = vcombine.high %v711, %v839
        %v1011 = vunpack.c.l.s4 1983009808
        %v1012 = vunpack.c.0.s8 %v1011
        %v1013 = vlaneseq
        %v1014 = vshrl.u32 %v1013, 7
        %v1015 = vsub.s32 %v1012, %v1014
        %v1016 = vrot.slane %v1008, %v1015
        %v1018 = vunpack.c.l.s4 1983009808
        %v1019 = vunpack.c.0.s8 %v1018
        %v1020 = vlaneseq
        %v1021 = vshrl.u32 %v1020, 7
        %v1022 = vsub.s32 %v1019, %v1021
        %v1023 = vrot.slane %v1009, %v1022
        %v1024 = vcombine.low %v833, %v845
        %v1025 = vcombine.high %v833, %v845
        %v1027 = vunpack.c.l.s4 1983009808
        %v1028 = vunpack.c.0.s8 %v1027
        %v1029 = vlaneseq
        %v1030 = vshrl.u32 %v1029, 7
        %v1031 = vsub.s32 %v1028, %v1030
        %v1032 = vrot.slane %v1024, %v1031
        %v1034 = vunpack.c.l.s4 1983009808
        %v1035 = vunpack.c.0.s8 %v1034
        %v1036 = vlaneseq
        %v1037 = vshrl.u32 %v1036, 7
        %v1038 = vsub.s32 %v1035, %v1037
        %v1039 = vrot.slane %v1025, %v1038
        %v1040 = vcombine.low %v851, %v863
        %v1041 = vcombine.high %v851, %v863
        %v1043 = vunpack.c.l.s4 1983009808
        %v1044 = vunpack.c.0.s8 %v1043
        %v1045 = vlaneseq
        %v1046 = vshrl.u32 %v1045, 7
        %v1047 = vsub.s32 %v1044, %v1046
        %v1048 = vrot.slane %v1040, %v1047
        %v1050 = vunpack.c.l.s4 1983009808
        %v1051 = vunpack.c.0.s8 %v1050
        %v1052 = vlaneseq
        %v1053 = vshrl.u32 %v1052, 7
        %v1054 = vsub.s32 %v1051, %v1053
        %v1055 = vrot.slane %v1041, %v1054
        %v1056 = vcombine.low %v857, %v869
        %v1057 = vcombine.high %v857, %v869
        %v1059 = vunpack.c.l.s4 1983009808
        %v1060 = vunpack.c.0.s8 %v1059
        %v1061 = vlaneseq
        %v1062 = vshrl.u32 %v1061, 7
        %v1063 = vsub.s32 %v1060, %v1062
        %v1064 = vrot.slane %v1056, %v1063
        %v1066 = vunpack.c.l.s4 1983009808
        %v1067 = vunpack.c.0.s8 %v1066
        %v1068 = vlaneseq
        %v1069 = vshrl.u32 %v1068, 7
        %v1070 = vsub.s32 %v1067, %v1069
        %v1071 = vrot.slane %v1057, %v1070
        %v1072 = vcombine.low %v1016, %v1032
        %v1073 = vcombine.high %v1016, %v1032
        %v1075 = vunpack.c.l.s4 1934713408
        %v1076 = vunpack.c.0.s8 %v1075
        %v1077 = vlaneseq
        %v1078 = vshrl.u32 %v1077, 7
        %v1079 = vsub.s32 %v1076, %v1078
        %v1080 = vrot.slane %v1072, %v1079
        %v1082 = vunpack.c.l.s4 1934713408
        %v1083 = vunpack.c.0.s8 %v1082
        %v1084 = vlaneseq
        %v1085 = vshrl.u32 %v1084, 7
        %v1086 = vsub.s32 %v1083, %v1085
        %v1087 = vrot.slane %v1073, %v1086
        %v1088 = vcombine.low %v1023, %v1039
        %v1089 = vcombine.high %v1023, %v1039
        %v1091 = vunpack.c.l.s4 1934713408
        %v1092 = vunpack.c.0.s8 %v1091
        %v1093 = vlaneseq
        %v1094 = vshrl.u32 %v1093, 7
        %v1095 = vsub.s32 %v1092, %v1094
        %v1096 = vrot.slane %v1088, %v1095
        %v1098 = vunpack.c.l.s4 1934713408
        %v1099 = vunpack.c.0.s8 %v1098
        %v1100 = vlaneseq
        %v1101 = vshrl.u32 %v1100, 7
        %v1102 = vsub.s32 %v1099, %v1101
        %v1103 = vrot.slane %v1089, %v1102
        %v1104 = vcombine.low %v1048, %v1064
        %v1105 = vcombine.high %v1048, %v1064
        %v1107 = vunpack.c.l.s4 1934713408
        %v1108 = vunpack.c.0.s8 %v1107
        %v1109 = vlaneseq
        %v1110 = vshrl.u32 %v1109, 7
        %v1111 = vsub.s32 %v1108, %v1110
        %v1112 = vrot.slane %v1104, %v1111
        %v1114 = vunpack.c.l.s4 1934713408
        %v1115 = vunpack.c.0.s8 %v1114
        %v1116 = vlaneseq
        %v1117 = vshrl.u32 %v1116, 7
        %v1118 = vsub.s32 %v1115, %v1117
        %v1119 = vrot.slane %v1105, %v1118
        %v1120 = vcombine.low %v1055, %v1071
        %v1121 = vcombine.high %v1055, %v1071
        %v1123 = vunpack.c.l.s4 1934713408
        %v1124 = vunpack.c.0.s8 %v1123
        %v1125 = vlaneseq
        %v1126 = vshrl.u32 %v1125, 7
        %v1127 = vsub.s32 %v1124, %v1126
        %v1128 = vrot.slane %v1120, %v1127
        %v1130 = vunpack.c.l.s4 1934713408
        %v1131 = vunpack.c.0.s8 %v1130
        %v1132 = vlaneseq
        %v1133 = vshrl.u32 %v1132, 7
        %v1134 = vsub.s32 %v1131, %v1133
        %v1135 = vrot.slane %v1121, %v1134
        %v1136 = vcombine.low %v1080, %v1112
        %v1137 = vcombine.high %v1080, %v1112
        %v1138 = vcombine.low %v1087, %v1119
        %v1139 = vcombine.high %v1087, %v1119
        %v1140 = vcombine.low %v1096, %v1128
        %v1141 = vcombine.high %v1096, %v1128
        %v1142 = vcombine.low %v1103, %v1135
        %v1143 = vcombine.high %v1103, %v1135
        %v1144 = vcombine.low %v1000, %v1002
        %v1145 = vcombine.high %v1000, %v1002
        %v1147 = vunpack.c.l.s4 1983009808
        %v1148 = vunpack.c.0.s8 %v1147
        %v1149 = vlaneseq
        %v1150 = vshrl.u32 %v1149, 7
        %v1151 = vsub.s32 %v1148, %v1150
        %v1152 = vrot.slane %v1144, %v1151
        %v1154 = vunpack.c.l.s4 1983009808
        %v1155 = vunpack.c.0.s8 %v1154
        %v1156 = vlaneseq
        %v1157 = vshrl.u32 %v1156, 7
        %v1158 = vsub.s32 %v1155, %v1157
        %v1159 = vrot.slane %v1145, %v1158
        %v1160 = vcombine.low %v1001, %v1003
        %v1161 = vcombine.high %v1001, %v1003
        %v1163 = vunpack.c.l.s4 1983009808
        %v1164 = vunpack.c.0.s8 %v1163
        %v1165 = vlaneseq
        %v1166 = vshrl.u32 %v1165, 7
        %v1167 = vsub.s32 %v1164, %v1166
        %v1168 = vrot.slane %v1160, %v1167
        %v1170 = vunpack.c.l.s4 1983009808
        %v1171 = vunpack.c.0.s8 %v1170
        %v1172 = vlaneseq
        %v1173 = vshrl.u32 %v1172, 7
        %v1174 = vsub.s32 %v1171, %v1173
        %v1175 = vrot.slane %v1161, %v1174
        %v1176 = vcombine.low %v1004, %v1006
        %v1177 = vcombine.high %v1004, %v1006
        %v1179 = vunpack.c.l.s4 1983009808
        %v1180 = vunpack.c.0.s8 %v1179
        %v1181 = vlaneseq
        %v1182 = vshrl.u32 %v1181, 7
        %v1183 = vsub.s32 %v1180, %v1182
        %v1184 = vrot.slane %v1176, %v1183
        %v1186 = vunpack.c.l.s4 1983009808
        %v1187 = vunpack.c.0.s8 %v1186
        %v1188 = vlaneseq
        %v1189 = vshrl.u32 %v1188, 7
        %v1190 = vsub.s32 %v1187, %v1189
        %v1191 = vrot.slane %v1177, %v1190
        %v1192 = vcombine.low %v1005, %v1007
        %v1193 = vcombine.high %v1005, %v1007
        %v1195 = vunpack.c.l.s4 1983009808
        %v1196 = vunpack.c.0.s8 %v1195
        %v1197 = vlaneseq
        %v1198 = vshrl.u32 %v1197, 7
        %v1199 = vsub.s32 %v1196, %v1198
        %v1200 = vrot.slane %v1192, %v1199
        %v1202 = vunpack.c.l.s4 1983009808
        %v1203 = vunpack.c.0.s8 %v1202
        %v1204 = vlaneseq
        %v1205 = vshrl.u32 %v1204, 7
        %v1206 = vsub.s32 %v1203, %v1205
        %v1207 = vrot.slane %v1193, %v1206
        %v1208 = vcombine.low %v1152, %v1168
        %v1209 = vcombine.high %v1152, %v1168
        %v1211 = vunpack.c.l.s4 1934713408
        %v1212 = vunpack.c.0.s8 %v1211
        %v1213 = vlaneseq
        %v1214 = vshrl.u32 %v1213, 7
        %v1215 = vsub.s32 %v1212, %v1214
        %v1216 = vrot.slane %v1208, %v1215
        %v1218 = vunpack.c.l.s4 1934713408
        %v1219 = vunpack.c.0.s8 %v1218
        %v1220 = vlaneseq
        %v1221 = vshrl.u32 %v1220, 7
        %v1222 = vsub.s32 %v1219, %v1221
        %v1223 = vrot.slane %v1209, %v1222
        %v1224 = vcombine.low %v1159, %v1175
        %v1225 = vcombine.high %v1159, %v1175
        %v1227 = vunpack.c.l.s4 1934713408
        %v1228 = vunpack.c.0.s8 %v1227
        %v1229 = vlaneseq
        %v1230 = vshrl.u32 %v1229, 7
        %v1231 = vsub.s32 %v1228, %v1230
        %v1232 = vrot.slane %v1224, %v1231
        %v1234 = vunpack.c.l.s4 1934713408
        %v1235 = vunpack.c.0.s8 %v1234
        %v1236 = vlaneseq
        %v1237 = vshrl.u32 %v1236, 7
        %v1238 = vsub.s32 %v1235, %v1237
        %v1239 = vrot.slane %v1225, %v1238
        %v1240 = vcombine.low %v1184, %v1200
        %v1241 = vcombine.high %v1184, %v1200
        %v1243 = vunpack.c.l.s4 1934713408
        %v1244 = vunpack.c.0.s8 %v1243
        %v1245 = vlaneseq
        %v1246 = vshrl.u32 %v1245, 7
        %v1247 = vsub.s32 %v1244, %v1246
        %v1248 = vrot.slane %v1240, %v1247
        %v1250 = vunpack.c.l.s4 1934713408
        %v1251 = vunpack.c.0.s8 %v1250
        %v1252 = vlaneseq
        %v1253 = vshrl.u32 %v1252, 7
        %v1254 = vsub.s32 %v1251, %v1253
        %v1255 = vrot.slane %v1241, %v1254
        %v1256 = vcombine.low %v1191, %v1207
        %v1257 = vcombine.high %v1191, %v1207
        %v1259 = vunpack.c.l.s4 1934713408
        %v1260 = vunpack.c.0.s8 %v1259
        %v1261 = vlaneseq
        %v1262 = vshrl.u32 %v1261, 7
        %v1263 = vsub.s32 %v1260, %v1262
        %v1264 = vrot.slane %v1256, %v1263
        %v1266 = vunpack.c.l.s4 1934713408
        %v1267 = vunpack.c.0.s8 %v1266
        %v1268 = vlaneseq
        %v1269 = vshrl.u32 %v1268, 7
        %v1270 = vsub.s32 %v1267, %v1269
        %v1271 = vrot.slane %v1257, %v1270
        %v1272 = vcombine.low %v1216, %v1248
        %v1273 = vcombine.high %v1216, %v1248
        %v1274 = vcombine.low %v1223, %v1255
        %v1275 = vcombine.high %v1223, %v1255
        %v1276 = vcombine.low %v1232, %v1264
        %v1277 = vcombine.high %v1232, %v1264
        %v1278 = vcombine.low %v1239, %v1271
        %v1279 = vcombine.high %v1239, %v1271
        %v1280 = vcombine.low %v1136, %v1138
        %v1281 = vcombine.high %v1136, %v1138
        %v1283 = vunpack.c.l.s4 1983009808
        %v1284 = vunpack.c.0.s8 %v1283
        %v1285 = vlaneseq
        %v1286 = vshrl.u32 %v1285, 7
        %v1287 = vsub.s32 %v1284, %v1286
        %v1288 = vrot.slane %v1280, %v1287
        %v1290 = vunpack.c.l.s4 1983009808
        %v1291 = vunpack.c.0.s8 %v1290
        %v1292 = vlaneseq
        %v1293 = vshrl.u32 %v1292, 7
        %v1294 = vsub.s32 %v1291, %v1293
        %v1295 = vrot.slane %v1281, %v1294
        %v1296 = vcombine.low %v1137, %v1139
        %v1297 = vcombine.high %v1137, %v1139
        %v1299 = vunpack.c.l.s4 1983009808
        %v1300 = vunpack.c.0.s8 %v1299
        %v1301 = vlaneseq
        %v1302 = vshrl.u32 %v1301, 7
        %v1303 = vsub.s32 %v1300, %v1302
        %v1304 = vrot.slane %v1296, %v1303
        %v1306 = vunpack.c.l.s4 1983009808
        %v1307 = vunpack.c.0.s8 %v1306
        %v1308 = vlaneseq
        %v1309 = vshrl.u32 %v1308, 7
        %v1310 = vsub.s32 %v1307, %v1309
        %v1311 = vrot.slane %v1297, %v1310
        %v1312 = vcombine.low %v1140, %v1142
        %v1313 = vcombine.high %v1140, %v1142
        %v1315 = vunpack.c.l.s4 1983009808
        %v1316 = vunpack.c.0.s8 %v1315
        %v1317 = vlaneseq
        %v1318 = vshrl.u32 %v1317, 7
        %v1319 = vsub.s32 %v1316, %v1318
        %v1320 = vrot.slane %v1312, %v1319
        %v1322 = vunpack.c.l.s4 1983009808
        %v1323 = vunpack.c.0.s8 %v1322
        %v1324 = vlaneseq
        %v1325 = vshrl.u32 %v1324, 7
        %v1326 = vsub.s32 %v1323, %v1325
        %v1327 = vrot.slane %v1313, %v1326
        %v1328 = vcombine.low %v1141, %v1143
        %v1329 = vcombine.high %v1141, %v1143
        %v1331 = vunpack.c.l.s4 1983009808
        %v1332 = vunpack.c.0.s8 %v1331
        %v1333 = vlaneseq
        %v1334 = vshrl.u32 %v1333, 7
        %v1335 = vsub.s32 %v1332, %v1334
        %v1336 = vrot.slane %v1328, %v1335
        %v1338 = vunpack.c.l.s4 1983009808
        %v1339 = vunpack.c.0.s8 %v1338
        %v1340 = vlaneseq
        %v1341 = vshrl.u32 %v1340, 7
        %v1342 = vsub.s32 %v1339, %v1341
        %v1343 = vrot.slane %v1329, %v1342
        %v1344 = vcombine.low %v1288, %v1304
        %v1345 = vcombine.high %v1288, %v1304
        %v1347 = vunpack.c.l.s4 1934713408
        %v1348 = vunpack.c.0.s8 %v1347
        %v1349 = vlaneseq
        %v1350 = vshrl.u32 %v1349, 7
        %v1351 = vsub.s32 %v1348, %v1350
        %v1352 = vrot.slane %v1344, %v1351
        %v1354 = vunpack.c.l.s4 1934713408
        %v1355 = vunpack.c.0.s8 %v1354
        %v1356 = vlaneseq
        %v1357 = vshrl.u32 %v1356, 7
        %v1358 = vsub.s32 %v1355, %v1357
        %v1359 = vrot.slane %v1345, %v1358
        %v1360 = vcombine.low %v1295, %v1311
        %v1361 = vcombine.high %v1295, %v1311
        %v1363 = vunpack.c.l.s4 1934713408
        %v1364 = vunpack.c.0.s8 %v1363
        %v1365 = vlaneseq
        %v1366 = vshrl.u32 %v1365, 7
        %v1367 = vsub.s32 %v1364, %v1366
        %v1368 = vrot.slane %v1360, %v1367
        %v1370 = vunpack.c.l.s4 1934713408
        %v1371 = vunpack.c.0.s8 %v1370
        %v1372 = vlaneseq
        %v1373 = vshrl.u32 %v1372, 7
        %v1374 = vsub.s32 %v1371, %v1373
        %v1375 = vrot.slane %v1361, %v1374
        %v1376 = vcombine.low %v1320, %v1336
        %v1377 = vcombine.high %v1320, %v1336
        %v1379 = vunpack.c.l.s4 1934713408
        %v1380 = vunpack.c.0.s8 %v1379
        %v1381 = vlaneseq
        %v1382 = vshrl.u32 %v1381, 7
        %v1383 = vsub.s32 %v1380, %v1382
        %v1384 = vrot.slane %v1376, %v1383
        %v1386 = vunpack.c.l.s4 1934713408
        %v1387 = vunpack.c.0.s8 %v1386
        %v1388 = vlaneseq
        %v1389 = vshrl.u32 %v1388, 7
        %v1390 = vsub.s32 %v1387, %v1389
        %v1391 = vrot.slane %v1377, %v1390
        %v1392 = vcombine.low %v1327, %v1343
        %v1393 = vcombine.high %v1327, %v1343
        %v1395 = vunpack.c.l.s4 1934713408
        %v1396 = vunpack.c.0.s8 %v1395
        %v1397 = vlaneseq
        %v1398 = vshrl.u32 %v1397, 7
        %v1399 = vsub.s32 %v1396, %v1398
        %v1400 = vrot.slane %v1392, %v1399
        %v1402 = vunpack.c.l.s4 1934713408
        %v1403 = vunpack.c.0.s8 %v1402
        %v1404 = vlaneseq
        %v1405 = vshrl.u32 %v1404, 7
        %v1406 = vsub.s32 %v1403, %v1405
        %v1407 = vrot.slane %v1393, %v1406
        %v1408 = vcombine.low %v1352, %v1384
        %v1409 = vcombine.high %v1352, %v1384
        %v1410 = vcombine.low %v1359, %v1391
        %v1411 = vcombine.high %v1359, %v1391
        %v1412 = vcombine.low %v1368, %v1400
        %v1413 = vcombine.high %v1368, %v1400
        %v1414 = vcombine.low %v1375, %v1407
        %v1415 = vcombine.high %v1375, %v1407
        %v1416 = vpack.c.bf16 %v1272, %v1272
        %v1417 = vpack.c.bf16 %v1273, %v1273
        %v1418 = vpack.c.bf16 %v1274, %v1274
        %v1419 = vpack.c.bf16 %v1275, %v1275
        %v1420 = vpack.c.bf16 %v1276, %v1276
        %v1421 = vpack.c.bf16 %v1277, %v1277
        %v1422 = vpack.c.bf16 %v1278, %v1278
        %v1423 = vpack.c.bf16 %v1279, %v1279
        %v1424 = vpack.c.bf16 %v1408, %v1408
        %v1425 = vpack.c.bf16 %v1409, %v1409
        %v1426 = vpack.c.bf16 %v1410, %v1410
        %v1427 = vpack.c.bf16 %v1411, %v1411
        %v1428 = vpack.c.bf16 %v1412, %v1412
        %v1429 = vpack.c.bf16 %v1413, %v1413
        %v1430 = vpack.c.bf16 %v1414, %v1414
        %v1431 = vpack.c.bf16 %v1415, %v1415
        %1434 = vrot.lane.b32.xlu0 %v765, 124
        %v1435 = vpop.permute.xlu0 %1434
        %1436 = vrot.lane.b32.xlu0 %v768, 124
        %v1437 = vpop.permute.xlu0 %1436
        %1440 = vrot.lane.b32.xlu0 %v765, 120
        %v1441 = vpop.permute.xlu0 %1440
        %1442 = vrot.lane.b32.xlu0 %v768, 120
        %v1443 = vpop.permute.xlu0 %1442
        %1446 = vrot.lane.b32.xlu0 %v765, 116
        %v1447 = vpop.permute.xlu0 %1446
        %1448 = vrot.lane.b32.xlu0 %v768, 116
        %v1449 = vpop.permute.xlu0 %1448
        %1452 = vrot.lane.b32.xlu0 %v765, 112
        %v1453 = vpop.permute.xlu0 %1452
        %1454 = vrot.lane.b32.xlu0 %v768, 112
        %v1455 = vpop.permute.xlu0 %1454
        %1458 = vrot.lane.b32.xlu0 %v765, 108
        %v1459 = vpop.permute.xlu0 %1458
        %1460 = vrot.lane.b32.xlu0 %v768, 108
        %v1461 = vpop.permute.xlu0 %1460
        %1464 = vrot.lane.b32.xlu0 %v765, 104
        %v1465 = vpop.permute.xlu0 %1464
        %1466 = vrot.lane.b32.xlu0 %v768, 104
        %v1467 = vpop.permute.xlu0 %1466
        %1470 = vrot.lane.b32.xlu0 %v765, 100
        %v1471 = vpop.permute.xlu0 %1470
        %1472 = vrot.lane.b32.xlu0 %v768, 100
        %v1473 = vpop.permute.xlu0 %1472
        %v1476 = vcombine.low %v765, %v1441
        %v1477 = vcombine.high %v765, %v1441
        %v1479 = vunpack.c.l.s4 1983009808
        %v1480 = vunpack.c.0.s8 %v1479
        %v1481 = vlaneseq
        %v1482 = vshrl.u32 %v1481, 7
        %v1483 = vsub.s32 %v1480, %v1482
        %v1484 = vrot.slane %v1476, %v1483
        %v1486 = vunpack.c.l.s4 1983009808
        %v1487 = vunpack.c.0.s8 %v1486
        %v1488 = vlaneseq
        %v1489 = vshrl.u32 %v1488, 7
        %v1490 = vsub.s32 %v1487, %v1489
        %v1491 = vrot.slane %v1477, %v1490
        %v1492 = vcombine.low %v1435, %v1447
        %v1493 = vcombine.high %v1435, %v1447
        %v1495 = vunpack.c.l.s4 1983009808
        %v1496 = vunpack.c.0.s8 %v1495
        %v1497 = vlaneseq
        %v1498 = vshrl.u32 %v1497, 7
        %v1499 = vsub.s32 %v1496, %v1498
        %v1500 = vrot.slane %v1492, %v1499
        %v1502 = vunpack.c.l.s4 1983009808
        %v1503 = vunpack.c.0.s8 %v1502
        %v1504 = vlaneseq
        %v1505 = vshrl.u32 %v1504, 7
        %v1506 = vsub.s32 %v1503, %v1505
        %v1507 = vrot.slane %v1493, %v1506
        %v1508 = vcombine.low %v1453, %v1465
        %v1509 = vcombine.high %v1453, %v1465
        %v1511 = vunpack.c.l.s4 1983009808
        %v1512 = vunpack.c.0.s8 %v1511
        %v1513 = vlaneseq
        %v1514 = vshrl.u32 %v1513, 7
        %v1515 = vsub.s32 %v1512, %v1514
        %v1516 = vrot.slane %v1508, %v1515
        %v1518 = vunpack.c.l.s4 1983009808
        %v1519 = vunpack.c.0.s8 %v1518
        %v1520 = vlaneseq
        %v1521 = vshrl.u32 %v1520, 7
        %v1522 = vsub.s32 %v1519, %v1521
        %v1523 = vrot.slane %v1509, %v1522
        %v1524 = vcombine.low %v1459, %v1471
        %v1525 = vcombine.high %v1459, %v1471
        %v1527 = vunpack.c.l.s4 1983009808
        %v1528 = vunpack.c.0.s8 %v1527
        %v1529 = vlaneseq
        %v1530 = vshrl.u32 %v1529, 7
        %v1531 = vsub.s32 %v1528, %v1530
        %v1532 = vrot.slane %v1524, %v1531
        %v1534 = vunpack.c.l.s4 1983009808
        %v1535 = vunpack.c.0.s8 %v1534
        %v1536 = vlaneseq
        %v1537 = vshrl.u32 %v1536, 7
        %v1538 = vsub.s32 %v1535, %v1537
        %v1539 = vrot.slane %v1525, %v1538
        %v1540 = vcombine.low %v1484, %v1500
        %v1541 = vcombine.high %v1484, %v1500
        %v1543 = vunpack.c.l.s4 1934713408
        %v1544 = vunpack.c.0.s8 %v1543
        %v1545 = vlaneseq
        %v1546 = vshrl.u32 %v1545, 7
        %v1547 = vsub.s32 %v1544, %v1546
        %v1548 = vrot.slane %v1540, %v1547
        %v1550 = vunpack.c.l.s4 1934713408
        %v1551 = vunpack.c.0.s8 %v1550
        %v1552 = vlaneseq
        %v1553 = vshrl.u32 %v1552, 7
        %v1554 = vsub.s32 %v1551, %v1553
        %v1555 = vrot.slane %v1541, %v1554
        %v1556 = vcombine.low %v1491, %v1507
        %v1557 = vcombine.high %v1491, %v1507
        %v1559 = vunpack.c.l.s4 1934713408
        %v1560 = vunpack.c.0.s8 %v1559
        %v1561 = vlaneseq
        %v1562 = vshrl.u32 %v1561, 7
        %v1563 = vsub.s32 %v1560, %v1562
        %v1564 = vrot.slane %v1556, %v1563
        %v1566 = vunpack.c.l.s4 1934713408
        %v1567 = vunpack.c.0.s8 %v1566
        %v1568 = vlaneseq
        %v1569 = vshrl.u32 %v1568, 7
        %v1570 = vsub.s32 %v1567, %v1569
        %v1571 = vrot.slane %v1557, %v1570
        %v1572 = vcombine.low %v1516, %v1532
        %v1573 = vcombine.high %v1516, %v1532
        %v1575 = vunpack.c.l.s4 1934713408
        %v1576 = vunpack.c.0.s8 %v1575
        %v1577 = vlaneseq
        %v1578 = vshrl.u32 %v1577, 7
        %v1579 = vsub.s32 %v1576, %v1578
        %v1580 = vrot.slane %v1572, %v1579
        %v1582 = vunpack.c.l.s4 1934713408
        %v1583 = vunpack.c.0.s8 %v1582
        %v1584 = vlaneseq
        %v1585 = vshrl.u32 %v1584, 7
        %v1586 = vsub.s32 %v1583, %v1585
        %v1587 = vrot.slane %v1573, %v1586
        %v1588 = vcombine.low %v1523, %v1539
        %v1589 = vcombine.high %v1523, %v1539
        %v1591 = vunpack.c.l.s4 1934713408
        %v1592 = vunpack.c.0.s8 %v1591
        %v1593 = vlaneseq
        %v1594 = vshrl.u32 %v1593, 7
        %v1595 = vsub.s32 %v1592, %v1594
        %v1596 = vrot.slane %v1588, %v1595
        %v1598 = vunpack.c.l.s4 1934713408
        %v1599 = vunpack.c.0.s8 %v1598
        %v1600 = vlaneseq
        %v1601 = vshrl.u32 %v1600, 7
        %v1602 = vsub.s32 %v1599, %v1601
        %v1603 = vrot.slane %v1589, %v1602
        %v1604 = vcombine.low %v1548, %v1580
        %v1605 = vcombine.high %v1548, %v1580
        %v1606 = vcombine.low %v1555, %v1587
        %v1607 = vcombine.high %v1555, %v1587
        %v1608 = vcombine.low %v1564, %v1596
        %v1609 = vcombine.high %v1564, %v1596
        %v1610 = vcombine.low %v1571, %v1603
        %v1611 = vcombine.high %v1571, %v1603
        %v1612 = vcombine.low %v768, %v1443
        %v1613 = vcombine.high %v768, %v1443
        %v1615 = vunpack.c.l.s4 1983009808
        %v1616 = vunpack.c.0.s8 %v1615
        %v1617 = vlaneseq
        %v1618 = vshrl.u32 %v1617, 7
        %v1619 = vsub.s32 %v1616, %v1618
        %v1620 = vrot.slane %v1612, %v1619
        %v1622 = vunpack.c.l.s4 1983009808
        %v1623 = vunpack.c.0.s8 %v1622
        %v1624 = vlaneseq
        %v1625 = vshrl.u32 %v1624, 7
        %v1626 = vsub.s32 %v1623, %v1625
        %v1627 = vrot.slane %v1613, %v1626
        %v1628 = vcombine.low %v1437, %v1449
        %v1629 = vcombine.high %v1437, %v1449
        %v1631 = vunpack.c.l.s4 1983009808
        %v1632 = vunpack.c.0.s8 %v1631
        %v1633 = vlaneseq
        %v1634 = vshrl.u32 %v1633, 7
        %v1635 = vsub.s32 %v1632, %v1634
        %v1636 = vrot.slane %v1628, %v1635
        %v1638 = vunpack.c.l.s4 1983009808
        %v1639 = vunpack.c.0.s8 %v1638
        %v1640 = vlaneseq
        %v1641 = vshrl.u32 %v1640, 7
        %v1642 = vsub.s32 %v1639, %v1641
        %v1643 = vrot.slane %v1629, %v1642
        %v1644 = vcombine.low %v1455, %v1467
        %v1645 = vcombine.high %v1455, %v1467
        %v1647 = vunpack.c.l.s4 1983009808
        %v1648 = vunpack.c.0.s8 %v1647
        %v1649 = vlaneseq
        %v1650 = vshrl.u32 %v1649, 7
        %v1651 = vsub.s32 %v1648, %v1650
        %v1652 = vrot.slane %v1644, %v1651
        %v1654 = vunpack.c.l.s4 1983009808
        %v1655 = vunpack.c.0.s8 %v1654
        %v1656 = vlaneseq
        %v1657 = vshrl.u32 %v1656, 7
        %v1658 = vsub.s32 %v1655, %v1657
        %v1659 = vrot.slane %v1645, %v1658
        %v1660 = vcombine.low %v1461, %v1473
        %v1661 = vcombine.high %v1461, %v1473
        %v1663 = vunpack.c.l.s4 1983009808
        %v1664 = vunpack.c.0.s8 %v1663
        %v1665 = vlaneseq
        %v1666 = vshrl.u32 %v1665, 7
        %v1667 = vsub.s32 %v1664, %v1666
        %v1668 = vrot.slane %v1660, %v1667
        %v1670 = vunpack.c.l.s4 1983009808
        %v1671 = vunpack.c.0.s8 %v1670
        %v1672 = vlaneseq
        %v1673 = vshrl.u32 %v1672, 7
        %v1674 = vsub.s32 %v1671, %v1673
        %v1675 = vrot.slane %v1661, %v1674
        %v1676 = vcombine.low %v1620, %v1636
        %v1677 = vcombine.high %v1620, %v1636
        %v1679 = vunpack.c.l.s4 1934713408
        %v1680 = vunpack.c.0.s8 %v1679
        %v1681 = vlaneseq
        %v1682 = vshrl.u32 %v1681, 7
        %v1683 = vsub.s32 %v1680, %v1682
        %v1684 = vrot.slane %v1676, %v1683
        %v1686 = vunpack.c.l.s4 1934713408
        %v1687 = vunpack.c.0.s8 %v1686
        %v1688 = vlaneseq
        %v1689 = vshrl.u32 %v1688, 7
        %v1690 = vsub.s32 %v1687, %v1689
        %v1691 = vrot.slane %v1677, %v1690
        %v1692 = vcombine.low %v1627, %v1643
        %v1693 = vcombine.high %v1627, %v1643
        %v1695 = vunpack.c.l.s4 1934713408
        %v1696 = vunpack.c.0.s8 %v1695
        %v1697 = vlaneseq
        %v1698 = vshrl.u32 %v1697, 7
        %v1699 = vsub.s32 %v1696, %v1698
        %v1700 = vrot.slane %v1692, %v1699
        %v1702 = vunpack.c.l.s4 1934713408
        %v1703 = vunpack.c.0.s8 %v1702
        %v1704 = vlaneseq
        %v1705 = vshrl.u32 %v1704, 7
        %v1706 = vsub.s32 %v1703, %v1705
        %v1707 = vrot.slane %v1693, %v1706
        %v1708 = vcombine.low %v1652, %v1668
        %v1709 = vcombine.high %v1652, %v1668
        %v1711 = vunpack.c.l.s4 1934713408
        %v1712 = vunpack.c.0.s8 %v1711
        %v1713 = vlaneseq
        %v1714 = vshrl.u32 %v1713, 7
        %v1715 = vsub.s32 %v1712, %v1714
        %v1716 = vrot.slane %v1708, %v1715
        %v1718 = vunpack.c.l.s4 1934713408
        %v1719 = vunpack.c.0.s8 %v1718
        %v1720 = vlaneseq
        %v1721 = vshrl.u32 %v1720, 7
        %v1722 = vsub.s32 %v1719, %v1721
        %v1723 = vrot.slane %v1709, %v1722
        %v1724 = vcombine.low %v1659, %v1675
        %v1725 = vcombine.high %v1659, %v1675
        %v1727 = vunpack.c.l.s4 1934713408
        %v1728 = vunpack.c.0.s8 %v1727
        %v1729 = vlaneseq
        %v1730 = vshrl.u32 %v1729, 7
        %v1731 = vsub.s32 %v1728, %v1730
        %v1732 = vrot.slane %v1724, %v1731
        %v1734 = vunpack.c.l.s4 1934713408
        %v1735 = vunpack.c.0.s8 %v1734
        %v1736 = vlaneseq
        %v1737 = vshrl.u32 %v1736, 7
        %v1738 = vsub.s32 %v1735, %v1737
        %v1739 = vrot.slane %v1725, %v1738
        %v1740 = vcombine.low %v1684, %v1716
        %v1741 = vcombine.high %v1684, %v1716
        %v1742 = vcombine.low %v1691, %v1723
        %v1743 = vcombine.high %v1691, %v1723
        %v1744 = vcombine.low %v1700, %v1732
        %v1745 = vcombine.high %v1700, %v1732
        %v1746 = vcombine.low %v1707, %v1739
        %v1747 = vcombine.high %v1707, %v1739
        %v1748 = vcombine.low %v1604, %v1606
        %v1749 = vcombine.high %v1604, %v1606
        %v1751 = vunpack.c.l.s4 1983009808
        %v1752 = vunpack.c.0.s8 %v1751
        %v1753 = vlaneseq
        %v1754 = vshrl.u32 %v1753, 7
        %v1755 = vsub.s32 %v1752, %v1754
        %v1756 = vrot.slane %v1748, %v1755
        %v1758 = vunpack.c.l.s4 1983009808
        %v1759 = vunpack.c.0.s8 %v1758
        %v1760 = vlaneseq
        %v1761 = vshrl.u32 %v1760, 7
        %v1762 = vsub.s32 %v1759, %v1761
        %v1763 = vrot.slane %v1749, %v1762
        %v1764 = vcombine.low %v1605, %v1607
        %v1765 = vcombine.high %v1605, %v1607
        %v1767 = vunpack.c.l.s4 1983009808
        %v1768 = vunpack.c.0.s8 %v1767
        %v1769 = vlaneseq
        %v1770 = vshrl.u32 %v1769, 7
        %v1771 = vsub.s32 %v1768, %v1770
        %v1772 = vrot.slane %v1764, %v1771
        %v1774 = vunpack.c.l.s4 1983009808
        %v1775 = vunpack.c.0.s8 %v1774
        %v1776 = vlaneseq
        %v1777 = vshrl.u32 %v1776, 7
        %v1778 = vsub.s32 %v1775, %v1777
        %v1779 = vrot.slane %v1765, %v1778
        %v1780 = vcombine.low %v1608, %v1610
        %v1781 = vcombine.high %v1608, %v1610
        %v1783 = vunpack.c.l.s4 1983009808
        %v1784 = vunpack.c.0.s8 %v1783
        %v1785 = vlaneseq
        %v1786 = vshrl.u32 %v1785, 7
        %v1787 = vsub.s32 %v1784, %v1786
        %v1788 = vrot.slane %v1780, %v1787
        %v1790 = vunpack.c.l.s4 1983009808
        %v1791 = vunpack.c.0.s8 %v1790
        %v1792 = vlaneseq
        %v1793 = vshrl.u32 %v1792, 7
        %v1794 = vsub.s32 %v1791, %v1793
        %v1795 = vrot.slane %v1781, %v1794
        %v1796 = vcombine.low %v1609, %v1611
        %v1797 = vcombine.high %v1609, %v1611
        %v1799 = vunpack.c.l.s4 1983009808
        %v1800 = vunpack.c.0.s8 %v1799
        %v1801 = vlaneseq
        %v1802 = vshrl.u32 %v1801, 7
        %v1803 = vsub.s32 %v1800, %v1802
        %v1804 = vrot.slane %v1796, %v1803
        %v1806 = vunpack.c.l.s4 1983009808
        %v1807 = vunpack.c.0.s8 %v1806
        %v1808 = vlaneseq
        %v1809 = vshrl.u32 %v1808, 7
        %v1810 = vsub.s32 %v1807, %v1809
        %v1811 = vrot.slane %v1797, %v1810
        %v1812 = vcombine.low %v1756, %v1772
        %v1813 = vcombine.high %v1756, %v1772
        %v1815 = vunpack.c.l.s4 1934713408
        %v1816 = vunpack.c.0.s8 %v1815
        %v1817 = vlaneseq
        %v1818 = vshrl.u32 %v1817, 7
        %v1819 = vsub.s32 %v1816, %v1818
        %v1820 = vrot.slane %v1812, %v1819
        %v1822 = vunpack.c.l.s4 1934713408
        %v1823 = vunpack.c.0.s8 %v1822
        %v1824 = vlaneseq
        %v1825 = vshrl.u32 %v1824, 7
        %v1826 = vsub.s32 %v1823, %v1825
        %v1827 = vrot.slane %v1813, %v1826
        %v1828 = vcombine.low %v1763, %v1779
        %v1829 = vcombine.high %v1763, %v1779
        %v1831 = vunpack.c.l.s4 1934713408
        %v1832 = vunpack.c.0.s8 %v1831
        %v1833 = vlaneseq
        %v1834 = vshrl.u32 %v1833, 7
        %v1835 = vsub.s32 %v1832, %v1834
        %v1836 = vrot.slane %v1828, %v1835
        %v1838 = vunpack.c.l.s4 1934713408
        %v1839 = vunpack.c.0.s8 %v1838
        %v1840 = vlaneseq
        %v1841 = vshrl.u32 %v1840, 7
        %v1842 = vsub.s32 %v1839, %v1841
        %v1843 = vrot.slane %v1829, %v1842
        %v1844 = vcombine.low %v1788, %v1804
        %v1845 = vcombine.high %v1788, %v1804
        %v1847 = vunpack.c.l.s4 1934713408
        %v1848 = vunpack.c.0.s8 %v1847
        %v1849 = vlaneseq
        %v1850 = vshrl.u32 %v1849, 7
        %v1851 = vsub.s32 %v1848, %v1850
        %v1852 = vrot.slane %v1844, %v1851
        %v1854 = vunpack.c.l.s4 1934713408
        %v1855 = vunpack.c.0.s8 %v1854
        %v1856 = vlaneseq
        %v1857 = vshrl.u32 %v1856, 7
        %v1858 = vsub.s32 %v1855, %v1857
        %v1859 = vrot.slane %v1845, %v1858
        %v1860 = vcombine.low %v1795, %v1811
        %v1861 = vcombine.high %v1795, %v1811
        %v1863 = vunpack.c.l.s4 1934713408
        %v1864 = vunpack.c.0.s8 %v1863
        %v1865 = vlaneseq
        %v1866 = vshrl.u32 %v1865, 7
        %v1867 = vsub.s32 %v1864, %v1866
        %v1868 = vrot.slane %v1860, %v1867
        %v1870 = vunpack.c.l.s4 1934713408
        %v1871 = vunpack.c.0.s8 %v1870
        %v1872 = vlaneseq
        %v1873 = vshrl.u32 %v1872, 7
        %v1874 = vsub.s32 %v1871, %v1873
        %v1875 = vrot.slane %v1861, %v1874
        %v1876 = vcombine.low %v1820, %v1852
        %v1877 = vcombine.high %v1820, %v1852
        %v1878 = vcombine.low %v1827, %v1859
        %v1879 = vcombine.high %v1827, %v1859
        %v1880 = vcombine.low %v1836, %v1868
        %v1881 = vcombine.high %v1836, %v1868
        %v1882 = vcombine.low %v1843, %v1875
        %v1883 = vcombine.high %v1843, %v1875
        %v1884 = vcombine.low %v1740, %v1742
        %v1885 = vcombine.high %v1740, %v1742
        %v1887 = vunpack.c.l.s4 1983009808
        %v1888 = vunpack.c.0.s8 %v1887
        %v1889 = vlaneseq
        %v1890 = vshrl.u32 %v1889, 7
        %v1891 = vsub.s32 %v1888, %v1890
        %v1892 = vrot.slane %v1884, %v1891
        %v1894 = vunpack.c.l.s4 1983009808
        %v1895 = vunpack.c.0.s8 %v1894
        %v1896 = vlaneseq
        %v1897 = vshrl.u32 %v1896, 7
        %v1898 = vsub.s32 %v1895, %v1897
        %v1899 = vrot.slane %v1885, %v1898
        %v1900 = vcombine.low %v1741, %v1743
        %v1901 = vcombine.high %v1741, %v1743
        %v1903 = vunpack.c.l.s4 1983009808
        %v1904 = vunpack.c.0.s8 %v1903
        %v1905 = vlaneseq
        %v1906 = vshrl.u32 %v1905, 7
        %v1907 = vsub.s32 %v1904, %v1906
        %v1908 = vrot.slane %v1900, %v1907
        %v1910 = vunpack.c.l.s4 1983009808
        %v1911 = vunpack.c.0.s8 %v1910
        %v1912 = vlaneseq
        %v1913 = vshrl.u32 %v1912, 7
        %v1914 = vsub.s32 %v1911, %v1913
        %v1915 = vrot.slane %v1901, %v1914
        %v1916 = vcombine.low %v1744, %v1746
        %v1917 = vcombine.high %v1744, %v1746
        %v1919 = vunpack.c.l.s4 1983009808
        %v1920 = vunpack.c.0.s8 %v1919
        %v1921 = vlaneseq
        %v1922 = vshrl.u32 %v1921, 7
        %v1923 = vsub.s32 %v1920, %v1922
        %v1924 = vrot.slane %v1916, %v1923
        %v1926 = vunpack.c.l.s4 1983009808
        %v1927 = vunpack.c.0.s8 %v1926
        %v1928 = vlaneseq
        %v1929 = vshrl.u32 %v1928, 7
        %v1930 = vsub.s32 %v1927, %v1929
        %v1931 = vrot.slane %v1917, %v1930
        %v1932 = vcombine.low %v1745, %v1747
        %v1933 = vcombine.high %v1745, %v1747
        %v1935 = vunpack.c.l.s4 1983009808
        %v1936 = vunpack.c.0.s8 %v1935
        %v1937 = vlaneseq
        %v1938 = vshrl.u32 %v1937, 7
        %v1939 = vsub.s32 %v1936, %v1938
        %v1940 = vrot.slane %v1932, %v1939
        %v1942 = vunpack.c.l.s4 1983009808
        %v1943 = vunpack.c.0.s8 %v1942
        %v1944 = vlaneseq
        %v1945 = vshrl.u32 %v1944, 7
        %v1946 = vsub.s32 %v1943, %v1945
        %v1947 = vrot.slane %v1933, %v1946
        %v1948 = vcombine.low %v1892, %v1908
        %v1949 = vcombine.high %v1892, %v1908
        %v1951 = vunpack.c.l.s4 1934713408
        %v1952 = vunpack.c.0.s8 %v1951
        %v1953 = vlaneseq
        %v1954 = vshrl.u32 %v1953, 7
        %v1955 = vsub.s32 %v1952, %v1954
        %v1956 = vrot.slane %v1948, %v1955
        %v1958 = vunpack.c.l.s4 1934713408
        %v1959 = vunpack.c.0.s8 %v1958
        %v1960 = vlaneseq
        %v1961 = vshrl.u32 %v1960, 7
        %v1962 = vsub.s32 %v1959, %v1961
        %v1963 = vrot.slane %v1949, %v1962
        %v1964 = vcombine.low %v1899, %v1915
        %v1965 = vcombine.high %v1899, %v1915
        %v1967 = vunpack.c.l.s4 1934713408
        %v1968 = vunpack.c.0.s8 %v1967
        %v1969 = vlaneseq
        %v1970 = vshrl.u32 %v1969, 7
        %v1971 = vsub.s32 %v1968, %v1970
        %v1972 = vrot.slane %v1964, %v1971
        %v1974 = vunpack.c.l.s4 1934713408
        %v1975 = vunpack.c.0.s8 %v1974
        %v1976 = vlaneseq
        %v1977 = vshrl.u32 %v1976, 7
        %v1978 = vsub.s32 %v1975, %v1977
        %v1979 = vrot.slane %v1965, %v1978
        %v1980 = vcombine.low %v1924, %v1940
        %v1981 = vcombine.high %v1924, %v1940
        %v1983 = vunpack.c.l.s4 1934713408
        %v1984 = vunpack.c.0.s8 %v1983
        %v1985 = vlaneseq
        %v1986 = vshrl.u32 %v1985, 7
        %v1987 = vsub.s32 %v1984, %v1986
        %v1988 = vrot.slane %v1980, %v1987
        %v1990 = vunpack.c.l.s4 1934713408
        %v1991 = vunpack.c.0.s8 %v1990
        %v1992 = vlaneseq
        %v1993 = vshrl.u32 %v1992, 7
        %v1994 = vsub.s32 %v1991, %v1993
        %v1995 = vrot.slane %v1981, %v1994
        %v1996 = vcombine.low %v1931, %v1947
        %v1997 = vcombine.high %v1931, %v1947
        %v1999 = vunpack.c.l.s4 1934713408
        %v2000 = vunpack.c.0.s8 %v1999
        %v2001 = vlaneseq
        %v2002 = vshrl.u32 %v2001, 7
        %v2003 = vsub.s32 %v2000, %v2002
        %v2004 = vrot.slane %v1996, %v2003
        %v2006 = vunpack.c.l.s4 1934713408
        %v2007 = vunpack.c.0.s8 %v2006
        %v2008 = vlaneseq
        %v2009 = vshrl.u32 %v2008, 7
        %v2010 = vsub.s32 %v2007, %v2009
        %v2011 = vrot.slane %v1997, %v2010
        %v2012 = vcombine.low %v1956, %v1988
        %v2013 = vcombine.high %v1956, %v1988
        %v2014 = vcombine.low %v1963, %v1995
        %v2015 = vcombine.high %v1963, %v1995
        %v2016 = vcombine.low %v1972, %v2004
        %v2017 = vcombine.high %v1972, %v2004
        %v2018 = vcombine.low %v1979, %v2011
        %v2019 = vcombine.high %v1979, %v2011
        %v2020 = vpack.c.bf16 %v1876, %v1876
        %v2021 = vpack.c.bf16 %v1877, %v1877
        %v2022 = vpack.c.bf16 %v1878, %v1878
        %v2023 = vpack.c.bf16 %v1879, %v1879
        %v2024 = vpack.c.bf16 %v1880, %v1880
        %v2025 = vpack.c.bf16 %v1881, %v1881
        %v2026 = vpack.c.bf16 %v1882, %v1882
        %v2027 = vpack.c.bf16 %v1883, %v1883
        %v2028 = vpack.c.bf16 %v2012, %v2012
        %v2029 = vpack.c.bf16 %v2013, %v2013
        %v2030 = vpack.c.bf16 %v2014, %v2014
        %v2031 = vpack.c.bf16 %v2015, %v2015
        %v2032 = vpack.c.bf16 %v2016, %v2016
        %v2033 = vpack.c.bf16 %v2017, %v2017
        %v2034 = vpack.c.bf16 %v2018, %v2018
        %v2035 = vpack.c.bf16 %v2019, %v2019
        %2038 = vrot.lane.b32.xlu0 %v822, 124
        %v2039 = vpop.permute.xlu0 %2038
        %2040 = vrot.lane.b32.xlu0 %v825, 124
        %v2041 = vpop.permute.xlu0 %2040
        %2044 = vrot.lane.b32.xlu0 %v822, 120
        %v2045 = vpop.permute.xlu0 %2044
        %2046 = vrot.lane.b32.xlu0 %v825, 120
        %v2047 = vpop.permute.xlu0 %2046
        %2050 = vrot.lane.b32.xlu0 %v822, 116
        %v2051 = vpop.permute.xlu0 %2050
        %2052 = vrot.lane.b32.xlu0 %v825, 116
        %v2053 = vpop.permute.xlu0 %2052
        %2056 = vrot.lane.b32.xlu0 %v822, 112
        %v2057 = vpop.permute.xlu0 %2056
        %2058 = vrot.lane.b32.xlu0 %v825, 112
        %v2059 = vpop.permute.xlu0 %2058
        %2062 = vrot.lane.b32.xlu0 %v822, 108
        %v2063 = vpop.permute.xlu0 %2062
        %2064 = vrot.lane.b32.xlu0 %v825, 108
        %v2065 = vpop.permute.xlu0 %2064
        %2068 = vrot.lane.b32.xlu0 %v822, 104
        %v2069 = vpop.permute.xlu0 %2068
        %2070 = vrot.lane.b32.xlu0 %v825, 104
        %v2071 = vpop.permute.xlu0 %2070
        %2074 = vrot.lane.b32.xlu0 %v822, 100
        %v2075 = vpop.permute.xlu0 %2074
        %2076 = vrot.lane.b32.xlu0 %v825, 100
        %v2077 = vpop.permute.xlu0 %2076
        %v2080 = vcombine.low %v822, %v2045
        %v2081 = vcombine.high %v822, %v2045
        %v2083 = vunpack.c.l.s4 1983009808
        %v2084 = vunpack.c.0.s8 %v2083
        %v2085 = vlaneseq
        %v2086 = vshrl.u32 %v2085, 7
        %v2087 = vsub.s32 %v2084, %v2086
        %v2088 = vrot.slane %v2080, %v2087
        %v2090 = vunpack.c.l.s4 1983009808
        %v2091 = vunpack.c.0.s8 %v2090
        %v2092 = vlaneseq
        %v2093 = vshrl.u32 %v2092, 7
        %v2094 = vsub.s32 %v2091, %v2093
        %v2095 = vrot.slane %v2081, %v2094
        %v2096 = vcombine.low %v2039, %v2051
        %v2097 = vcombine.high %v2039, %v2051
        %v2099 = vunpack.c.l.s4 1983009808
        %v2100 = vunpack.c.0.s8 %v2099
        %v2101 = vlaneseq
        %v2102 = vshrl.u32 %v2101, 7
        %v2103 = vsub.s32 %v2100, %v2102
        %v2104 = vrot.slane %v2096, %v2103
        %v2106 = vunpack.c.l.s4 1983009808
        %v2107 = vunpack.c.0.s8 %v2106
        %v2108 = vlaneseq
        %v2109 = vshrl.u32 %v2108, 7
        %v2110 = vsub.s32 %v2107, %v2109
        %v2111 = vrot.slane %v2097, %v2110
        %v2112 = vcombine.low %v2057, %v2069
        %v2113 = vcombine.high %v2057, %v2069
        %v2115 = vunpack.c.l.s4 1983009808
        %v2116 = vunpack.c.0.s8 %v2115
        %v2117 = vlaneseq
        %v2118 = vshrl.u32 %v2117, 7
        %v2119 = vsub.s32 %v2116, %v2118
        %v2120 = vrot.slane %v2112, %v2119
        %v2122 = vunpack.c.l.s4 1983009808
        %v2123 = vunpack.c.0.s8 %v2122
        %v2124 = vlaneseq
        %v2125 = vshrl.u32 %v2124, 7
        %v2126 = vsub.s32 %v2123, %v2125
        %v2127 = vrot.slane %v2113, %v2126
        %v2128 = vcombine.low %v2063, %v2075
        %v2129 = vcombine.high %v2063, %v2075
        %v2131 = vunpack.c.l.s4 1983009808
        %v2132 = vunpack.c.0.s8 %v2131
        %v2133 = vlaneseq
        %v2134 = vshrl.u32 %v2133, 7
        %v2135 = vsub.s32 %v2132, %v2134
        %v2136 = vrot.slane %v2128, %v2135
        %v2138 = vunpack.c.l.s4 1983009808
        %v2139 = vunpack.c.0.s8 %v2138
        %v2140 = vlaneseq
        %v2141 = vshrl.u32 %v2140, 7
        %v2142 = vsub.s32 %v2139, %v2141
        %v2143 = vrot.slane %v2129, %v2142
        %v2144 = vcombine.low %v2088, %v2104
        %v2145 = vcombine.high %v2088, %v2104
        %v2147 = vunpack.c.l.s4 1934713408
        %v2148 = vunpack.c.0.s8 %v2147
        %v2149 = vlaneseq
        %v2150 = vshrl.u32 %v2149, 7
        %v2151 = vsub.s32 %v2148, %v2150
        %v2152 = vrot.slane %v2144, %v2151
        %v2154 = vunpack.c.l.s4 1934713408
        %v2155 = vunpack.c.0.s8 %v2154
        %v2156 = vlaneseq
        %v2157 = vshrl.u32 %v2156, 7
        %v2158 = vsub.s32 %v2155, %v2157
        %v2159 = vrot.slane %v2145, %v2158
        %v2160 = vcombine.low %v2095, %v2111
        %v2161 = vcombine.high %v2095, %v2111
        %v2163 = vunpack.c.l.s4 1934713408
        %v2164 = vunpack.c.0.s8 %v2163
        %v2165 = vlaneseq
        %v2166 = vshrl.u32 %v2165, 7
        %v2167 = vsub.s32 %v2164, %v2166
        %v2168 = vrot.slane %v2160, %v2167
        %v2170 = vunpack.c.l.s4 1934713408
        %v2171 = vunpack.c.0.s8 %v2170
        %v2172 = vlaneseq
        %v2173 = vshrl.u32 %v2172, 7
        %v2174 = vsub.s32 %v2171, %v2173
        %v2175 = vrot.slane %v2161, %v2174
        %v2176 = vcombine.low %v2120, %v2136
        %v2177 = vcombine.high %v2120, %v2136
        %v2179 = vunpack.c.l.s4 1934713408
        %v2180 = vunpack.c.0.s8 %v2179
        %v2181 = vlaneseq
        %v2182 = vshrl.u32 %v2181, 7
        %v2183 = vsub.s32 %v2180, %v2182
        %v2184 = vrot.slane %v2176, %v2183
        %v2186 = vunpack.c.l.s4 1934713408
        %v2187 = vunpack.c.0.s8 %v2186
        %v2188 = vlaneseq
        %v2189 = vshrl.u32 %v2188, 7
        %v2190 = vsub.s32 %v2187, %v2189
        %v2191 = vrot.slane %v2177, %v2190
        %v2192 = vcombine.low %v2127, %v2143
        %v2193 = vcombine.high %v2127, %v2143
        %v2195 = vunpack.c.l.s4 1934713408
        %v2196 = vunpack.c.0.s8 %v2195
        %v2197 = vlaneseq
        %v2198 = vshrl.u32 %v2197, 7
        %v2199 = vsub.s32 %v2196, %v2198
        %v2200 = vrot.slane %v2192, %v2199
        %v2202 = vunpack.c.l.s4 1934713408
        %v2203 = vunpack.c.0.s8 %v2202
        %v2204 = vlaneseq
        %v2205 = vshrl.u32 %v2204, 7
        %v2206 = vsub.s32 %v2203, %v2205
        %v2207 = vrot.slane %v2193, %v2206
        %v2208 = vcombine.low %v2152, %v2184
        %v2209 = vcombine.high %v2152, %v2184
        %v2210 = vcombine.low %v2159, %v2191
        %v2211 = vcombine.high %v2159, %v2191
        %v2212 = vcombine.low %v2168, %v2200
        %v2213 = vcombine.high %v2168, %v2200
        %v2214 = vcombine.low %v2175, %v2207
        %v2215 = vcombine.high %v2175, %v2207
        %v2216 = vcombine.low %v825, %v2047
        %v2217 = vcombine.high %v825, %v2047
        %v2219 = vunpack.c.l.s4 1983009808
        %v2220 = vunpack.c.0.s8 %v2219
        %v2221 = vlaneseq
        %v2222 = vshrl.u32 %v2221, 7
        %v2223 = vsub.s32 %v2220, %v2222
        %v2224 = vrot.slane %v2216, %v2223
        %v2226 = vunpack.c.l.s4 1983009808
        %v2227 = vunpack.c.0.s8 %v2226
        %v2228 = vlaneseq
        %v2229 = vshrl.u32 %v2228, 7
        %v2230 = vsub.s32 %v2227, %v2229
        %v2231 = vrot.slane %v2217, %v2230
        %v2232 = vcombine.low %v2041, %v2053
        %v2233 = vcombine.high %v2041, %v2053
        %v2235 = vunpack.c.l.s4 1983009808
        %v2236 = vunpack.c.0.s8 %v2235
        %v2237 = vlaneseq
        %v2238 = vshrl.u32 %v2237, 7
        %v2239 = vsub.s32 %v2236, %v2238
        %v2240 = vrot.slane %v2232, %v2239
        %v2242 = vunpack.c.l.s4 1983009808
        %v2243 = vunpack.c.0.s8 %v2242
        %v2244 = vlaneseq
        %v2245 = vshrl.u32 %v2244, 7
        %v2246 = vsub.s32 %v2243, %v2245
        %v2247 = vrot.slane %v2233, %v2246
        %v2248 = vcombine.low %v2059, %v2071
        %v2249 = vcombine.high %v2059, %v2071
        %v2251 = vunpack.c.l.s4 1983009808
        %v2252 = vunpack.c.0.s8 %v2251
        %v2253 = vlaneseq
        %v2254 = vshrl.u32 %v2253, 7
        %v2255 = vsub.s32 %v2252, %v2254
        %v2256 = vrot.slane %v2248, %v2255
        %v2258 = vunpack.c.l.s4 1983009808
        %v2259 = vunpack.c.0.s8 %v2258
        %v2260 = vlaneseq
        %v2261 = vshrl.u32 %v2260, 7
        %v2262 = vsub.s32 %v2259, %v2261
        %v2263 = vrot.slane %v2249, %v2262
        %v2264 = vcombine.low %v2065, %v2077
        %v2265 = vcombine.high %v2065, %v2077
        %v2267 = vunpack.c.l.s4 1983009808
        %v2268 = vunpack.c.0.s8 %v2267
        %v2269 = vlaneseq
        %v2270 = vshrl.u32 %v2269, 7
        %v2271 = vsub.s32 %v2268, %v2270
        %v2272 = vrot.slane %v2264, %v2271
        %v2274 = vunpack.c.l.s4 1983009808
        %v2275 = vunpack.c.0.s8 %v2274
        %v2276 = vlaneseq
        %v2277 = vshrl.u32 %v2276, 7
        %v2278 = vsub.s32 %v2275, %v2277
        %v2279 = vrot.slane %v2265, %v2278
        %v2280 = vcombine.low %v2224, %v2240
        %v2281 = vcombine.high %v2224, %v2240
        %v2283 = vunpack.c.l.s4 1934713408
        %v2284 = vunpack.c.0.s8 %v2283
        %v2285 = vlaneseq
        %v2286 = vshrl.u32 %v2285, 7
        %v2287 = vsub.s32 %v2284, %v2286
        %v2288 = vrot.slane %v2280, %v2287
        %v2290 = vunpack.c.l.s4 1934713408
        %v2291 = vunpack.c.0.s8 %v2290
        %v2292 = vlaneseq
        %v2293 = vshrl.u32 %v2292, 7
        %v2294 = vsub.s32 %v2291, %v2293
        %v2295 = vrot.slane %v2281, %v2294
        %v2296 = vcombine.low %v2231, %v2247
        %v2297 = vcombine.high %v2231, %v2247
        %v2299 = vunpack.c.l.s4 1934713408
        %v2300 = vunpack.c.0.s8 %v2299
        %v2301 = vlaneseq
        %v2302 = vshrl.u32 %v2301, 7
        %v2303 = vsub.s32 %v2300, %v2302
        %v2304 = vrot.slane %v2296, %v2303
        %v2306 = vunpack.c.l.s4 1934713408
        %v2307 = vunpack.c.0.s8 %v2306
        %v2308 = vlaneseq
        %v2309 = vshrl.u32 %v2308, 7
        %v2310 = vsub.s32 %v2307, %v2309
        %v2311 = vrot.slane %v2297, %v2310
        %v2312 = vcombine.low %v2256, %v2272
        %v2313 = vcombine.high %v2256, %v2272
        %v2315 = vunpack.c.l.s4 1934713408
        %v2316 = vunpack.c.0.s8 %v2315
        %v2317 = vlaneseq
        %v2318 = vshrl.u32 %v2317, 7
        %v2319 = vsub.s32 %v2316, %v2318
        %v2320 = vrot.slane %v2312, %v2319
        %v2322 = vunpack.c.l.s4 1934713408
        %v2323 = vunpack.c.0.s8 %v2322
        %v2324 = vlaneseq
        %v2325 = vshrl.u32 %v2324, 7
        %v2326 = vsub.s32 %v2323, %v2325
        %v2327 = vrot.slane %v2313, %v2326
        %v2328 = vcombine.low %v2263, %v2279
        %v2329 = vcombine.high %v2263, %v2279
        %v2331 = vunpack.c.l.s4 1934713408
        %v2332 = vunpack.c.0.s8 %v2331
        %v2333 = vlaneseq
        %v2334 = vshrl.u32 %v2333, 7
        %v2335 = vsub.s32 %v2332, %v2334
        %v2336 = vrot.slane %v2328, %v2335
        %v2338 = vunpack.c.l.s4 1934713408
        %v2339 = vunpack.c.0.s8 %v2338
        %v2340 = vlaneseq
        %v2341 = vshrl.u32 %v2340, 7
        %v2342 = vsub.s32 %v2339, %v2341
        %v2343 = vrot.slane %v2329, %v2342
        %v2344 = vcombine.low %v2288, %v2320
        %v2345 = vcombine.high %v2288, %v2320
        %v2346 = vcombine.low %v2295, %v2327
        %v2347 = vcombine.high %v2295, %v2327
        %v2348 = vcombine.low %v2304, %v2336
        %v2349 = vcombine.high %v2304, %v2336
        %v2350 = vcombine.low %v2311, %v2343
        %v2351 = vcombine.high %v2311, %v2343
        %v2352 = vcombine.low %v2208, %v2210
        %v2353 = vcombine.high %v2208, %v2210
        %v2355 = vunpack.c.l.s4 1983009808
        %v2356 = vunpack.c.0.s8 %v2355
        %v2357 = vlaneseq
        %v2358 = vshrl.u32 %v2357, 7
        %v2359 = vsub.s32 %v2356, %v2358
        %v2360 = vrot.slane %v2352, %v2359
        %v2362 = vunpack.c.l.s4 1983009808
        %v2363 = vunpack.c.0.s8 %v2362
        %v2364 = vlaneseq
        %v2365 = vshrl.u32 %v2364, 7
        %v2366 = vsub.s32 %v2363, %v2365
        %v2367 = vrot.slane %v2353, %v2366
        %v2368 = vcombine.low %v2209, %v2211
        %v2369 = vcombine.high %v2209, %v2211
        %v2371 = vunpack.c.l.s4 1983009808
        %v2372 = vunpack.c.0.s8 %v2371
        %v2373 = vlaneseq
        %v2374 = vshrl.u32 %v2373, 7
        %v2375 = vsub.s32 %v2372, %v2374
        %v2376 = vrot.slane %v2368, %v2375
        %v2378 = vunpack.c.l.s4 1983009808
        %v2379 = vunpack.c.0.s8 %v2378
        %v2380 = vlaneseq
        %v2381 = vshrl.u32 %v2380, 7
        %v2382 = vsub.s32 %v2379, %v2381
        %v2383 = vrot.slane %v2369, %v2382
        %v2384 = vcombine.low %v2212, %v2214
        %v2385 = vcombine.high %v2212, %v2214
        %v2387 = vunpack.c.l.s4 1983009808
        %v2388 = vunpack.c.0.s8 %v2387
        %v2389 = vlaneseq
        %v2390 = vshrl.u32 %v2389, 7
        %v2391 = vsub.s32 %v2388, %v2390
        %v2392 = vrot.slane %v2384, %v2391
        %v2394 = vunpack.c.l.s4 1983009808
        %v2395 = vunpack.c.0.s8 %v2394
        %v2396 = vlaneseq
        %v2397 = vshrl.u32 %v2396, 7
        %v2398 = vsub.s32 %v2395, %v2397
        %v2399 = vrot.slane %v2385, %v2398
        %v2400 = vcombine.low %v2213, %v2215
        %v2401 = vcombine.high %v2213, %v2215
        %v2403 = vunpack.c.l.s4 1983009808
        %v2404 = vunpack.c.0.s8 %v2403
        %v2405 = vlaneseq
        %v2406 = vshrl.u32 %v2405, 7
        %v2407 = vsub.s32 %v2404, %v2406
        %v2408 = vrot.slane %v2400, %v2407
        %v2410 = vunpack.c.l.s4 1983009808
        %v2411 = vunpack.c.0.s8 %v2410
        %v2412 = vlaneseq
        %v2413 = vshrl.u32 %v2412, 7
        %v2414 = vsub.s32 %v2411, %v2413
        %v2415 = vrot.slane %v2401, %v2414
        %v2416 = vcombine.low %v2360, %v2376
        %v2417 = vcombine.high %v2360, %v2376
        %v2419 = vunpack.c.l.s4 1934713408
        %v2420 = vunpack.c.0.s8 %v2419
        %v2421 = vlaneseq
        %v2422 = vshrl.u32 %v2421, 7
        %v2423 = vsub.s32 %v2420, %v2422
        %v2424 = vrot.slane %v2416, %v2423
        %v2426 = vunpack.c.l.s4 1934713408
        %v2427 = vunpack.c.0.s8 %v2426
        %v2428 = vlaneseq
        %v2429 = vshrl.u32 %v2428, 7
        %v2430 = vsub.s32 %v2427, %v2429
        %v2431 = vrot.slane %v2417, %v2430
        %v2432 = vcombine.low %v2367, %v2383
        %v2433 = vcombine.high %v2367, %v2383
        %v2435 = vunpack.c.l.s4 1934713408
        %v2436 = vunpack.c.0.s8 %v2435
        %v2437 = vlaneseq
        %v2438 = vshrl.u32 %v2437, 7
        %v2439 = vsub.s32 %v2436, %v2438
        %v2440 = vrot.slane %v2432, %v2439
        %v2442 = vunpack.c.l.s4 1934713408
        %v2443 = vunpack.c.0.s8 %v2442
        %v2444 = vlaneseq
        %v2445 = vshrl.u32 %v2444, 7
        %v2446 = vsub.s32 %v2443, %v2445
        %v2447 = vrot.slane %v2433, %v2446
        %v2448 = vcombine.low %v2392, %v2408
        %v2449 = vcombine.high %v2392, %v2408
        %v2451 = vunpack.c.l.s4 1934713408
        %v2452 = vunpack.c.0.s8 %v2451
        %v2453 = vlaneseq
        %v2454 = vshrl.u32 %v2453, 7
        %v2455 = vsub.s32 %v2452, %v2454
        %v2456 = vrot.slane %v2448, %v2455
        %v2458 = vunpack.c.l.s4 1934713408
        %v2459 = vunpack.c.0.s8 %v2458
        %v2460 = vlaneseq
        %v2461 = vshrl.u32 %v2460, 7
        %v2462 = vsub.s32 %v2459, %v2461
        %v2463 = vrot.slane %v2449, %v2462
        %v2464 = vcombine.low %v2399, %v2415
        %v2465 = vcombine.high %v2399, %v2415
        %v2467 = vunpack.c.l.s4 1934713408
        %v2468 = vunpack.c.0.s8 %v2467
        %v2469 = vlaneseq
        %v2470 = vshrl.u32 %v2469, 7
        %v2471 = vsub.s32 %v2468, %v2470
        %v2472 = vrot.slane %v2464, %v2471
        %v2474 = vunpack.c.l.s4 1934713408
        %v2475 = vunpack.c.0.s8 %v2474
        %v2476 = vlaneseq
        %v2477 = vshrl.u32 %v2476, 7
        %v2478 = vsub.s32 %v2475, %v2477
        %v2479 = vrot.slane %v2465, %v2478
        %v2480 = vcombine.low %v2424, %v2456
        %v2481 = vcombine.high %v2424, %v2456
        %v2482 = vcombine.low %v2431, %v2463
        %v2483 = vcombine.high %v2431, %v2463
        %v2484 = vcombine.low %v2440, %v2472
        %v2485 = vcombine.high %v2440, %v2472
        %v2486 = vcombine.low %v2447, %v2479
        %v2487 = vcombine.high %v2447, %v2479
        %v2488 = vcombine.low %v2344, %v2346
        %v2489 = vcombine.high %v2344, %v2346
        %v2491 = vunpack.c.l.s4 1983009808
        %v2492 = vunpack.c.0.s8 %v2491
        %v2493 = vlaneseq
        %v2494 = vshrl.u32 %v2493, 7
        %v2495 = vsub.s32 %v2492, %v2494
        %v2496 = vrot.slane %v2488, %v2495
        %v2498 = vunpack.c.l.s4 1983009808
        %v2499 = vunpack.c.0.s8 %v2498
        %v2500 = vlaneseq
        %v2501 = vshrl.u32 %v2500, 7
        %v2502 = vsub.s32 %v2499, %v2501
        %v2503 = vrot.slane %v2489, %v2502
        %v2504 = vcombine.low %v2345, %v2347
        %v2505 = vcombine.high %v2345, %v2347
        %v2507 = vunpack.c.l.s4 1983009808
        %v2508 = vunpack.c.0.s8 %v2507
        %v2509 = vlaneseq
        %v2510 = vshrl.u32 %v2509, 7
        %v2511 = vsub.s32 %v2508, %v2510
        %v2512 = vrot.slane %v2504, %v2511
        %v2514 = vunpack.c.l.s4 1983009808
        %v2515 = vunpack.c.0.s8 %v2514
        %v2516 = vlaneseq
        %v2517 = vshrl.u32 %v2516, 7
        %v2518 = vsub.s32 %v2515, %v2517
        %v2519 = vrot.slane %v2505, %v2518
        %v2520 = vcombine.low %v2348, %v2350
        %v2521 = vcombine.high %v2348, %v2350
        %v2523 = vunpack.c.l.s4 1983009808
        %v2524 = vunpack.c.0.s8 %v2523
        %v2525 = vlaneseq
        %v2526 = vshrl.u32 %v2525, 7
        %v2527 = vsub.s32 %v2524, %v2526
        %v2528 = vrot.slane %v2520, %v2527
        %v2530 = vunpack.c.l.s4 1983009808
        %v2531 = vunpack.c.0.s8 %v2530
        %v2532 = vlaneseq
        %v2533 = vshrl.u32 %v2532, 7
        %v2534 = vsub.s32 %v2531, %v2533
        %v2535 = vrot.slane %v2521, %v2534
        %v2536 = vcombine.low %v2349, %v2351
        %v2537 = vcombine.high %v2349, %v2351
        %v2539 = vunpack.c.l.s4 1983009808
        %v2540 = vunpack.c.0.s8 %v2539
        %v2541 = vlaneseq
        %v2542 = vshrl.u32 %v2541, 7
        %v2543 = vsub.s32 %v2540, %v2542
        %v2544 = vrot.slane %v2536, %v2543
        %v2546 = vunpack.c.l.s4 1983009808
        %v2547 = vunpack.c.0.s8 %v2546
        %v2548 = vlaneseq
        %v2549 = vshrl.u32 %v2548, 7
        %v2550 = vsub.s32 %v2547, %v2549
        %v2551 = vrot.slane %v2537, %v2550
        %v2552 = vcombine.low %v2496, %v2512
        %v2553 = vcombine.high %v2496, %v2512
        %v2555 = vunpack.c.l.s4 1934713408
        %v2556 = vunpack.c.0.s8 %v2555
        %v2557 = vlaneseq
        %v2558 = vshrl.u32 %v2557, 7
        %v2559 = vsub.s32 %v2556, %v2558
        %v2560 = vrot.slane %v2552, %v2559
        %v2562 = vunpack.c.l.s4 1934713408
        %v2563 = vunpack.c.0.s8 %v2562
        %v2564 = vlaneseq
        %v2565 = vshrl.u32 %v2564, 7
        %v2566 = vsub.s32 %v2563, %v2565
        %v2567 = vrot.slane %v2553, %v2566
        %v2568 = vcombine.low %v2503, %v2519
        %v2569 = vcombine.high %v2503, %v2519
        %v2571 = vunpack.c.l.s4 1934713408
        %v2572 = vunpack.c.0.s8 %v2571
        %v2573 = vlaneseq
        %v2574 = vshrl.u32 %v2573, 7
        %v2575 = vsub.s32 %v2572, %v2574
        %v2576 = vrot.slane %v2568, %v2575
        %v2578 = vunpack.c.l.s4 1934713408
        %v2579 = vunpack.c.0.s8 %v2578
        %v2580 = vlaneseq
        %v2581 = vshrl.u32 %v2580, 7
        %v2582 = vsub.s32 %v2579, %v2581
        %v2583 = vrot.slane %v2569, %v2582
        %v2584 = vcombine.low %v2528, %v2544
        %v2585 = vcombine.high %v2528, %v2544
        %v2587 = vunpack.c.l.s4 1934713408
        %v2588 = vunpack.c.0.s8 %v2587
        %v2589 = vlaneseq
        %v2590 = vshrl.u32 %v2589, 7
        %v2591 = vsub.s32 %v2588, %v2590
        %v2592 = vrot.slane %v2584, %v2591
        %v2594 = vunpack.c.l.s4 1934713408
        %v2595 = vunpack.c.0.s8 %v2594
        %v2596 = vlaneseq
        %v2597 = vshrl.u32 %v2596, 7
        %v2598 = vsub.s32 %v2595, %v2597
        %v2599 = vrot.slane %v2585, %v2598
        %v2600 = vcombine.low %v2535, %v2551
        %v2601 = vcombine.high %v2535, %v2551
        %v2603 = vunpack.c.l.s4 1934713408
        %v2604 = vunpack.c.0.s8 %v2603
        %v2605 = vlaneseq
        %v2606 = vshrl.u32 %v2605, 7
        %v2607 = vsub.s32 %v2604, %v2606
        %v2608 = vrot.slane %v2600, %v2607
        %v2610 = vunpack.c.l.s4 1934713408
        %v2611 = vunpack.c.0.s8 %v2610
        %v2612 = vlaneseq
        %v2613 = vshrl.u32 %v2612, 7
        %v2614 = vsub.s32 %v2611, %v2613
        %v2615 = vrot.slane %v2601, %v2614
        %v2616 = vcombine.low %v2560, %v2592
        %v2617 = vcombine.high %v2560, %v2592
        %v2618 = vcombine.low %v2567, %v2599
        %v2619 = vcombine.high %v2567, %v2599
        %v2620 = vcombine.low %v2576, %v2608
        %v2621 = vcombine.high %v2576, %v2608
        %v2622 = vcombine.low %v2583, %v2615
        %v2623 = vcombine.high %v2583, %v2615
        %v2624 = vpack.c.bf16 %v2480, %v2480
        %v2625 = vpack.c.bf16 %v2481, %v2481
        %v2626 = vpack.c.bf16 %v2482, %v2482
        %v2627 = vpack.c.bf16 %v2483, %v2483
        %v2628 = vpack.c.bf16 %v2484, %v2484
        %v2629 = vpack.c.bf16 %v2485, %v2485
        %v2630 = vpack.c.bf16 %v2486, %v2486
        %v2631 = vpack.c.bf16 %v2487, %v2487
        %v2632 = vpack.c.bf16 %v2616, %v2616
        %v2633 = vpack.c.bf16 %v2617, %v2617
        %v2634 = vpack.c.bf16 %v2618, %v2618
        %v2635 = vpack.c.bf16 %v2619, %v2619
        %v2636 = vpack.c.bf16 %v2620, %v2620
        %v2637 = vpack.c.bf16 %v2621, %v2621
        %v2638 = vpack.c.bf16 %v2622, %v2622
        %v2639 = vpack.c.bf16 %v2623, %v2623
        %vm2640 = vcmask 31744
        %v2642 = vsel %vm2640, %v1416, 0
        %v2645 = vsel %vm2640, %v2020, 0
        %2647 = vmatprep.subr.bf16.mxu0 0
        %2648 = vmatpush1.bf16.xpose.msra.mxu0 %v2645
        %2649 = vmatprep.subr.bf16.mxu0 0
        %2650 = vmatpush1.bf16.xpose.msra.mxu0 0
        %2651 = vmatprep.subr.bf16.mxu0 0
        %2652 = vmatpush1.bf16.xpose.msra.mxu0 0
        %2653 = vmatprep.subr.bf16.mxu0 0
        %2654 = vmatpush1.bf16.xpose.msra.mxu0 0
        %2655 = vmatprep.subr.bf16.mxu0 0
        %2656 = vmatpush1.bf16.xpose.msra.mxu0 0
        %2657 = vmatprep.subr.bf16.mxu0 0
        %2658 = vmatpush1.bf16.xpose.msra.mxu0 0
        %2659 = vmatprep.subr.bf16.mxu0 0
        %2660 = vmatpush1.bf16.xpose.msra.mxu0 0
        %2661 = vmatprep.subr.bf16.mxu0 0
        %2662 = vmatpush1.bf16.xpose.msra.mxu0 0
        %2663 = vmatprep.subr.bf16.mxu0 0
        %2664 = vmatpush1.bf16.xpose.msra.mxu0 0
        %2665 = vmatprep.subr.bf16.mxu0 0
        %2666 = vmatpush1.bf16.xpose.msra.mxu0 0
        %2667 = vmatprep.subr.bf16.mxu0 0
        %2668 = vmatpush1.bf16.xpose.msra.mxu0 0
        %2669 = vmatprep.subr.bf16.mxu0 0
        %2670 = vmatpush1.bf16.xpose.msra.mxu0 0
        %2671 = vmatprep.subr.bf16.mxu0 0
        %2672 = vmatpush1.bf16.xpose.msra.mxu0 0
        %2673 = vmatprep.subr.bf16.mxu0 0
        %2674 = vmatpush1.bf16.xpose.msra.mxu0 0
        %2675 = vmatprep.subr.bf16.mxu0 0
        %2676 = vmatpush1.bf16.xpose.msra.mxu0 0
        %2677 = vmatprep.subr.bf16.mxu0 0
        %2678 = vmatpush1.bf16.xpose.msra.mxu0 0
        %2679 = vmatprep.mubr.bf16.mxu0 0
        %2680 = vmatmul.mubr.bf16.gmra.mrb[0].mxu0 %v2642
        %v2681 = vpop.f32.mrb[0].mxu0
        %v2682 = vadd.f32 0.0, %v2681
        %v2683 = vpop.f32.mrb[0].mxu0
        %v2684 = vpop.f32.mrb[0].mxu0
        %v2685 = vpop.f32.mrb[0].mxu0
        %2686 = vdwg.mxu0
        %v2688 = vsel %vm2640, %v1417, 0
        %v2691 = vsel %vm2640, %v2021, 0
        %2693 = vmatprep.subr.bf16.mxu0 0
        %2694 = vmatpush1.bf16.xpose.msra.mxu0 %v2691
        %2695 = vmatprep.subr.bf16.mxu0 0
        %2696 = vmatpush1.bf16.xpose.msra.mxu0 0
        %2697 = vmatprep.subr.bf16.mxu0 0
        %2698 = vmatpush1.bf16.xpose.msra.mxu0 0
        %2699 = vmatprep.subr.bf16.mxu0 0
        %2700 = vmatpush1.bf16.xpose.msra.mxu0 0
        %2701 = vmatprep.subr.bf16.mxu0 0
        %2702 = vmatpush1.bf16.xpose.msra.mxu0 0
        %2703 = vmatprep.subr.bf16.mxu0 0
        %2704 = vmatpush1.bf16.xpose.msra.mxu0 0
        %2705 = vmatprep.subr.bf16.mxu0 0
        %2706 = vmatpush1.bf16.xpose.msra.mxu0 0
        %2707 = vmatprep.subr.bf16.mxu0 0
        %2708 = vmatpush1.bf16.xpose.msra.mxu0 0
        %2709 = vmatprep.subr.bf16.mxu0 0
        %2710 = vmatpush1.bf16.xpose.msra.mxu0 0
        %2711 = vmatprep.subr.bf16.mxu0 0
        %2712 = vmatpush1.bf16.xpose.msra.mxu0 0
        %2713 = vmatprep.subr.bf16.mxu0 0
        %2714 = vmatpush1.bf16.xpose.msra.mxu0 0
        %2715 = vmatprep.subr.bf16.mxu0 0
        %2716 = vmatpush1.bf16.xpose.msra.mxu0 0
        %2717 = vmatprep.subr.bf16.mxu0 0
        %2718 = vmatpush1.bf16.xpose.msra.mxu0 0
        %2719 = vmatprep.subr.bf16.mxu0 0
        %2720 = vmatpush1.bf16.xpose.msra.mxu0 0
        %2721 = vmatprep.subr.bf16.mxu0 0
        %2722 = vmatpush1.bf16.xpose.msra.mxu0 0
        %2723 = vmatprep.subr.bf16.mxu0 0
        %2724 = vmatpush1.bf16.xpose.msra.mxu0 0
        %2725 = vmatprep.mubr.bf16.mxu0 0
        %2726 = vmatmul.mubr.bf16.gmra.mrb[0].mxu0 %v2688
        %v2727 = vpop.f32.mrb[0].mxu0
        %v2728 = vadd.f32 0.0, %v2727
        %v2729 = vpop.f32.mrb[0].mxu0
        %v2730 = vpop.f32.mrb[0].mxu0
        %v2731 = vpop.f32.mrb[0].mxu0
        %2732 = vdwg.mxu0
        %v2734 = vsel %vm2640, %v1418, 0
        %v2737 = vsel %vm2640, %v2022, 0
        %2739 = vmatprep.subr.bf16.mxu0 0
        %2740 = vmatpush1.bf16.xpose.msra.mxu0 %v2737
        %2741 = vmatprep.subr.bf16.mxu0 0
        %2742 = vmatpush1.bf16.xpose.msra.mxu0 0
        %2743 = vmatprep.subr.bf16.mxu0 0
        %2744 = vmatpush1.bf16.xpose.msra.mxu0 0
        %2745 = vmatprep.subr.bf16.mxu0 0
        %2746 = vmatpush1.bf16.xpose.msra.mxu0 0
        %2747 = vmatprep.subr.bf16.mxu0 0
        %2748 = vmatpush1.bf16.xpose.msra.mxu0 0
        %2749 = vmatprep.subr.bf16.mxu0 0
        %2750 = vmatpush1.bf16.xpose.msra.mxu0 0
        %2751 = vmatprep.subr.bf16.mxu0 0
        %2752 = vmatpush1.bf16.xpose.msra.mxu0 0
        %2753 = vmatprep.subr.bf16.mxu0 0
        %2754 = vmatpush1.bf16.xpose.msra.mxu0 0
        %2755 = vmatprep.subr.bf16.mxu0 0
        %2756 = vmatpush1.bf16.xpose.msra.mxu0 0
        %2757 = vmatprep.subr.bf16.mxu0 0
        %2758 = vmatpush1.bf16.xpose.msra.mxu0 0
        %2759 = vmatprep.subr.bf16.mxu0 0
        %2760 = vmatpush1.bf16.xpose.msra.mxu0 0
        %2761 = vmatprep.subr.bf16.mxu0 0
        %2762 = vmatpush1.bf16.xpose.msra.mxu0 0
        %2763 = vmatprep.subr.bf16.mxu0 0
        %2764 = vmatpush1.bf16.xpose.msra.mxu0 0
        %2765 = vmatprep.subr.bf16.mxu0 0
        %2766 = vmatpush1.bf16.xpose.msra.mxu0 0
        %2767 = vmatprep.subr.bf16.mxu0 0
        %2768 = vmatpush1.bf16.xpose.msra.mxu0 0
        %2769 = vmatprep.subr.bf16.mxu0 0
        %2770 = vmatpush1.bf16.xpose.msra.mxu0 0
        %2771 = vmatprep.mubr.bf16.mxu0 0
        %2772 = vmatmul.mubr.bf16.gmra.mrb[0].mxu0 %v2734
        %v2773 = vpop.f32.mrb[0].mxu0
        %v2774 = vadd.f32 0.0, %v2773
        %v2775 = vpop.f32.mrb[0].mxu0
        %v2776 = vpop.f32.mrb[0].mxu0
        %v2777 = vpop.f32.mrb[0].mxu0
        %2778 = vdwg.mxu0
        %v2780 = vsel %vm2640, %v1419, 0
        %v2783 = vsel %vm2640, %v2023, 0
        %2785 = vmatprep.subr.bf16.mxu0 0
        %2786 = vmatpush1.bf16.xpose.msra.mxu0 %v2783
        %2787 = vmatprep.subr.bf16.mxu0 0
        %2788 = vmatpush1.bf16.xpose.msra.mxu0 0
        %2789 = vmatprep.subr.bf16.mxu0 0
        %2790 = vmatpush1.bf16.xpose.msra.mxu0 0
        %2791 = vmatprep.subr.bf16.mxu0 0
        %2792 = vmatpush1.bf16.xpose.msra.mxu0 0
        %2793 = vmatprep.subr.bf16.mxu0 0
        %2794 = vmatpush1.bf16.xpose.msra.mxu0 0
        %2795 = vmatprep.subr.bf16.mxu0 0
        %2796 = vmatpush1.bf16.xpose.msra.mxu0 0
        %2797 = vmatprep.subr.bf16.mxu0 0
        %2798 = vmatpush1.bf16.xpose.msra.mxu0 0
        %2799 = vmatprep.subr.bf16.mxu0 0
        %2800 = vmatpush1.bf16.xpose.msra.mxu0 0
        %2801 = vmatprep.subr.bf16.mxu0 0
        %2802 = vmatpush1.bf16.xpose.msra.mxu0 0
        %2803 = vmatprep.subr.bf16.mxu0 0
        %2804 = vmatpush1.bf16.xpose.msra.mxu0 0
        %2805 = vmatprep.subr.bf16.mxu0 0
        %2806 = vmatpush1.bf16.xpose.msra.mxu0 0
        %2807 = vmatprep.subr.bf16.mxu0 0
        %2808 = vmatpush1.bf16.xpose.msra.mxu0 0
        %2809 = vmatprep.subr.bf16.mxu0 0
        %2810 = vmatpush1.bf16.xpose.msra.mxu0 0
        %2811 = vmatprep.subr.bf16.mxu0 0
        %2812 = vmatpush1.bf16.xpose.msra.mxu0 0
        %2813 = vmatprep.subr.bf16.mxu0 0
        %2814 = vmatpush1.bf16.xpose.msra.mxu0 0
        %2815 = vmatprep.subr.bf16.mxu0 0
        %2816 = vmatpush1.bf16.xpose.msra.mxu0 0
        %2817 = vmatprep.mubr.bf16.mxu0 0
        %2818 = vmatmul.mubr.bf16.gmra.mrb[0].mxu0 %v2780
        %v2819 = vpop.f32.mrb[0].mxu0
        %v2820 = vadd.f32 0.0, %v2819
        %v2821 = vpop.f32.mrb[0].mxu0
        %v2822 = vpop.f32.mrb[0].mxu0
        %v2823 = vpop.f32.mrb[0].mxu0
        %2824 = vdwg.mxu0
        %v2826 = vsel %vm2640, %v1420, 0
        %v2829 = vsel %vm2640, %v2024, 0
        %2831 = vmatprep.subr.bf16.mxu0 0
        %2832 = vmatpush1.bf16.xpose.msra.mxu0 %v2829
        %2833 = vmatprep.subr.bf16.mxu0 0
        %2834 = vmatpush1.bf16.xpose.msra.mxu0 0
        %2835 = vmatprep.subr.bf16.mxu0 0
        %2836 = vmatpush1.bf16.xpose.msra.mxu0 0
        %2837 = vmatprep.subr.bf16.mxu0 0
        %2838 = vmatpush1.bf16.xpose.msra.mxu0 0
        %2839 = vmatprep.subr.bf16.mxu0 0
        %2840 = vmatpush1.bf16.xpose.msra.mxu0 0
        %2841 = vmatprep.subr.bf16.mxu0 0
        %2842 = vmatpush1.bf16.xpose.msra.mxu0 0
        %2843 = vmatprep.subr.bf16.mxu0 0
        %2844 = vmatpush1.bf16.xpose.msra.mxu0 0
        %2845 = vmatprep.subr.bf16.mxu0 0
        %2846 = vmatpush1.bf16.xpose.msra.mxu0 0
        %2847 = vmatprep.subr.bf16.mxu0 0
        %2848 = vmatpush1.bf16.xpose.msra.mxu0 0
        %2849 = vmatprep.subr.bf16.mxu0 0
        %2850 = vmatpush1.bf16.xpose.msra.mxu0 0
        %2851 = vmatprep.subr.bf16.mxu0 0
        %2852 = vmatpush1.bf16.xpose.msra.mxu0 0
        %2853 = vmatprep.subr.bf16.mxu0 0
        %2854 = vmatpush1.bf16.xpose.msra.mxu0 0
        %2855 = vmatprep.subr.bf16.mxu0 0
        %2856 = vmatpush1.bf16.xpose.msra.mxu0 0
        %2857 = vmatprep.subr.bf16.mxu0 0
        %2858 = vmatpush1.bf16.xpose.msra.mxu0 0
        %2859 = vmatprep.subr.bf16.mxu0 0
        %2860 = vmatpush1.bf16.xpose.msra.mxu0 0
        %2861 = vmatprep.subr.bf16.mxu0 0
        %2862 = vmatpush1.bf16.xpose.msra.mxu0 0
        %2863 = vmatprep.mubr.bf16.mxu0 0
        %2864 = vmatmul.mubr.bf16.gmra.mrb[0].mxu0 %v2826
        %v2865 = vpop.f32.mrb[0].mxu0
        %v2866 = vadd.f32 0.0, %v2865
        %v2867 = vpop.f32.mrb[0].mxu0
        %v2868 = vpop.f32.mrb[0].mxu0
        %v2869 = vpop.f32.mrb[0].mxu0
        %2870 = vdwg.mxu0
        %v2872 = vsel %vm2640, %v1421, 0
        %v2875 = vsel %vm2640, %v2025, 0
        %2877 = vmatprep.subr.bf16.mxu0 0
        %2878 = vmatpush1.bf16.xpose.msra.mxu0 %v2875
        %2879 = vmatprep.subr.bf16.mxu0 0
        %2880 = vmatpush1.bf16.xpose.msra.mxu0 0
        %2881 = vmatprep.subr.bf16.mxu0 0
        %2882 = vmatpush1.bf16.xpose.msra.mxu0 0
        %2883 = vmatprep.subr.bf16.mxu0 0
        %2884 = vmatpush1.bf16.xpose.msra.mxu0 0
        %2885 = vmatprep.subr.bf16.mxu0 0
        %2886 = vmatpush1.bf16.xpose.msra.mxu0 0
        %2887 = vmatprep.subr.bf16.mxu0 0
        %2888 = vmatpush1.bf16.xpose.msra.mxu0 0
        %2889 = vmatprep.subr.bf16.mxu0 0
        %2890 = vmatpush1.bf16.xpose.msra.mxu0 0
        %2891 = vmatprep.subr.bf16.mxu0 0
        %2892 = vmatpush1.bf16.xpose.msra.mxu0 0
        %2893 = vmatprep.subr.bf16.mxu0 0
        %2894 = vmatpush1.bf16.xpose.msra.mxu0 0
        %2895 = vmatprep.subr.bf16.mxu0 0
        %2896 = vmatpush1.bf16.xpose.msra.mxu0 0
        %2897 = vmatprep.subr.bf16.mxu0 0
        %2898 = vmatpush1.bf16.xpose.msra.mxu0 0
        %2899 = vmatprep.subr.bf16.mxu0 0
        %2900 = vmatpush1.bf16.xpose.msra.mxu0 0
        %2901 = vmatprep.subr.bf16.mxu0 0
        %2902 = vmatpush1.bf16.xpose.msra.mxu0 0
        %2903 = vmatprep.subr.bf16.mxu0 0
        %2904 = vmatpush1.bf16.xpose.msra.mxu0 0
        %2905 = vmatprep.subr.bf16.mxu0 0
        %2906 = vmatpush1.bf16.xpose.msra.mxu0 0
        %2907 = vmatprep.subr.bf16.mxu0 0
        %2908 = vmatpush1.bf16.xpose.msra.mxu0 0
        %2909 = vmatprep.mubr.bf16.mxu0 0
        %2910 = vmatmul.mubr.bf16.gmra.mrb[0].mxu0 %v2872
        %v2911 = vpop.f32.mrb[0].mxu0
        %v2912 = vadd.f32 0.0, %v2911
        %v2913 = vpop.f32.mrb[0].mxu0
        %v2914 = vpop.f32.mrb[0].mxu0
        %v2915 = vpop.f32.mrb[0].mxu0
        %2916 = vdwg.mxu0
        %v2918 = vsel %vm2640, %v1422, 0
        %v2921 = vsel %vm2640, %v2026, 0
        %2923 = vmatprep.subr.bf16.mxu0 0
        %2924 = vmatpush1.bf16.xpose.msra.mxu0 %v2921
        %2925 = vmatprep.subr.bf16.mxu0 0
        %2926 = vmatpush1.bf16.xpose.msra.mxu0 0
        %2927 = vmatprep.subr.bf16.mxu0 0
        %2928 = vmatpush1.bf16.xpose.msra.mxu0 0
        %2929 = vmatprep.subr.bf16.mxu0 0
        %2930 = vmatpush1.bf16.xpose.msra.mxu0 0
        %2931 = vmatprep.subr.bf16.mxu0 0
        %2932 = vmatpush1.bf16.xpose.msra.mxu0 0
        %2933 = vmatprep.subr.bf16.mxu0 0
        %2934 = vmatpush1.bf16.xpose.msra.mxu0 0
        %2935 = vmatprep.subr.bf16.mxu0 0
        %2936 = vmatpush1.bf16.xpose.msra.mxu0 0
        %2937 = vmatprep.subr.bf16.mxu0 0
        %2938 = vmatpush1.bf16.xpose.msra.mxu0 0
        %2939 = vmatprep.subr.bf16.mxu0 0
        %2940 = vmatpush1.bf16.xpose.msra.mxu0 0
        %2941 = vmatprep.subr.bf16.mxu0 0
        %2942 = vmatpush1.bf16.xpose.msra.mxu0 0
        %2943 = vmatprep.subr.bf16.mxu0 0
        %2944 = vmatpush1.bf16.xpose.msra.mxu0 0
        %2945 = vmatprep.subr.bf16.mxu0 0
        %2946 = vmatpush1.bf16.xpose.msra.mxu0 0
        %2947 = vmatprep.subr.bf16.mxu0 0
        %2948 = vmatpush1.bf16.xpose.msra.mxu0 0
        %2949 = vmatprep.subr.bf16.mxu0 0
        %2950 = vmatpush1.bf16.xpose.msra.mxu0 0
        %2951 = vmatprep.subr.bf16.mxu0 0
        %2952 = vmatpush1.bf16.xpose.msra.mxu0 0
        %2953 = vmatprep.subr.bf16.mxu0 0
        %2954 = vmatpush1.bf16.xpose.msra.mxu0 0
        %2955 = vmatprep.mubr.bf16.mxu0 0
        %2956 = vmatmul.mubr.bf16.gmra.mrb[0].mxu0 %v2918
        %v2957 = vpop.f32.mrb[0].mxu0
        %v2958 = vadd.f32 0.0, %v2957
        %v2959 = vpop.f32.mrb[0].mxu0
        %v2960 = vpop.f32.mrb[0].mxu0
        %v2961 = vpop.f32.mrb[0].mxu0
        %2962 = vdwg.mxu0
        %v2964 = vsel %vm2640, %v1423, 0
        %v2967 = vsel %vm2640, %v2027, 0
        %2969 = vmatprep.subr.bf16.mxu0 0
        %2970 = vmatpush1.bf16.xpose.msra.mxu0 %v2967
        %2971 = vmatprep.subr.bf16.mxu0 0
        %2972 = vmatpush1.bf16.xpose.msra.mxu0 0
        %2973 = vmatprep.subr.bf16.mxu0 0
        %2974 = vmatpush1.bf16.xpose.msra.mxu0 0
        %2975 = vmatprep.subr.bf16.mxu0 0
        %2976 = vmatpush1.bf16.xpose.msra.mxu0 0
        %2977 = vmatprep.subr.bf16.mxu0 0
        %2978 = vmatpush1.bf16.xpose.msra.mxu0 0
        %2979 = vmatprep.subr.bf16.mxu0 0
        %2980 = vmatpush1.bf16.xpose.msra.mxu0 0
        %2981 = vmatprep.subr.bf16.mxu0 0
        %2982 = vmatpush1.bf16.xpose.msra.mxu0 0
        %2983 = vmatprep.subr.bf16.mxu0 0
        %2984 = vmatpush1.bf16.xpose.msra.mxu0 0
        %2985 = vmatprep.subr.bf16.mxu0 0
        %2986 = vmatpush1.bf16.xpose.msra.mxu0 0
        %2987 = vmatprep.subr.bf16.mxu0 0
        %2988 = vmatpush1.bf16.xpose.msra.mxu0 0
        %2989 = vmatprep.subr.bf16.mxu0 0
        %2990 = vmatpush1.bf16.xpose.msra.mxu0 0
        %2991 = vmatprep.subr.bf16.mxu0 0
        %2992 = vmatpush1.bf16.xpose.msra.mxu0 0
        %2993 = vmatprep.subr.bf16.mxu0 0
        %2994 = vmatpush1.bf16.xpose.msra.mxu0 0
        %2995 = vmatprep.subr.bf16.mxu0 0
        %2996 = vmatpush1.bf16.xpose.msra.mxu0 0
        %2997 = vmatprep.subr.bf16.mxu0 0
        %2998 = vmatpush1.bf16.xpose.msra.mxu0 0
        %2999 = vmatprep.subr.bf16.mxu0 0
        %3000 = vmatpush1.bf16.xpose.msra.mxu0 0
        %3001 = vmatprep.mubr.bf16.mxu0 0
        %3002 = vmatmul.mubr.bf16.gmra.mrb[0].mxu0 %v2964
        %v3003 = vpop.f32.mrb[0].mxu0
        %v3004 = vadd.f32 0.0, %v3003
        %v3005 = vpop.f32.mrb[0].mxu0
        %v3006 = vpop.f32.mrb[0].mxu0
        %v3007 = vpop.f32.mrb[0].mxu0
        %3008 = vdwg.mxu0
        %v3010 = vsel %vm2640, %v1424, 0
        %v3013 = vsel %vm2640, %v2028, 0
        %3015 = vmatprep.subr.bf16.mxu0 0
        %3016 = vmatpush1.bf16.xpose.msra.mxu0 %v3013
        %3017 = vmatprep.subr.bf16.mxu0 0
        %3018 = vmatpush1.bf16.xpose.msra.mxu0 0
        %3019 = vmatprep.subr.bf16.mxu0 0
        %3020 = vmatpush1.bf16.xpose.msra.mxu0 0
        %3021 = vmatprep.subr.bf16.mxu0 0
        %3022 = vmatpush1.bf16.xpose.msra.mxu0 0
        %3023 = vmatprep.subr.bf16.mxu0 0
        %3024 = vmatpush1.bf16.xpose.msra.mxu0 0
        %3025 = vmatprep.subr.bf16.mxu0 0
        %3026 = vmatpush1.bf16.xpose.msra.mxu0 0
        %3027 = vmatprep.subr.bf16.mxu0 0
        %3028 = vmatpush1.bf16.xpose.msra.mxu0 0
        %3029 = vmatprep.subr.bf16.mxu0 0
        %3030 = vmatpush1.bf16.xpose.msra.mxu0 0
        %3031 = vmatprep.subr.bf16.mxu0 0
        %3032 = vmatpush1.bf16.xpose.msra.mxu0 0
        %3033 = vmatprep.subr.bf16.mxu0 0
        %3034 = vmatpush1.bf16.xpose.msra.mxu0 0
        %3035 = vmatprep.subr.bf16.mxu0 0
        %3036 = vmatpush1.bf16.xpose.msra.mxu0 0
        %3037 = vmatprep.subr.bf16.mxu0 0
        %3038 = vmatpush1.bf16.xpose.msra.mxu0 0
        %3039 = vmatprep.subr.bf16.mxu0 0
        %3040 = vmatpush1.bf16.xpose.msra.mxu0 0
        %3041 = vmatprep.subr.bf16.mxu0 0
        %3042 = vmatpush1.bf16.xpose.msra.mxu0 0
        %3043 = vmatprep.subr.bf16.mxu0 0
        %3044 = vmatpush1.bf16.xpose.msra.mxu0 0
        %3045 = vmatprep.subr.bf16.mxu0 0
        %3046 = vmatpush1.bf16.xpose.msra.mxu0 0
        %3047 = vmatprep.mubr.bf16.mxu0 0
        %3048 = vmatmul.mubr.bf16.gmra.mrb[0].mxu0 %v3010
        %v3049 = vpop.f32.mrb[0].mxu0
        %v3050 = vadd.f32 0.0, %v3049
        %v3051 = vpop.f32.mrb[0].mxu0
        %v3052 = vpop.f32.mrb[0].mxu0
        %v3053 = vpop.f32.mrb[0].mxu0
        %3054 = vdwg.mxu0
        %v3056 = vsel %vm2640, %v1425, 0
        %v3059 = vsel %vm2640, %v2029, 0
        %3061 = vmatprep.subr.bf16.mxu0 0
        %3062 = vmatpush1.bf16.xpose.msra.mxu0 %v3059
        %3063 = vmatprep.subr.bf16.mxu0 0
        %3064 = vmatpush1.bf16.xpose.msra.mxu0 0
        %3065 = vmatprep.subr.bf16.mxu0 0
        %3066 = vmatpush1.bf16.xpose.msra.mxu0 0
        %3067 = vmatprep.subr.bf16.mxu0 0
        %3068 = vmatpush1.bf16.xpose.msra.mxu0 0
        %3069 = vmatprep.subr.bf16.mxu0 0
        %3070 = vmatpush1.bf16.xpose.msra.mxu0 0
        %3071 = vmatprep.subr.bf16.mxu0 0
        %3072 = vmatpush1.bf16.xpose.msra.mxu0 0
        %3073 = vmatprep.subr.bf16.mxu0 0
        %3074 = vmatpush1.bf16.xpose.msra.mxu0 0
        %3075 = vmatprep.subr.bf16.mxu0 0
        %3076 = vmatpush1.bf16.xpose.msra.mxu0 0
        %3077 = vmatprep.subr.bf16.mxu0 0
        %3078 = vmatpush1.bf16.xpose.msra.mxu0 0
        %3079 = vmatprep.subr.bf16.mxu0 0
        %3080 = vmatpush1.bf16.xpose.msra.mxu0 0
        %3081 = vmatprep.subr.bf16.mxu0 0
        %3082 = vmatpush1.bf16.xpose.msra.mxu0 0
        %3083 = vmatprep.subr.bf16.mxu0 0
        %3084 = vmatpush1.bf16.xpose.msra.mxu0 0
        %3085 = vmatprep.subr.bf16.mxu0 0
        %3086 = vmatpush1.bf16.xpose.msra.mxu0 0
        %3087 = vmatprep.subr.bf16.mxu0 0
        %3088 = vmatpush1.bf16.xpose.msra.mxu0 0
        %3089 = vmatprep.subr.bf16.mxu0 0
        %3090 = vmatpush1.bf16.xpose.msra.mxu0 0
        %3091 = vmatprep.subr.bf16.mxu0 0
        %3092 = vmatpush1.bf16.xpose.msra.mxu0 0
        %3093 = vmatprep.mubr.bf16.mxu0 0
        %3094 = vmatmul.mubr.bf16.gmra.mrb[0].mxu0 %v3056
        %v3095 = vpop.f32.mrb[0].mxu0
        %v3096 = vadd.f32 0.0, %v3095
        %v3097 = vpop.f32.mrb[0].mxu0
        %v3098 = vpop.f32.mrb[0].mxu0
        %v3099 = vpop.f32.mrb[0].mxu0
        %3100 = vdwg.mxu0
        %v3102 = vsel %vm2640, %v1426, 0
        %v3105 = vsel %vm2640, %v2030, 0
        %3107 = vmatprep.subr.bf16.mxu0 0
        %3108 = vmatpush1.bf16.xpose.msra.mxu0 %v3105
        %3109 = vmatprep.subr.bf16.mxu0 0
        %3110 = vmatpush1.bf16.xpose.msra.mxu0 0
        %3111 = vmatprep.subr.bf16.mxu0 0
        %3112 = vmatpush1.bf16.xpose.msra.mxu0 0
        %3113 = vmatprep.subr.bf16.mxu0 0
        %3114 = vmatpush1.bf16.xpose.msra.mxu0 0
        %3115 = vmatprep.subr.bf16.mxu0 0
        %3116 = vmatpush1.bf16.xpose.msra.mxu0 0
        %3117 = vmatprep.subr.bf16.mxu0 0
        %3118 = vmatpush1.bf16.xpose.msra.mxu0 0
        %3119 = vmatprep.subr.bf16.mxu0 0
        %3120 = vmatpush1.bf16.xpose.msra.mxu0 0
        %3121 = vmatprep.subr.bf16.mxu0 0
        %3122 = vmatpush1.bf16.xpose.msra.mxu0 0
        %3123 = vmatprep.subr.bf16.mxu0 0
        %3124 = vmatpush1.bf16.xpose.msra.mxu0 0
        %3125 = vmatprep.subr.bf16.mxu0 0
        %3126 = vmatpush1.bf16.xpose.msra.mxu0 0
        %3127 = vmatprep.subr.bf16.mxu0 0
        %3128 = vmatpush1.bf16.xpose.msra.mxu0 0
        %3129 = vmatprep.subr.bf16.mxu0 0
        %3130 = vmatpush1.bf16.xpose.msra.mxu0 0
        %3131 = vmatprep.subr.bf16.mxu0 0
        %3132 = vmatpush1.bf16.xpose.msra.mxu0 0
        %3133 = vmatprep.subr.bf16.mxu0 0
        %3134 = vmatpush1.bf16.xpose.msra.mxu0 0
        %3135 = vmatprep.subr.bf16.mxu0 0
        %3136 = vmatpush1.bf16.xpose.msra.mxu0 0
        %3137 = vmatprep.subr.bf16.mxu0 0
        %3138 = vmatpush1.bf16.xpose.msra.mxu0 0
        %3139 = vmatprep.mubr.bf16.mxu0 0
        %3140 = vmatmul.mubr.bf16.gmra.mrb[0].mxu0 %v3102
        %v3141 = vpop.f32.mrb[0].mxu0
        %v3142 = vadd.f32 0.0, %v3141
        %v3143 = vpop.f32.mrb[0].mxu0
        %v3144 = vpop.f32.mrb[0].mxu0
        %v3145 = vpop.f32.mrb[0].mxu0
        %3146 = vdwg.mxu0
        %v3148 = vsel %vm2640, %v1427, 0
        %v3151 = vsel %vm2640, %v2031, 0
        %3153 = vmatprep.subr.bf16.mxu0 0
        %3154 = vmatpush1.bf16.xpose.msra.mxu0 %v3151
        %3155 = vmatprep.subr.bf16.mxu0 0
        %3156 = vmatpush1.bf16.xpose.msra.mxu0 0
        %3157 = vmatprep.subr.bf16.mxu0 0
        %3158 = vmatpush1.bf16.xpose.msra.mxu0 0
        %3159 = vmatprep.subr.bf16.mxu0 0
        %3160 = vmatpush1.bf16.xpose.msra.mxu0 0
        %3161 = vmatprep.subr.bf16.mxu0 0
        %3162 = vmatpush1.bf16.xpose.msra.mxu0 0
        %3163 = vmatprep.subr.bf16.mxu0 0
        %3164 = vmatpush1.bf16.xpose.msra.mxu0 0
        %3165 = vmatprep.subr.bf16.mxu0 0
        %3166 = vmatpush1.bf16.xpose.msra.mxu0 0
        %3167 = vmatprep.subr.bf16.mxu0 0
        %3168 = vmatpush1.bf16.xpose.msra.mxu0 0
        %3169 = vmatprep.subr.bf16.mxu0 0
        %3170 = vmatpush1.bf16.xpose.msra.mxu0 0
        %3171 = vmatprep.subr.bf16.mxu0 0
        %3172 = vmatpush1.bf16.xpose.msra.mxu0 0
        %3173 = vmatprep.subr.bf16.mxu0 0
        %3174 = vmatpush1.bf16.xpose.msra.mxu0 0
        %3175 = vmatprep.subr.bf16.mxu0 0
        %3176 = vmatpush1.bf16.xpose.msra.mxu0 0
        %3177 = vmatprep.subr.bf16.mxu0 0
        %3178 = vmatpush1.bf16.xpose.msra.mxu0 0
        %3179 = vmatprep.subr.bf16.mxu0 0
        %3180 = vmatpush1.bf16.xpose.msra.mxu0 0
        %3181 = vmatprep.subr.bf16.mxu0 0
        %3182 = vmatpush1.bf16.xpose.msra.mxu0 0
        %3183 = vmatprep.subr.bf16.mxu0 0
        %3184 = vmatpush1.bf16.xpose.msra.mxu0 0
        %3185 = vmatprep.mubr.bf16.mxu0 0
        %3186 = vmatmul.mubr.bf16.gmra.mrb[0].mxu0 %v3148
        %v3187 = vpop.f32.mrb[0].mxu0
        %v3188 = vadd.f32 0.0, %v3187
        %v3189 = vpop.f32.mrb[0].mxu0
        %v3190 = vpop.f32.mrb[0].mxu0
        %v3191 = vpop.f32.mrb[0].mxu0
        %3192 = vdwg.mxu0
        %v3194 = vsel %vm2640, %v1428, 0
        %v3197 = vsel %vm2640, %v2032, 0
        %3199 = vmatprep.subr.bf16.mxu0 0
        %3200 = vmatpush1.bf16.xpose.msra.mxu0 %v3197
        %3201 = vmatprep.subr.bf16.mxu0 0
        %3202 = vmatpush1.bf16.xpose.msra.mxu0 0
        %3203 = vmatprep.subr.bf16.mxu0 0
        %3204 = vmatpush1.bf16.xpose.msra.mxu0 0
        %3205 = vmatprep.subr.bf16.mxu0 0
        %3206 = vmatpush1.bf16.xpose.msra.mxu0 0
        %3207 = vmatprep.subr.bf16.mxu0 0
        %3208 = vmatpush1.bf16.xpose.msra.mxu0 0
        %3209 = vmatprep.subr.bf16.mxu0 0
        %3210 = vmatpush1.bf16.xpose.msra.mxu0 0
        %3211 = vmatprep.subr.bf16.mxu0 0
        %3212 = vmatpush1.bf16.xpose.msra.mxu0 0
        %3213 = vmatprep.subr.bf16.mxu0 0
        %3214 = vmatpush1.bf16.xpose.msra.mxu0 0
        %3215 = vmatprep.subr.bf16.mxu0 0
        %3216 = vmatpush1.bf16.xpose.msra.mxu0 0
        %3217 = vmatprep.subr.bf16.mxu0 0
        %3218 = vmatpush1.bf16.xpose.msra.mxu0 0
        %3219 = vmatprep.subr.bf16.mxu0 0
        %3220 = vmatpush1.bf16.xpose.msra.mxu0 0
        %3221 = vmatprep.subr.bf16.mxu0 0
        %3222 = vmatpush1.bf16.xpose.msra.mxu0 0
        %3223 = vmatprep.subr.bf16.mxu0 0
        %3224 = vmatpush1.bf16.xpose.msra.mxu0 0
        %3225 = vmatprep.subr.bf16.mxu0 0
        %3226 = vmatpush1.bf16.xpose.msra.mxu0 0
        %3227 = vmatprep.subr.bf16.mxu0 0
        %3228 = vmatpush1.bf16.xpose.msra.mxu0 0
        %3229 = vmatprep.subr.bf16.mxu0 0
        %3230 = vmatpush1.bf16.xpose.msra.mxu0 0
        %3231 = vmatprep.mubr.bf16.mxu0 0
        %3232 = vmatmul.mubr.bf16.gmra.mrb[0].mxu0 %v3194
        %v3233 = vpop.f32.mrb[0].mxu0
        %v3234 = vadd.f32 0.0, %v3233
        %v3235 = vpop.f32.mrb[0].mxu0
        %v3236 = vpop.f32.mrb[0].mxu0
        %v3237 = vpop.f32.mrb[0].mxu0
        %3238 = vdwg.mxu0
        %v3240 = vsel %vm2640, %v1429, 0
        %v3243 = vsel %vm2640, %v2033, 0
        %3245 = vmatprep.subr.bf16.mxu0 0
        %3246 = vmatpush1.bf16.xpose.msra.mxu0 %v3243
        %3247 = vmatprep.subr.bf16.mxu0 0
        %3248 = vmatpush1.bf16.xpose.msra.mxu0 0
        %3249 = vmatprep.subr.bf16.mxu0 0
        %3250 = vmatpush1.bf16.xpose.msra.mxu0 0
        %3251 = vmatprep.subr.bf16.mxu0 0
        %3252 = vmatpush1.bf16.xpose.msra.mxu0 0
        %3253 = vmatprep.subr.bf16.mxu0 0
        %3254 = vmatpush1.bf16.xpose.msra.mxu0 0
        %3255 = vmatprep.subr.bf16.mxu0 0
        %3256 = vmatpush1.bf16.xpose.msra.mxu0 0
        %3257 = vmatprep.subr.bf16.mxu0 0
        %3258 = vmatpush1.bf16.xpose.msra.mxu0 0
        %3259 = vmatprep.subr.bf16.mxu0 0
        %3260 = vmatpush1.bf16.xpose.msra.mxu0 0
        %3261 = vmatprep.subr.bf16.mxu0 0
        %3262 = vmatpush1.bf16.xpose.msra.mxu0 0
        %3263 = vmatprep.subr.bf16.mxu0 0
        %3264 = vmatpush1.bf16.xpose.msra.mxu0 0
        %3265 = vmatprep.subr.bf16.mxu0 0
        %3266 = vmatpush1.bf16.xpose.msra.mxu0 0
        %3267 = vmatprep.subr.bf16.mxu0 0
        %3268 = vmatpush1.bf16.xpose.msra.mxu0 0
        %3269 = vmatprep.subr.bf16.mxu0 0
        %3270 = vmatpush1.bf16.xpose.msra.mxu0 0
        %3271 = vmatprep.subr.bf16.mxu0 0
        %3272 = vmatpush1.bf16.xpose.msra.mxu0 0
        %3273 = vmatprep.subr.bf16.mxu0 0
        %3274 = vmatpush1.bf16.xpose.msra.mxu0 0
        %3275 = vmatprep.subr.bf16.mxu0 0
        %3276 = vmatpush1.bf16.xpose.msra.mxu0 0
        %3277 = vmatprep.mubr.bf16.mxu0 0
        %3278 = vmatmul.mubr.bf16.gmra.mrb[0].mxu0 %v3240
        %v3279 = vpop.f32.mrb[0].mxu0
        %v3280 = vadd.f32 0.0, %v3279
        %v3281 = vpop.f32.mrb[0].mxu0
        %v3282 = vpop.f32.mrb[0].mxu0
        %v3283 = vpop.f32.mrb[0].mxu0
        %3284 = vdwg.mxu0
        %v3286 = vsel %vm2640, %v1430, 0
        %v3289 = vsel %vm2640, %v2034, 0
        %3291 = vmatprep.subr.bf16.mxu0 0
        %3292 = vmatpush1.bf16.xpose.msra.mxu0 %v3289
        %3293 = vmatprep.subr.bf16.mxu0 0
        %3294 = vmatpush1.bf16.xpose.msra.mxu0 0
        %3295 = vmatprep.subr.bf16.mxu0 0
        %3296 = vmatpush1.bf16.xpose.msra.mxu0 0
        %3297 = vmatprep.subr.bf16.mxu0 0
        %3298 = vmatpush1.bf16.xpose.msra.mxu0 0
        %3299 = vmatprep.subr.bf16.mxu0 0
        %3300 = vmatpush1.bf16.xpose.msra.mxu0 0
        %3301 = vmatprep.subr.bf16.mxu0 0
        %3302 = vmatpush1.bf16.xpose.msra.mxu0 0
        %3303 = vmatprep.subr.bf16.mxu0 0
        %3304 = vmatpush1.bf16.xpose.msra.mxu0 0
        %3305 = vmatprep.subr.bf16.mxu0 0
        %3306 = vmatpush1.bf16.xpose.msra.mxu0 0
        %3307 = vmatprep.subr.bf16.mxu0 0
        %3308 = vmatpush1.bf16.xpose.msra.mxu0 0
        %3309 = vmatprep.subr.bf16.mxu0 0
        %3310 = vmatpush1.bf16.xpose.msra.mxu0 0
        %3311 = vmatprep.subr.bf16.mxu0 0
        %3312 = vmatpush1.bf16.xpose.msra.mxu0 0
        %3313 = vmatprep.subr.bf16.mxu0 0
        %3314 = vmatpush1.bf16.xpose.msra.mxu0 0
        %3315 = vmatprep.subr.bf16.mxu0 0
        %3316 = vmatpush1.bf16.xpose.msra.mxu0 0
        %3317 = vmatprep.subr.bf16.mxu0 0
        %3318 = vmatpush1.bf16.xpose.msra.mxu0 0
        %3319 = vmatprep.subr.bf16.mxu0 0
        %3320 = vmatpush1.bf16.xpose.msra.mxu0 0
        %3321 = vmatprep.subr.bf16.mxu0 0
        %3322 = vmatpush1.bf16.xpose.msra.mxu0 0
        %3323 = vmatprep.mubr.bf16.mxu0 0
        %3324 = vmatmul.mubr.bf16.gmra.mrb[0].mxu0 %v3286
        %v3325 = vpop.f32.mrb[0].mxu0
        %v3326 = vadd.f32 0.0, %v3325
        %v3327 = vpop.f32.mrb[0].mxu0
        %v3328 = vpop.f32.mrb[0].mxu0
        %v3329 = vpop.f32.mrb[0].mxu0
        %3330 = vdwg.mxu0
        %v3332 = vsel %vm2640, %v1431, 0
        %v3335 = vsel %vm2640, %v2035, 0
        %3337 = vmatprep.subr.bf16.mxu0 0
        %3338 = vmatpush1.bf16.xpose.msra.mxu0 %v3335
        %3339 = vmatprep.subr.bf16.mxu0 0
        %3340 = vmatpush1.bf16.xpose.msra.mxu0 0
        %3341 = vmatprep.subr.bf16.mxu0 0
        %3342 = vmatpush1.bf16.xpose.msra.mxu0 0
        %3343 = vmatprep.subr.bf16.mxu0 0
        %3344 = vmatpush1.bf16.xpose.msra.mxu0 0
        %3345 = vmatprep.subr.bf16.mxu0 0
        %3346 = vmatpush1.bf16.xpose.msra.mxu0 0
        %3347 = vmatprep.subr.bf16.mxu0 0
        %3348 = vmatpush1.bf16.xpose.msra.mxu0 0
        %3349 = vmatprep.subr.bf16.mxu0 0
        %3350 = vmatpush1.bf16.xpose.msra.mxu0 0
        %3351 = vmatprep.subr.bf16.mxu0 0
        %3352 = vmatpush1.bf16.xpose.msra.mxu0 0
        %3353 = vmatprep.subr.bf16.mxu0 0
        %3354 = vmatpush1.bf16.xpose.msra.mxu0 0
        %3355 = vmatprep.subr.bf16.mxu0 0
        %3356 = vmatpush1.bf16.xpose.msra.mxu0 0
        %3357 = vmatprep.subr.bf16.mxu0 0
        %3358 = vmatpush1.bf16.xpose.msra.mxu0 0
        %3359 = vmatprep.subr.bf16.mxu0 0
        %3360 = vmatpush1.bf16.xpose.msra.mxu0 0
        %3361 = vmatprep.subr.bf16.mxu0 0
        %3362 = vmatpush1.bf16.xpose.msra.mxu0 0
        %3363 = vmatprep.subr.bf16.mxu0 0
        %3364 = vmatpush1.bf16.xpose.msra.mxu0 0
        %3365 = vmatprep.subr.bf16.mxu0 0
        %3366 = vmatpush1.bf16.xpose.msra.mxu0 0
        %3367 = vmatprep.subr.bf16.mxu0 0
        %3368 = vmatpush1.bf16.xpose.msra.mxu0 0
        %3369 = vmatprep.mubr.bf16.mxu0 0
        %3370 = vmatmul.mubr.bf16.gmra.mrb[0].mxu0 %v3332
        %v3371 = vpop.f32.mrb[0].mxu0
        %v3372 = vadd.f32 0.0, %v3371
        %v3373 = vpop.f32.mrb[0].mxu0
        %v3374 = vpop.f32.mrb[0].mxu0
        %v3375 = vpop.f32.mrb[0].mxu0
        %3376 = vdwg.mxu0
        %v3377 = vmul.f32 %v2682, 0.5
        %v3378 = vmul.f32 %v2728, 0.5
        %v3379 = vmul.f32 %v2774, 0.5
        %v3380 = vmul.f32 %v2820, 0.5
        %v3381 = vmul.f32 %v2866, 0.5
        %v3382 = vmul.f32 %v2912, 0.5
        %v3383 = vmul.f32 %v2958, 0.5
        %v3384 = vmul.f32 %v3004, 0.5
        %v3385 = vmul.f32 %v3050, 0.5
        %v3386 = vmul.f32 %v3096, 0.5
        %v3387 = vmul.f32 %v3142, 0.5
        %v3388 = vmul.f32 %v3188, 0.5
        %v3389 = vmul.f32 %v3234, 0.5
        %v3390 = vmul.f32 %v3280, 0.5
        %v3391 = vmul.f32 %v3326, 0.5
        %v3392 = vmul.f32 %v3372, 0.5
        %vm3393 = vcmask 64512
        %v3394 = vsel %vm3393, %v3377, -inf
        %3395 = vmax.xlane.f32.xlu0 %v3394
        %v3396 = vpop.xlane.xlu0 %3395
        %v3397 = vsel %vm3393, %v3378, -inf
        %3398 = vmax.xlane.f32.xlu0 %v3397
        %v3399 = vpop.xlane.xlu0 %3398
        %v3400 = vsel %vm3393, %v3379, -inf
        %3401 = vmax.xlane.f32.xlu0 %v3400
        %v3402 = vpop.xlane.xlu0 %3401
        %v3403 = vsel %vm3393, %v3380, -inf
        %3404 = vmax.xlane.f32.xlu0 %v3403
        %v3405 = vpop.xlane.xlu0 %3404
        %v3406 = vsel %vm3393, %v3381, -inf
        %3407 = vmax.xlane.f32.xlu0 %v3406
        %v3408 = vpop.xlane.xlu0 %3407
        %v3409 = vsel %vm3393, %v3382, -inf
        %3410 = vmax.xlane.f32.xlu0 %v3409
        %v3411 = vpop.xlane.xlu0 %3410
        %v3412 = vsel %vm3393, %v3383, -inf
        %3413 = vmax.xlane.f32.xlu0 %v3412
        %v3414 = vpop.xlane.xlu0 %3413
        %v3415 = vsel %vm3393, %v3384, -inf
        %3416 = vmax.xlane.f32.xlu0 %v3415
        %v3417 = vpop.xlane.xlu0 %3416
        %v3418 = vsel %vm3393, %v3385, -inf
        %3419 = vmax.xlane.f32.xlu0 %v3418
        %v3420 = vpop.xlane.xlu0 %3419
        %v3421 = vsel %vm3393, %v3386, -inf
        %3422 = vmax.xlane.f32.xlu0 %v3421
        %v3423 = vpop.xlane.xlu0 %3422
        %v3424 = vsel %vm3393, %v3387, -inf
        %3425 = vmax.xlane.f32.xlu0 %v3424
        %v3426 = vpop.xlane.xlu0 %3425
        %v3427 = vsel %vm3393, %v3388, -inf
        %3428 = vmax.xlane.f32.xlu0 %v3427
        %v3429 = vpop.xlane.xlu0 %3428
        %v3430 = vsel %vm3393, %v3389, -inf
        %3431 = vmax.xlane.f32.xlu0 %v3430
        %v3432 = vpop.xlane.xlu0 %3431
        %v3433 = vsel %vm3393, %v3390, -inf
        %3434 = vmax.xlane.f32.xlu0 %v3433
        %v3435 = vpop.xlane.xlu0 %3434
        %v3436 = vsel %vm3393, %v3391, -inf
        %3437 = vmax.xlane.f32.xlu0 %v3436
        %v3438 = vpop.xlane.xlu0 %3437
        %v3439 = vsel %vm3393, %v3392, -inf
        %3440 = vmax.xlane.f32.xlu0 %v3439
        %v3441 = vpop.xlane.xlu0 %3440
        %v3442 = vsub.f32 %v3377, %v3396
        %v3443 = vsub.f32 %v3378, %v3399
        %v3444 = vsub.f32 %v3379, %v3402
        %v3445 = vsub.f32 %v3380, %v3405
        %v3446 = vsub.f32 %v3381, %v3408
        %v3447 = vsub.f32 %v3382, %v3411
        %v3448 = vsub.f32 %v3383, %v3414
        %v3449 = vsub.f32 %v3384, %v3417
        %v3450 = vsub.f32 %v3385, %v3420
        %v3451 = vsub.f32 %v3386, %v3423
        %v3452 = vsub.f32 %v3387, %v3426
        %v3453 = vsub.f32 %v3388, %v3429
        %v3454 = vsub.f32 %v3389, %v3432
        %v3455 = vsub.f32 %v3390, %v3435
        %v3456 = vsub.f32 %v3391, %v3438
        %v3457 = vsub.f32 %v3392, %v3441
        %v3458 = vmul.f32 %v3442, 1.442695
        %v3459 = vpow.pop %v3458
        %v3460 = vmul.f32 %v3443, 1.442695
        %v3461 = vpow.pop %v3460
        %v3462 = vmul.f32 %v3444, 1.442695
        %v3463 = vpow.pop %v3462
        %v3464 = vmul.f32 %v3445, 1.442695
        %v3465 = vpow.pop %v3464
        %v3466 = vmul.f32 %v3446, 1.442695
        %v3467 = vpow.pop %v3466
        %v3468 = vmul.f32 %v3447, 1.442695
        %v3469 = vpow.pop %v3468
        %v3470 = vmul.f32 %v3448, 1.442695
        %v3471 = vpow.pop %v3470
        %v3472 = vmul.f32 %v3449, 1.442695
        %v3473 = vpow.pop %v3472
        %v3474 = vmul.f32 %v3450, 1.442695
        %v3475 = vpow.pop %v3474
        %v3476 = vmul.f32 %v3451, 1.442695
        %v3477 = vpow.pop %v3476
        %v3478 = vmul.f32 %v3452, 1.442695
        %v3479 = vpow.pop %v3478
        %v3480 = vmul.f32 %v3453, 1.442695
        %v3481 = vpow.pop %v3480
        %v3482 = vmul.f32 %v3454, 1.442695
        %v3483 = vpow.pop %v3482
        %v3484 = vmul.f32 %v3455, 1.442695
        %v3485 = vpow.pop %v3484
        %v3486 = vmul.f32 %v3456, 1.442695
        %v3487 = vpow.pop %v3486
        %v3488 = vmul.f32 %v3457, 1.442695
        %v3489 = vpow.pop %v3488
        %v3490 = vsel %vm3393, %v3459, 0.0
        %3491 = vadd.xlane.f32.xlu0 %v3490
        %v3492 = vpop.xlane.xlu0 %3491
        %v3493 = vsel %vm3393, %v3461, 0.0
        %3494 = vadd.xlane.f32.xlu0 %v3493
        %v3495 = vpop.xlane.xlu0 %3494
        %v3496 = vsel %vm3393, %v3463, 0.0
        %3497 = vadd.xlane.f32.xlu0 %v3496
        %v3498 = vpop.xlane.xlu0 %3497
        %v3499 = vsel %vm3393, %v3465, 0.0
        %3500 = vadd.xlane.f32.xlu0 %v3499
        %v3501 = vpop.xlane.xlu0 %3500
        %v3502 = vsel %vm3393, %v3467, 0.0
        %3503 = vadd.xlane.f32.xlu0 %v3502
        %v3504 = vpop.xlane.xlu0 %3503
        %v3505 = vsel %vm3393, %v3469, 0.0
        %3506 = vadd.xlane.f32.xlu0 %v3505
        %v3507 = vpop.xlane.xlu0 %3506
        %v3508 = vsel %vm3393, %v3471, 0.0
        %3509 = vadd.xlane.f32.xlu0 %v3508
        %v3510 = vpop.xlane.xlu0 %3509
        %v3511 = vsel %vm3393, %v3473, 0.0
        %3512 = vadd.xlane.f32.xlu0 %v3511
        %v3513 = vpop.xlane.xlu0 %3512
        %v3514 = vsel %vm3393, %v3475, 0.0
        %3515 = vadd.xlane.f32.xlu0 %v3514
        %v3516 = vpop.xlane.xlu0 %3515
        %v3517 = vsel %vm3393, %v3477, 0.0
        %3518 = vadd.xlane.f32.xlu0 %v3517
        %v3519 = vpop.xlane.xlu0 %3518
        %v3520 = vsel %vm3393, %v3479, 0.0
        %3521 = vadd.xlane.f32.xlu0 %v3520
        %v3522 = vpop.xlane.xlu0 %3521
        %v3523 = vsel %vm3393, %v3481, 0.0
        %3524 = vadd.xlane.f32.xlu0 %v3523
        %v3525 = vpop.xlane.xlu0 %3524
        %v3526 = vsel %vm3393, %v3483, 0.0
        %3527 = vadd.xlane.f32.xlu0 %v3526
        %v3528 = vpop.xlane.xlu0 %3527
        %v3529 = vsel %vm3393, %v3485, 0.0
        %3530 = vadd.xlane.f32.xlu0 %v3529
        %v3531 = vpop.xlane.xlu0 %3530
        %v3532 = vsel %vm3393, %v3487, 0.0
        %3533 = vadd.xlane.f32.xlu0 %v3532
        %v3534 = vpop.xlane.xlu0 %3533
        %v3535 = vsel %vm3393, %v3489, 0.0
        %3536 = vadd.xlane.f32.xlu0 %v3535
        %v3537 = vpop.xlane.xlu0 %3536
        %v3538 = vrcp.pop %v3492
        %v3539 = vmul.f32 %v3459, %v3538
        %v3540 = vrcp.pop %v3495
        %v3541 = vmul.f32 %v3461, %v3540
        %v3542 = vrcp.pop %v3498
        %v3543 = vmul.f32 %v3463, %v3542
        %v3544 = vrcp.pop %v3501
        %v3545 = vmul.f32 %v3465, %v3544
        %v3546 = vrcp.pop %v3504
        %v3547 = vmul.f32 %v3467, %v3546
        %v3548 = vrcp.pop %v3507
        %v3549 = vmul.f32 %v3469, %v3548
        %v3550 = vrcp.pop %v3510
        %v3551 = vmul.f32 %v3471, %v3550
        %v3552 = vrcp.pop %v3513
        %v3553 = vmul.f32 %v3473, %v3552
        %v3554 = vrcp.pop %v3516
        %v3555 = vmul.f32 %v3475, %v3554
        %v3556 = vrcp.pop %v3519
        %v3557 = vmul.f32 %v3477, %v3556
        %v3558 = vrcp.pop %v3522
        %v3559 = vmul.f32 %v3479, %v3558
        %v3560 = vrcp.pop %v3525
        %v3561 = vmul.f32 %v3481, %v3560
        %v3562 = vrcp.pop %v3528
        %v3563 = vmul.f32 %v3483, %v3562
        %v3564 = vrcp.pop %v3531
        %v3565 = vmul.f32 %v3485, %v3564
        %v3566 = vrcp.pop %v3534
        %v3567 = vmul.f32 %v3487, %v3566
        %v3568 = vrcp.pop %v3537
        %v3569 = vmul.f32 %v3489, %v3568
        %v3570 = vpack.c.bf16 %v3539, %v3539
        %v3571 = vpack.c.bf16 %v3541, %v3541
        %v3572 = vpack.c.bf16 %v3543, %v3543
        %v3573 = vpack.c.bf16 %v3545, %v3545
        %v3574 = vpack.c.bf16 %v3547, %v3547
        %v3575 = vpack.c.bf16 %v3549, %v3549
        %v3576 = vpack.c.bf16 %v3551, %v3551
        %v3577 = vpack.c.bf16 %v3553, %v3553
        %v3578 = vpack.c.bf16 %v3555, %v3555
        %v3579 = vpack.c.bf16 %v3557, %v3557
        %v3580 = vpack.c.bf16 %v3559, %v3559
        %v3581 = vpack.c.bf16 %v3561, %v3561
        %v3582 = vpack.c.bf16 %v3563, %v3563
        %v3583 = vpack.c.bf16 %v3565, %v3565
        %v3584 = vpack.c.bf16 %v3567, %v3567
        %v3585 = vpack.c.bf16 %v3569, %v3569
        %v3587 = vsel %vm3393, %v3570, 0
        %vm3589 = vcmask 1043456
        %v3591 = vsel %vm3589, %v2624, 0
        %3593 = vmatprep.subr.bf16.mxu0 0
        %3594 = vmatpush1.bf16.msra.mxu0 %v3591
        %3595 = vmatprep.subr.bf16.mxu0 0
        %3596 = vmatpush1.bf16.msra.mxu0 0
        %3597 = vmatprep.subr.bf16.mxu0 0
        %3598 = vmatpush1.bf16.msra.mxu0 0
        %3599 = vmatprep.subr.bf16.mxu0 0
        %3600 = vmatpush1.bf16.msra.mxu0 0
        %3601 = vmatprep.subr.bf16.mxu0 0
        %3602 = vmatpush1.bf16.msra.mxu0 0
        %3603 = vmatprep.subr.bf16.mxu0 0
        %3604 = vmatpush1.bf16.msra.mxu0 0
        %3605 = vmatprep.subr.bf16.mxu0 0
        %3606 = vmatpush1.bf16.msra.mxu0 0
        %3607 = vmatprep.subr.bf16.mxu0 0
        %3608 = vmatpush1.bf16.msra.mxu0 0
        %3609 = vmatprep.subr.bf16.mxu0 0
        %3610 = vmatpush1.bf16.msra.mxu0 0
        %3611 = vmatprep.subr.bf16.mxu0 0
        %3612 = vmatpush1.bf16.msra.mxu0 0
        %3613 = vmatprep.subr.bf16.mxu0 0
        %3614 = vmatpush1.bf16.msra.mxu0 0
        %3615 = vmatprep.subr.bf16.mxu0 0
        %3616 = vmatpush1.bf16.msra.mxu0 0
        %3617 = vmatprep.subr.bf16.mxu0 0
        %3618 = vmatpush1.bf16.msra.mxu0 0
        %3619 = vmatprep.subr.bf16.mxu0 0
        %3620 = vmatpush1.bf16.msra.mxu0 0
        %3621 = vmatprep.subr.bf16.mxu0 0
        %3622 = vmatpush1.bf16.msra.mxu0 0
        %3623 = vmatprep.subr.bf16.mxu0 0
        %3624 = vmatpush1.bf16.msra.mxu0 0
        %3625 = vmatprep.mubr.bf16.mxu0 0
        %3626 = vmatmul.mubr.bf16.gmra.mrb[0].mxu0 %v3587
        %v3627 = vpop.f32.mrb[0].mxu0
        %v3628 = vadd.f32 0.0, %v3627
        %v3629 = vpop.f32.mrb[0].mxu0
        %v3630 = vpop.f32.mrb[0].mxu0
        %v3631 = vpop.f32.mrb[0].mxu0
        %3632 = vdwg.mxu0
        %v3634 = vsel %vm3393, %v3571, 0
        %v3637 = vsel %vm3589, %v2625, 0
        %3639 = vmatprep.subr.bf16.mxu0 0
        %3640 = vmatpush1.bf16.msra.mxu0 %v3637
        %3641 = vmatprep.subr.bf16.mxu0 0
        %3642 = vmatpush1.bf16.msra.mxu0 0
        %3643 = vmatprep.subr.bf16.mxu0 0
        %3644 = vmatpush1.bf16.msra.mxu0 0
        %3645 = vmatprep.subr.bf16.mxu0 0
        %3646 = vmatpush1.bf16.msra.mxu0 0
        %3647 = vmatprep.subr.bf16.mxu0 0
        %3648 = vmatpush1.bf16.msra.mxu0 0
        %3649 = vmatprep.subr.bf16.mxu0 0
        %3650 = vmatpush1.bf16.msra.mxu0 0
        %3651 = vmatprep.subr.bf16.mxu0 0
        %3652 = vmatpush1.bf16.msra.mxu0 0
        %3653 = vmatprep.subr.bf16.mxu0 0
        %3654 = vmatpush1.bf16.msra.mxu0 0
        %3655 = vmatprep.subr.bf16.mxu0 0
        %3656 = vmatpush1.bf16.msra.mxu0 0
        %3657 = vmatprep.subr.bf16.mxu0 0
        %3658 = vmatpush1.bf16.msra.mxu0 0
        %3659 = vmatprep.subr.bf16.mxu0 0
        %3660 = vmatpush1.bf16.msra.mxu0 0
        %3661 = vmatprep.subr.bf16.mxu0 0
        %3662 = vmatpush1.bf16.msra.mxu0 0
        %3663 = vmatprep.subr.bf16.mxu0 0
        %3664 = vmatpush1.bf16.msra.mxu0 0
        %3665 = vmatprep.subr.bf16.mxu0 0
        %3666 = vmatpush1.bf16.msra.mxu0 0
        %3667 = vmatprep.subr.bf16.mxu0 0
        %3668 = vmatpush1.bf16.msra.mxu0 0
        %3669 = vmatprep.subr.bf16.mxu0 0
        %3670 = vmatpush1.bf16.msra.mxu0 0
        %3671 = vmatprep.mubr.bf16.mxu0 0
        %3672 = vmatmul.mubr.bf16.gmra.mrb[0].mxu0 %v3634
        %v3673 = vpop.f32.mrb[0].mxu0
        %v3674 = vadd.f32 0.0, %v3673
        %v3675 = vpop.f32.mrb[0].mxu0
        %v3676 = vpop.f32.mrb[0].mxu0
        %v3677 = vpop.f32.mrb[0].mxu0
        %3678 = vdwg.mxu0
        %v3680 = vsel %vm3393, %v3572, 0
        %v3683 = vsel %vm3589, %v2626, 0
        %3685 = vmatprep.subr.bf16.mxu0 0
        %3686 = vmatpush1.bf16.msra.mxu0 %v3683
        %3687 = vmatprep.subr.bf16.mxu0 0
        %3688 = vmatpush1.bf16.msra.mxu0 0
        %3689 = vmatprep.subr.bf16.mxu0 0
        %3690 = vmatpush1.bf16.msra.mxu0 0
        %3691 = vmatprep.subr.bf16.mxu0 0
        %3692 = vmatpush1.bf16.msra.mxu0 0
        %3693 = vmatprep.subr.bf16.mxu0 0
        %3694 = vmatpush1.bf16.msra.mxu0 0
        %3695 = vmatprep.subr.bf16.mxu0 0
        %3696 = vmatpush1.bf16.msra.mxu0 0
        %3697 = vmatprep.subr.bf16.mxu0 0
        %3698 = vmatpush1.bf16.msra.mxu0 0
        %3699 = vmatprep.subr.bf16.mxu0 0
        %3700 = vmatpush1.bf16.msra.mxu0 0
        %3701 = vmatprep.subr.bf16.mxu0 0
        %3702 = vmatpush1.bf16.msra.mxu0 0
        %3703 = vmatprep.subr.bf16.mxu0 0
        %3704 = vmatpush1.bf16.msra.mxu0 0
        %3705 = vmatprep.subr.bf16.mxu0 0
        %3706 = vmatpush1.bf16.msra.mxu0 0
        %3707 = vmatprep.subr.bf16.mxu0 0
        %3708 = vmatpush1.bf16.msra.mxu0 0
        %3709 = vmatprep.subr.bf16.mxu0 0
        %3710 = vmatpush1.bf16.msra.mxu0 0
        %3711 = vmatprep.subr.bf16.mxu0 0
        %3712 = vmatpush1.bf16.msra.mxu0 0
        %3713 = vmatprep.subr.bf16.mxu0 0
        %3714 = vmatpush1.bf16.msra.mxu0 0
        %3715 = vmatprep.subr.bf16.mxu0 0
        %3716 = vmatpush1.bf16.msra.mxu0 0
        %3717 = vmatprep.mubr.bf16.mxu0 0
        %3718 = vmatmul.mubr.bf16.gmra.mrb[0].mxu0 %v3680
        %v3719 = vpop.f32.mrb[0].mxu0
        %v3720 = vadd.f32 0.0, %v3719
        %v3721 = vpop.f32.mrb[0].mxu0
        %v3722 = vpop.f32.mrb[0].mxu0
        %v3723 = vpop.f32.mrb[0].mxu0
        %3724 = vdwg.mxu0
        %v3726 = vsel %vm3393, %v3573, 0
        %v3729 = vsel %vm3589, %v2627, 0
        %3731 = vmatprep.subr.bf16.mxu0 0
        %3732 = vmatpush1.bf16.msra.mxu0 %v3729
        %3733 = vmatprep.subr.bf16.mxu0 0
        %3734 = vmatpush1.bf16.msra.mxu0 0
        %3735 = vmatprep.subr.bf16.mxu0 0
        %3736 = vmatpush1.bf16.msra.mxu0 0
        %3737 = vmatprep.subr.bf16.mxu0 0
        %3738 = vmatpush1.bf16.msra.mxu0 0
        %3739 = vmatprep.subr.bf16.mxu0 0
        %3740 = vmatpush1.bf16.msra.mxu0 0
        %3741 = vmatprep.subr.bf16.mxu0 0
        %3742 = vmatpush1.bf16.msra.mxu0 0
        %3743 = vmatprep.subr.bf16.mxu0 0
        %3744 = vmatpush1.bf16.msra.mxu0 0
        %3745 = vmatprep.subr.bf16.mxu0 0
        %3746 = vmatpush1.bf16.msra.mxu0 0
        %3747 = vmatprep.subr.bf16.mxu0 0
        %3748 = vmatpush1.bf16.msra.mxu0 0
        %3749 = vmatprep.subr.bf16.mxu0 0
        %3750 = vmatpush1.bf16.msra.mxu0 0
        %3751 = vmatprep.subr.bf16.mxu0 0
        %3752 = vmatpush1.bf16.msra.mxu0 0
        %3753 = vmatprep.subr.bf16.mxu0 0
        %3754 = vmatpush1.bf16.msra.mxu0 0
        %3755 = vmatprep.subr.bf16.mxu0 0
        %3756 = vmatpush1.bf16.msra.mxu0 0
        %3757 = vmatprep.subr.bf16.mxu0 0
        %3758 = vmatpush1.bf16.msra.mxu0 0
        %3759 = vmatprep.subr.bf16.mxu0 0
        %3760 = vmatpush1.bf16.msra.mxu0 0
        %3761 = vmatprep.subr.bf16.mxu0 0
        %3762 = vmatpush1.bf16.msra.mxu0 0
        %3763 = vmatprep.mubr.bf16.mxu0 0
        %3764 = vmatmul.mubr.bf16.gmra.mrb[0].mxu0 %v3726
        %v3765 = vpop.f32.mrb[0].mxu0
        %v3766 = vadd.f32 0.0, %v3765
        %v3767 = vpop.f32.mrb[0].mxu0
        %v3768 = vpop.f32.mrb[0].mxu0
        %v3769 = vpop.f32.mrb[0].mxu0
        %3770 = vdwg.mxu0
        %v3772 = vsel %vm3393, %v3574, 0
        %v3775 = vsel %vm3589, %v2628, 0
        %3777 = vmatprep.subr.bf16.mxu0 0
        %3778 = vmatpush1.bf16.msra.mxu0 %v3775
        %3779 = vmatprep.subr.bf16.mxu0 0
        %3780 = vmatpush1.bf16.msra.mxu0 0
        %3781 = vmatprep.subr.bf16.mxu0 0
        %3782 = vmatpush1.bf16.msra.mxu0 0
        %3783 = vmatprep.subr.bf16.mxu0 0
        %3784 = vmatpush1.bf16.msra.mxu0 0
        %3785 = vmatprep.subr.bf16.mxu0 0
        %3786 = vmatpush1.bf16.msra.mxu0 0
        %3787 = vmatprep.subr.bf16.mxu0 0
        %3788 = vmatpush1.bf16.msra.mxu0 0
        %3789 = vmatprep.subr.bf16.mxu0 0
        %3790 = vmatpush1.bf16.msra.mxu0 0
        %3791 = vmatprep.subr.bf16.mxu0 0
        %3792 = vmatpush1.bf16.msra.mxu0 0
        %3793 = vmatprep.subr.bf16.mxu0 0
        %3794 = vmatpush1.bf16.msra.mxu0 0
        %3795 = vmatprep.subr.bf16.mxu0 0
        %3796 = vmatpush1.bf16.msra.mxu0 0
        %3797 = vmatprep.subr.bf16.mxu0 0
        %3798 = vmatpush1.bf16.msra.mxu0 0
        %3799 = vmatprep.subr.bf16.mxu0 0
        %3800 = vmatpush1.bf16.msra.mxu0 0
        %3801 = vmatprep.subr.bf16.mxu0 0
        %3802 = vmatpush1.bf16.msra.mxu0 0
        %3803 = vmatprep.subr.bf16.mxu0 0
        %3804 = vmatpush1.bf16.msra.mxu0 0
        %3805 = vmatprep.subr.bf16.mxu0 0
        %3806 = vmatpush1.bf16.msra.mxu0 0
        %3807 = vmatprep.subr.bf16.mxu0 0
        %3808 = vmatpush1.bf16.msra.mxu0 0
        %3809 = vmatprep.mubr.bf16.mxu0 0
        %3810 = vmatmul.mubr.bf16.gmra.mrb[0].mxu0 %v3772
        %v3811 = vpop.f32.mrb[0].mxu0
        %v3812 = vadd.f32 0.0, %v3811
        %v3813 = vpop.f32.mrb[0].mxu0
        %v3814 = vpop.f32.mrb[0].mxu0
        %v3815 = vpop.f32.mrb[0].mxu0
        %3816 = vdwg.mxu0
        %v3818 = vsel %vm3393, %v3575, 0
        %v3821 = vsel %vm3589, %v2629, 0
        %3823 = vmatprep.subr.bf16.mxu0 0
        %3824 = vmatpush1.bf16.msra.mxu0 %v3821
        %3825 = vmatprep.subr.bf16.mxu0 0
        %3826 = vmatpush1.bf16.msra.mxu0 0
        %3827 = vmatprep.subr.bf16.mxu0 0
        %3828 = vmatpush1.bf16.msra.mxu0 0
        %3829 = vmatprep.subr.bf16.mxu0 0
        %3830 = vmatpush1.bf16.msra.mxu0 0
        %3831 = vmatprep.subr.bf16.mxu0 0
        %3832 = vmatpush1.bf16.msra.mxu0 0
        %3833 = vmatprep.subr.bf16.mxu0 0
        %3834 = vmatpush1.bf16.msra.mxu0 0
        %3835 = vmatprep.subr.bf16.mxu0 0
        %3836 = vmatpush1.bf16.msra.mxu0 0
        %3837 = vmatprep.subr.bf16.mxu0 0
        %3838 = vmatpush1.bf16.msra.mxu0 0
        %3839 = vmatprep.subr.bf16.mxu0 0
        %3840 = vmatpush1.bf16.msra.mxu0 0
        %3841 = vmatprep.subr.bf16.mxu0 0
        %3842 = vmatpush1.bf16.msra.mxu0 0
        %3843 = vmatprep.subr.bf16.mxu0 0
        %3844 = vmatpush1.bf16.msra.mxu0 0
        %3845 = vmatprep.subr.bf16.mxu0 0
        %3846 = vmatpush1.bf16.msra.mxu0 0
        %3847 = vmatprep.subr.bf16.mxu0 0
        %3848 = vmatpush1.bf16.msra.mxu0 0
        %3849 = vmatprep.subr.bf16.mxu0 0
        %3850 = vmatpush1.bf16.msra.mxu0 0
        %3851 = vmatprep.subr.bf16.mxu0 0
        %3852 = vmatpush1.bf16.msra.mxu0 0
        %3853 = vmatprep.subr.bf16.mxu0 0
        %3854 = vmatpush1.bf16.msra.mxu0 0
        %3855 = vmatprep.mubr.bf16.mxu0 0
        %3856 = vmatmul.mubr.bf16.gmra.mrb[0].mxu0 %v3818
        %v3857 = vpop.f32.mrb[0].mxu0
        %v3858 = vadd.f32 0.0, %v3857
        %v3859 = vpop.f32.mrb[0].mxu0
        %v3860 = vpop.f32.mrb[0].mxu0
        %v3861 = vpop.f32.mrb[0].mxu0
        %3862 = vdwg.mxu0
        %v3864 = vsel %vm3393, %v3576, 0
        %v3867 = vsel %vm3589, %v2630, 0
        %3869 = vmatprep.subr.bf16.mxu0 0
        %3870 = vmatpush1.bf16.msra.mxu0 %v3867
        %3871 = vmatprep.subr.bf16.mxu0 0
        %3872 = vmatpush1.bf16.msra.mxu0 0
        %3873 = vmatprep.subr.bf16.mxu0 0
        %3874 = vmatpush1.bf16.msra.mxu0 0
        %3875 = vmatprep.subr.bf16.mxu0 0
        %3876 = vmatpush1.bf16.msra.mxu0 0
        %3877 = vmatprep.subr.bf16.mxu0 0
        %3878 = vmatpush1.bf16.msra.mxu0 0
        %3879 = vmatprep.subr.bf16.mxu0 0
        %3880 = vmatpush1.bf16.msra.mxu0 0
        %3881 = vmatprep.subr.bf16.mxu0 0
        %3882 = vmatpush1.bf16.msra.mxu0 0
        %3883 = vmatprep.subr.bf16.mxu0 0
        %3884 = vmatpush1.bf16.msra.mxu0 0
        %3885 = vmatprep.subr.bf16.mxu0 0
        %3886 = vmatpush1.bf16.msra.mxu0 0
        %3887 = vmatprep.subr.bf16.mxu0 0
        %3888 = vmatpush1.bf16.msra.mxu0 0
        %3889 = vmatprep.subr.bf16.mxu0 0
        %3890 = vmatpush1.bf16.msra.mxu0 0
        %3891 = vmatprep.subr.bf16.mxu0 0
        %3892 = vmatpush1.bf16.msra.mxu0 0
        %3893 = vmatprep.subr.bf16.mxu0 0
        %3894 = vmatpush1.bf16.msra.mxu0 0
        %3895 = vmatprep.subr.bf16.mxu0 0
        %3896 = vmatpush1.bf16.msra.mxu0 0
        %3897 = vmatprep.subr.bf16.mxu0 0
        %3898 = vmatpush1.bf16.msra.mxu0 0
        %3899 = vmatprep.subr.bf16.mxu0 0
        %3900 = vmatpush1.bf16.msra.mxu0 0
        %3901 = vmatprep.mubr.bf16.mxu0 0
        %3902 = vmatmul.mubr.bf16.gmra.mrb[0].mxu0 %v3864
        %v3903 = vpop.f32.mrb[0].mxu0
        %v3904 = vadd.f32 0.0, %v3903
        %v3905 = vpop.f32.mrb[0].mxu0
        %v3906 = vpop.f32.mrb[0].mxu0
        %v3907 = vpop.f32.mrb[0].mxu0
        %3908 = vdwg.mxu0
        %v3910 = vsel %vm3393, %v3577, 0
        %v3913 = vsel %vm3589, %v2631, 0
        %3915 = vmatprep.subr.bf16.mxu0 0
        %3916 = vmatpush1.bf16.msra.mxu0 %v3913
        %3917 = vmatprep.subr.bf16.mxu0 0
        %3918 = vmatpush1.bf16.msra.mxu0 0
        %3919 = vmatprep.subr.bf16.mxu0 0
        %3920 = vmatpush1.bf16.msra.mxu0 0
        %3921 = vmatprep.subr.bf16.mxu0 0
        %3922 = vmatpush1.bf16.msra.mxu0 0
        %3923 = vmatprep.subr.bf16.mxu0 0
        %3924 = vmatpush1.bf16.msra.mxu0 0
        %3925 = vmatprep.subr.bf16.mxu0 0
        %3926 = vmatpush1.bf16.msra.mxu0 0
        %3927 = vmatprep.subr.bf16.mxu0 0
        %3928 = vmatpush1.bf16.msra.mxu0 0
        %3929 = vmatprep.subr.bf16.mxu0 0
        %3930 = vmatpush1.bf16.msra.mxu0 0
        %3931 = vmatprep.subr.bf16.mxu0 0
        %3932 = vmatpush1.bf16.msra.mxu0 0
        %3933 = vmatprep.subr.bf16.mxu0 0
        %3934 = vmatpush1.bf16.msra.mxu0 0
        %3935 = vmatprep.subr.bf16.mxu0 0
        %3936 = vmatpush1.bf16.msra.mxu0 0
        %3937 = vmatprep.subr.bf16.mxu0 0
        %3938 = vmatpush1.bf16.msra.mxu0 0
        %3939 = vmatprep.subr.bf16.mxu0 0
        %3940 = vmatpush1.bf16.msra.mxu0 0
        %3941 = vmatprep.subr.bf16.mxu0 0
        %3942 = vmatpush1.bf16.msra.mxu0 0
        %3943 = vmatprep.subr.bf16.mxu0 0
        %3944 = vmatpush1.bf16.msra.mxu0 0
        %3945 = vmatprep.subr.bf16.mxu0 0
        %3946 = vmatpush1.bf16.msra.mxu0 0
        %3947 = vmatprep.mubr.bf16.mxu0 0
        %3948 = vmatmul.mubr.bf16.gmra.mrb[0].mxu0 %v3910
        %v3949 = vpop.f32.mrb[0].mxu0
        %v3950 = vadd.f32 0.0, %v3949
        %v3951 = vpop.f32.mrb[0].mxu0
        %v3952 = vpop.f32.mrb[0].mxu0
        %v3953 = vpop.f32.mrb[0].mxu0
        %3954 = vdwg.mxu0
        %v3956 = vsel %vm3393, %v3578, 0
        %v3959 = vsel %vm3589, %v2632, 0
        %3961 = vmatprep.subr.bf16.mxu0 0
        %3962 = vmatpush1.bf16.msra.mxu0 %v3959
        %3963 = vmatprep.subr.bf16.mxu0 0
        %3964 = vmatpush1.bf16.msra.mxu0 0
        %3965 = vmatprep.subr.bf16.mxu0 0
        %3966 = vmatpush1.bf16.msra.mxu0 0
        %3967 = vmatprep.subr.bf16.mxu0 0
        %3968 = vmatpush1.bf16.msra.mxu0 0
        %3969 = vmatprep.subr.bf16.mxu0 0
        %3970 = vmatpush1.bf16.msra.mxu0 0
        %3971 = vmatprep.subr.bf16.mxu0 0
        %3972 = vmatpush1.bf16.msra.mxu0 0
        %3973 = vmatprep.subr.bf16.mxu0 0
        %3974 = vmatpush1.bf16.msra.mxu0 0
        %3975 = vmatprep.subr.bf16.mxu0 0
        %3976 = vmatpush1.bf16.msra.mxu0 0
        %3977 = vmatprep.subr.bf16.mxu0 0
        %3978 = vmatpush1.bf16.msra.mxu0 0
        %3979 = vmatprep.subr.bf16.mxu0 0
        %3980 = vmatpush1.bf16.msra.mxu0 0
        %3981 = vmatprep.subr.bf16.mxu0 0
        %3982 = vmatpush1.bf16.msra.mxu0 0
        %3983 = vmatprep.subr.bf16.mxu0 0
        %3984 = vmatpush1.bf16.msra.mxu0 0
        %3985 = vmatprep.subr.bf16.mxu0 0
        %3986 = vmatpush1.bf16.msra.mxu0 0
        %3987 = vmatprep.subr.bf16.mxu0 0
        %3988 = vmatpush1.bf16.msra.mxu0 0
        %3989 = vmatprep.subr.bf16.mxu0 0
        %3990 = vmatpush1.bf16.msra.mxu0 0
        %3991 = vmatprep.subr.bf16.mxu0 0
        %3992 = vmatpush1.bf16.msra.mxu0 0
        %3993 = vmatprep.mubr.bf16.mxu0 0
        %3994 = vmatmul.mubr.bf16.gmra.mrb[0].mxu0 %v3956
        %v3995 = vpop.f32.mrb[0].mxu0
        %v3996 = vadd.f32 0.0, %v3995
        %v3997 = vpop.f32.mrb[0].mxu0
        %v3998 = vpop.f32.mrb[0].mxu0
        %v3999 = vpop.f32.mrb[0].mxu0
        %4000 = vdwg.mxu0
        %v4002 = vsel %vm3393, %v3579, 0
        %v4005 = vsel %vm3589, %v2633, 0
        %4007 = vmatprep.subr.bf16.mxu0 0
        %4008 = vmatpush1.bf16.msra.mxu0 %v4005
        %4009 = vmatprep.subr.bf16.mxu0 0
        %4010 = vmatpush1.bf16.msra.mxu0 0
        %4011 = vmatprep.subr.bf16.mxu0 0
        %4012 = vmatpush1.bf16.msra.mxu0 0
        %4013 = vmatprep.subr.bf16.mxu0 0
        %4014 = vmatpush1.bf16.msra.mxu0 0
        %4015 = vmatprep.subr.bf16.mxu0 0
        %4016 = vmatpush1.bf16.msra.mxu0 0
        %4017 = vmatprep.subr.bf16.mxu0 0
        %4018 = vmatpush1.bf16.msra.mxu0 0
        %4019 = vmatprep.subr.bf16.mxu0 0
        %4020 = vmatpush1.bf16.msra.mxu0 0
        %4021 = vmatprep.subr.bf16.mxu0 0
        %4022 = vmatpush1.bf16.msra.mxu0 0
        %4023 = vmatprep.subr.bf16.mxu0 0
        %4024 = vmatpush1.bf16.msra.mxu0 0
        %4025 = vmatprep.subr.bf16.mxu0 0
        %4026 = vmatpush1.bf16.msra.mxu0 0
        %4027 = vmatprep.subr.bf16.mxu0 0
        %4028 = vmatpush1.bf16.msra.mxu0 0
        %4029 = vmatprep.subr.bf16.mxu0 0
        %4030 = vmatpush1.bf16.msra.mxu0 0
        %4031 = vmatprep.subr.bf16.mxu0 0
        %4032 = vmatpush1.bf16.msra.mxu0 0
        %4033 = vmatprep.subr.bf16.mxu0 0
        %4034 = vmatpush1.bf16.msra.mxu0 0
        %4035 = vmatprep.subr.bf16.mxu0 0
        %4036 = vmatpush1.bf16.msra.mxu0 0
        %4037 = vmatprep.subr.bf16.mxu0 0
        %4038 = vmatpush1.bf16.msra.mxu0 0
        %4039 = vmatprep.mubr.bf16.mxu0 0
        %4040 = vmatmul.mubr.bf16.gmra.mrb[0].mxu0 %v4002
        %v4041 = vpop.f32.mrb[0].mxu0
        %v4042 = vadd.f32 0.0, %v4041
        %v4043 = vpop.f32.mrb[0].mxu0
        %v4044 = vpop.f32.mrb[0].mxu0
        %v4045 = vpop.f32.mrb[0].mxu0
        %4046 = vdwg.mxu0
        %v4048 = vsel %vm3393, %v3580, 0
        %v4051 = vsel %vm3589, %v2634, 0
        %4053 = vmatprep.subr.bf16.mxu0 0
        %4054 = vmatpush1.bf16.msra.mxu0 %v4051
        %4055 = vmatprep.subr.bf16.mxu0 0
        %4056 = vmatpush1.bf16.msra.mxu0 0
        %4057 = vmatprep.subr.bf16.mxu0 0
        %4058 = vmatpush1.bf16.msra.mxu0 0
        %4059 = vmatprep.subr.bf16.mxu0 0
        %4060 = vmatpush1.bf16.msra.mxu0 0
        %4061 = vmatprep.subr.bf16.mxu0 0
        %4062 = vmatpush1.bf16.msra.mxu0 0
        %4063 = vmatprep.subr.bf16.mxu0 0
        %4064 = vmatpush1.bf16.msra.mxu0 0
        %4065 = vmatprep.subr.bf16.mxu0 0
        %4066 = vmatpush1.bf16.msra.mxu0 0
        %4067 = vmatprep.subr.bf16.mxu0 0
        %4068 = vmatpush1.bf16.msra.mxu0 0
        %4069 = vmatprep.subr.bf16.mxu0 0
        %4070 = vmatpush1.bf16.msra.mxu0 0
        %4071 = vmatprep.subr.bf16.mxu0 0
        %4072 = vmatpush1.bf16.msra.mxu0 0
        %4073 = vmatprep.subr.bf16.mxu0 0
        %4074 = vmatpush1.bf16.msra.mxu0 0
        %4075 = vmatprep.subr.bf16.mxu0 0
        %4076 = vmatpush1.bf16.msra.mxu0 0
        %4077 = vmatprep.subr.bf16.mxu0 0
        %4078 = vmatpush1.bf16.msra.mxu0 0
        %4079 = vmatprep.subr.bf16.mxu0 0
        %4080 = vmatpush1.bf16.msra.mxu0 0
        %4081 = vmatprep.subr.bf16.mxu0 0
        %4082 = vmatpush1.bf16.msra.mxu0 0
        %4083 = vmatprep.subr.bf16.mxu0 0
        %4084 = vmatpush1.bf16.msra.mxu0 0
        %4085 = vmatprep.mubr.bf16.mxu0 0
        %4086 = vmatmul.mubr.bf16.gmra.mrb[0].mxu0 %v4048
        %v4087 = vpop.f32.mrb[0].mxu0
        %v4088 = vadd.f32 0.0, %v4087
        %v4089 = vpop.f32.mrb[0].mxu0
        %v4090 = vpop.f32.mrb[0].mxu0
        %v4091 = vpop.f32.mrb[0].mxu0
        %4092 = vdwg.mxu0
        %v4094 = vsel %vm3393, %v3581, 0
        %v4097 = vsel %vm3589, %v2635, 0
        %4099 = vmatprep.subr.bf16.mxu0 0
        %4100 = vmatpush1.bf16.msra.mxu0 %v4097
        %4101 = vmatprep.subr.bf16.mxu0 0
        %4102 = vmatpush1.bf16.msra.mxu0 0
        %4103 = vmatprep.subr.bf16.mxu0 0
        %4104 = vmatpush1.bf16.msra.mxu0 0
        %4105 = vmatprep.subr.bf16.mxu0 0
        %4106 = vmatpush1.bf16.msra.mxu0 0
        %4107 = vmatprep.subr.bf16.mxu0 0
        %4108 = vmatpush1.bf16.msra.mxu0 0
        %4109 = vmatprep.subr.bf16.mxu0 0
        %4110 = vmatpush1.bf16.msra.mxu0 0
        %4111 = vmatprep.subr.bf16.mxu0 0
        %4112 = vmatpush1.bf16.msra.mxu0 0
        %4113 = vmatprep.subr.bf16.mxu0 0
        %4114 = vmatpush1.bf16.msra.mxu0 0
        %4115 = vmatprep.subr.bf16.mxu0 0
        %4116 = vmatpush1.bf16.msra.mxu0 0
        %4117 = vmatprep.subr.bf16.mxu0 0
        %4118 = vmatpush1.bf16.msra.mxu0 0
        %4119 = vmatprep.subr.bf16.mxu0 0
        %4120 = vmatpush1.bf16.msra.mxu0 0
        %4121 = vmatprep.subr.bf16.mxu0 0
        %4122 = vmatpush1.bf16.msra.mxu0 0
        %4123 = vmatprep.subr.bf16.mxu0 0
        %4124 = vmatpush1.bf16.msra.mxu0 0
        %4125 = vmatprep.subr.bf16.mxu0 0
        %4126 = vmatpush1.bf16.msra.mxu0 0
        %4127 = vmatprep.subr.bf16.mxu0 0
        %4128 = vmatpush1.bf16.msra.mxu0 0
        %4129 = vmatprep.subr.bf16.mxu0 0
        %4130 = vmatpush1.bf16.msra.mxu0 0
        %4131 = vmatprep.mubr.bf16.mxu0 0
        %4132 = vmatmul.mubr.bf16.gmra.mrb[0].mxu0 %v4094
        %v4133 = vpop.f32.mrb[0].mxu0
        %v4134 = vadd.f32 0.0, %v4133
        %v4135 = vpop.f32.mrb[0].mxu0
        %v4136 = vpop.f32.mrb[0].mxu0
        %v4137 = vpop.f32.mrb[0].mxu0
        %4138 = vdwg.mxu0
        %v4140 = vsel %vm3393, %v3582, 0
        %v4143 = vsel %vm3589, %v2636, 0
        %4145 = vmatprep.subr.bf16.mxu0 0
        %4146 = vmatpush1.bf16.msra.mxu0 %v4143
        %4147 = vmatprep.subr.bf16.mxu0 0
        %4148 = vmatpush1.bf16.msra.mxu0 0
        %4149 = vmatprep.subr.bf16.mxu0 0
        %4150 = vmatpush1.bf16.msra.mxu0 0
        %4151 = vmatprep.subr.bf16.mxu0 0
        %4152 = vmatpush1.bf16.msra.mxu0 0
        %4153 = vmatprep.subr.bf16.mxu0 0
        %4154 = vmatpush1.bf16.msra.mxu0 0
        %4155 = vmatprep.subr.bf16.mxu0 0
        %4156 = vmatpush1.bf16.msra.mxu0 0
        %4157 = vmatprep.subr.bf16.mxu0 0
        %4158 = vmatpush1.bf16.msra.mxu0 0
        %4159 = vmatprep.subr.bf16.mxu0 0
        %4160 = vmatpush1.bf16.msra.mxu0 0
        %4161 = vmatprep.subr.bf16.mxu0 0
        %4162 = vmatpush1.bf16.msra.mxu0 0
        %4163 = vmatprep.subr.bf16.mxu0 0
        %4164 = vmatpush1.bf16.msra.mxu0 0
        %4165 = vmatprep.subr.bf16.mxu0 0
        %4166 = vmatpush1.bf16.msra.mxu0 0
        %4167 = vmatprep.subr.bf16.mxu0 0
        %4168 = vmatpush1.bf16.msra.mxu0 0
        %4169 = vmatprep.subr.bf16.mxu0 0
        %4170 = vmatpush1.bf16.msra.mxu0 0
        %4171 = vmatprep.subr.bf16.mxu0 0
        %4172 = vmatpush1.bf16.msra.mxu0 0
        %4173 = vmatprep.subr.bf16.mxu0 0
        %4174 = vmatpush1.bf16.msra.mxu0 0
        %4175 = vmatprep.subr.bf16.mxu0 0
        %4176 = vmatpush1.bf16.msra.mxu0 0
        %4177 = vmatprep.mubr.bf16.mxu0 0
        %4178 = vmatmul.mubr.bf16.gmra.mrb[0].mxu0 %v4140
        %v4179 = vpop.f32.mrb[0].mxu0
        %v4180 = vadd.f32 0.0, %v4179
        %v4181 = vpop.f32.mrb[0].mxu0
        %v4182 = vpop.f32.mrb[0].mxu0
        %v4183 = vpop.f32.mrb[0].mxu0
        %4184 = vdwg.mxu0
        %v4186 = vsel %vm3393, %v3583, 0
        %v4189 = vsel %vm3589, %v2637, 0
        %4191 = vmatprep.subr.bf16.mxu0 0
        %4192 = vmatpush1.bf16.msra.mxu0 %v4189
        %4193 = vmatprep.subr.bf16.mxu0 0
        %4194 = vmatpush1.bf16.msra.mxu0 0
        %4195 = vmatprep.subr.bf16.mxu0 0
        %4196 = vmatpush1.bf16.msra.mxu0 0
        %4197 = vmatprep.subr.bf16.mxu0 0
        %4198 = vmatpush1.bf16.msra.mxu0 0
        %4199 = vmatprep.subr.bf16.mxu0 0
        %4200 = vmatpush1.bf16.msra.mxu0 0
        %4201 = vmatprep.subr.bf16.mxu0 0
        %4202 = vmatpush1.bf16.msra.mxu0 0
        %4203 = vmatprep.subr.bf16.mxu0 0
        %4204 = vmatpush1.bf16.msra.mxu0 0
        %4205 = vmatprep.subr.bf16.mxu0 0
        %4206 = vmatpush1.bf16.msra.mxu0 0
        %4207 = vmatprep.subr.bf16.mxu0 0
        %4208 = vmatpush1.bf16.msra.mxu0 0
        %4209 = vmatprep.subr.bf16.mxu0 0
        %4210 = vmatpush1.bf16.msra.mxu0 0
        %4211 = vmatprep.subr.bf16.mxu0 0
        %4212 = vmatpush1.bf16.msra.mxu0 0
        %4213 = vmatprep.subr.bf16.mxu0 0
        %4214 = vmatpush1.bf16.msra.mxu0 0
        %4215 = vmatprep.subr.bf16.mxu0 0
        %4216 = vmatpush1.bf16.msra.mxu0 0
        %4217 = vmatprep.subr.bf16.mxu0 0
        %4218 = vmatpush1.bf16.msra.mxu0 0
        %4219 = vmatprep.subr.bf16.mxu0 0
        %4220 = vmatpush1.bf16.msra.mxu0 0
        %4221 = vmatprep.subr.bf16.mxu0 0
        %4222 = vmatpush1.bf16.msra.mxu0 0
        %4223 = vmatprep.mubr.bf16.mxu0 0
        %4224 = vmatmul.mubr.bf16.gmra.mrb[0].mxu0 %v4186
        %v4225 = vpop.f32.mrb[0].mxu0
        %v4226 = vadd.f32 0.0, %v4225
        %v4227 = vpop.f32.mrb[0].mxu0
        %v4228 = vpop.f32.mrb[0].mxu0
        %v4229 = vpop.f32.mrb[0].mxu0
        %4230 = vdwg.mxu0
        %v4232 = vsel %vm3393, %v3584, 0
        %v4235 = vsel %vm3589, %v2638, 0
        %4237 = vmatprep.subr.bf16.mxu0 0
        %4238 = vmatpush1.bf16.msra.mxu0 %v4235
        %4239 = vmatprep.subr.bf16.mxu0 0
        %4240 = vmatpush1.bf16.msra.mxu0 0
        %4241 = vmatprep.subr.bf16.mxu0 0
        %4242 = vmatpush1.bf16.msra.mxu0 0
        %4243 = vmatprep.subr.bf16.mxu0 0
        %4244 = vmatpush1.bf16.msra.mxu0 0
        %4245 = vmatprep.subr.bf16.mxu0 0
        %4246 = vmatpush1.bf16.msra.mxu0 0
        %4247 = vmatprep.subr.bf16.mxu0 0
        %4248 = vmatpush1.bf16.msra.mxu0 0
        %4249 = vmatprep.subr.bf16.mxu0 0
        %4250 = vmatpush1.bf16.msra.mxu0 0
        %4251 = vmatprep.subr.bf16.mxu0 0
        %4252 = vmatpush1.bf16.msra.mxu0 0
        %4253 = vmatprep.subr.bf16.mxu0 0
        %4254 = vmatpush1.bf16.msra.mxu0 0
        %4255 = vmatprep.subr.bf16.mxu0 0
        %4256 = vmatpush1.bf16.msra.mxu0 0
        %4257 = vmatprep.subr.bf16.mxu0 0
        %4258 = vmatpush1.bf16.msra.mxu0 0
        %4259 = vmatprep.subr.bf16.mxu0 0
        %4260 = vmatpush1.bf16.msra.mxu0 0
        %4261 = vmatprep.subr.bf16.mxu0 0
        %4262 = vmatpush1.bf16.msra.mxu0 0
        %4263 = vmatprep.subr.bf16.mxu0 0
        %4264 = vmatpush1.bf16.msra.mxu0 0
        %4265 = vmatprep.subr.bf16.mxu0 0
        %4266 = vmatpush1.bf16.msra.mxu0 0
        %4267 = vmatprep.subr.bf16.mxu0 0
        %4268 = vmatpush1.bf16.msra.mxu0 0
        %4269 = vmatprep.mubr.bf16.mxu0 0
        %4270 = vmatmul.mubr.bf16.gmra.mrb[0].mxu0 %v4232
        %v4271 = vpop.f32.mrb[0].mxu0
        %v4272 = vadd.f32 0.0, %v4271
        %v4273 = vpop.f32.mrb[0].mxu0
        %v4274 = vpop.f32.mrb[0].mxu0
        %v4275 = vpop.f32.mrb[0].mxu0
        %4276 = vdwg.mxu0
        %v4278 = vsel %vm3393, %v3585, 0
        %v4281 = vsel %vm3589, %v2639, 0
        %4283 = vmatprep.subr.bf16.mxu0 0
        %4284 = vmatpush1.bf16.msra.mxu0 %v4281
        %4285 = vmatprep.subr.bf16.mxu0 0
        %4286 = vmatpush1.bf16.msra.mxu0 0
        %4287 = vmatprep.subr.bf16.mxu0 0
        %4288 = vmatpush1.bf16.msra.mxu0 0
        %4289 = vmatprep.subr.bf16.mxu0 0
        %4290 = vmatpush1.bf16.msra.mxu0 0
        %4291 = vmatprep.subr.bf16.mxu0 0
        %4292 = vmatpush1.bf16.msra.mxu0 0
        %4293 = vmatprep.subr.bf16.mxu0 0
        %4294 = vmatpush1.bf16.msra.mxu0 0
        %4295 = vmatprep.subr.bf16.mxu0 0
        %4296 = vmatpush1.bf16.msra.mxu0 0
        %4297 = vmatprep.subr.bf16.mxu0 0
        %4298 = vmatpush1.bf16.msra.mxu0 0
        %4299 = vmatprep.subr.bf16.mxu0 0
        %4300 = vmatpush1.bf16.msra.mxu0 0
        %4301 = vmatprep.subr.bf16.mxu0 0
        %4302 = vmatpush1.bf16.msra.mxu0 0
        %4303 = vmatprep.subr.bf16.mxu0 0
        %4304 = vmatpush1.bf16.msra.mxu0 0
        %4305 = vmatprep.subr.bf16.mxu0 0
        %4306 = vmatpush1.bf16.msra.mxu0 0
        %4307 = vmatprep.subr.bf16.mxu0 0
        %4308 = vmatpush1.bf16.msra.mxu0 0
        %4309 = vmatprep.subr.bf16.mxu0 0
        %4310 = vmatpush1.bf16.msra.mxu0 0
        %4311 = vmatprep.subr.bf16.mxu0 0
        %4312 = vmatpush1.bf16.msra.mxu0 0
        %4313 = vmatprep.subr.bf16.mxu0 0
        %4314 = vmatpush1.bf16.msra.mxu0 0
        %4315 = vmatprep.mubr.bf16.mxu0 0
        %4316 = vmatmul.mubr.bf16.gmra.mrb[0].mxu0 %v4278
        %v4317 = vpop.f32.mrb[0].mxu0
        %v4318 = vadd.f32 0.0, %v4317
        %v4319 = vpop.f32.mrb[0].mxu0
        %v4320 = vpop.f32.mrb[0].mxu0
        %v4321 = vpop.f32.mrb[0].mxu0
        %4322 = vdwg.mxu0
        %v4323 = vcombine.low %v3628, %v3720
        %v4324 = vcombine.high %v3628, %v3720
        %v4326 = vunpack.c.l.s4 1983009808
        %v4327 = vunpack.c.0.s8 %v4326
        %v4328 = vlaneseq
        %v4329 = vshrl.u32 %v4328, 7
        %v4330 = vsub.s32 %v4327, %v4329
        %v4331 = vrot.slane %v4323, %v4330
        %v4333 = vunpack.c.l.s4 1983009808
        %v4334 = vunpack.c.0.s8 %v4333
        %v4335 = vlaneseq
        %v4336 = vshrl.u32 %v4335, 7
        %v4337 = vsub.s32 %v4334, %v4336
        %v4338 = vrot.slane %v4324, %v4337
        %v4339 = vcombine.low %v3674, %v3766
        %v4340 = vcombine.high %v3674, %v3766
        %v4342 = vunpack.c.l.s4 1983009808
        %v4343 = vunpack.c.0.s8 %v4342
        %v4344 = vlaneseq
        %v4345 = vshrl.u32 %v4344, 7
        %v4346 = vsub.s32 %v4343, %v4345
        %v4347 = vrot.slane %v4339, %v4346
        %v4349 = vunpack.c.l.s4 1983009808
        %v4350 = vunpack.c.0.s8 %v4349
        %v4351 = vlaneseq
        %v4352 = vshrl.u32 %v4351, 7
        %v4353 = vsub.s32 %v4350, %v4352
        %v4354 = vrot.slane %v4340, %v4353
        %v4355 = vcombine.low %v3812, %v3904
        %v4356 = vcombine.high %v3812, %v3904
        %v4358 = vunpack.c.l.s4 1983009808
        %v4359 = vunpack.c.0.s8 %v4358
        %v4360 = vlaneseq
        %v4361 = vshrl.u32 %v4360, 7
        %v4362 = vsub.s32 %v4359, %v4361
        %v4363 = vrot.slane %v4355, %v4362
        %v4365 = vunpack.c.l.s4 1983009808
        %v4366 = vunpack.c.0.s8 %v4365
        %v4367 = vlaneseq
        %v4368 = vshrl.u32 %v4367, 7
        %v4369 = vsub.s32 %v4366, %v4368
        %v4370 = vrot.slane %v4356, %v4369
        %v4371 = vcombine.low %v3858, %v3950
        %v4372 = vcombine.high %v3858, %v3950
        %v4374 = vunpack.c.l.s4 1983009808
        %v4375 = vunpack.c.0.s8 %v4374
        %v4376 = vlaneseq
        %v4377 = vshrl.u32 %v4376, 7
        %v4378 = vsub.s32 %v4375, %v4377
        %v4379 = vrot.slane %v4371, %v4378
        %v4381 = vunpack.c.l.s4 1983009808
        %v4382 = vunpack.c.0.s8 %v4381
        %v4383 = vlaneseq
        %v4384 = vshrl.u32 %v4383, 7
        %v4385 = vsub.s32 %v4382, %v4384
        %v4386 = vrot.slane %v4372, %v4385
        %v4387 = vcombine.low %v4331, %v4347
        %v4388 = vcombine.high %v4331, %v4347
        %v4390 = vunpack.c.l.s4 1934713408
        %v4391 = vunpack.c.0.s8 %v4390
        %v4392 = vlaneseq
        %v4393 = vshrl.u32 %v4392, 7
        %v4394 = vsub.s32 %v4391, %v4393
        %v4395 = vrot.slane %v4387, %v4394
        %v4397 = vunpack.c.l.s4 1934713408
        %v4398 = vunpack.c.0.s8 %v4397
        %v4399 = vlaneseq
        %v4400 = vshrl.u32 %v4399, 7
        %v4401 = vsub.s32 %v4398, %v4400
        %v4402 = vrot.slane %v4388, %v4401
        %v4403 = vcombine.low %v4338, %v4354
        %v4404 = vcombine.high %v4338, %v4354
        %v4406 = vunpack.c.l.s4 1934713408
        %v4407 = vunpack.c.0.s8 %v4406
        %v4408 = vlaneseq
        %v4409 = vshrl.u32 %v4408, 7
        %v4410 = vsub.s32 %v4407, %v4409
        %v4411 = vrot.slane %v4403, %v4410
        %v4413 = vunpack.c.l.s4 1934713408
        %v4414 = vunpack.c.0.s8 %v4413
        %v4415 = vlaneseq
        %v4416 = vshrl.u32 %v4415, 7
        %v4417 = vsub.s32 %v4414, %v4416
        %v4418 = vrot.slane %v4404, %v4417
        %v4419 = vcombine.low %v4363, %v4379
        %v4420 = vcombine.high %v4363, %v4379
        %v4422 = vunpack.c.l.s4 1934713408
        %v4423 = vunpack.c.0.s8 %v4422
        %v4424 = vlaneseq
        %v4425 = vshrl.u32 %v4424, 7
        %v4426 = vsub.s32 %v4423, %v4425
        %v4427 = vrot.slane %v4419, %v4426
        %v4429 = vunpack.c.l.s4 1934713408
        %v4430 = vunpack.c.0.s8 %v4429
        %v4431 = vlaneseq
        %v4432 = vshrl.u32 %v4431, 7
        %v4433 = vsub.s32 %v4430, %v4432
        %v4434 = vrot.slane %v4420, %v4433
        %v4435 = vcombine.low %v4370, %v4386
        %v4436 = vcombine.high %v4370, %v4386
        %v4438 = vunpack.c.l.s4 1934713408
        %v4439 = vunpack.c.0.s8 %v4438
        %v4440 = vlaneseq
        %v4441 = vshrl.u32 %v4440, 7
        %v4442 = vsub.s32 %v4439, %v4441
        %v4443 = vrot.slane %v4435, %v4442
        %v4445 = vunpack.c.l.s4 1934713408
        %v4446 = vunpack.c.0.s8 %v4445
        %v4447 = vlaneseq
        %v4448 = vshrl.u32 %v4447, 7
        %v4449 = vsub.s32 %v4446, %v4448
        %v4450 = vrot.slane %v4436, %v4449
        %v4451 = vcombine.low %v4395, %v4427
        %v4452 = vcombine.high %v4395, %v4427
        %v4453 = vcombine.low %v4402, %v4434
        %v4454 = vcombine.high %v4402, %v4434
        %v4455 = vcombine.low %v4411, %v4443
        %v4456 = vcombine.high %v4411, %v4443
        %v4457 = vcombine.low %v4418, %v4450
        %v4458 = vcombine.high %v4418, %v4450
        %v4459 = vcombine.low %v3996, %v4088
        %v4460 = vcombine.high %v3996, %v4088
        %v4462 = vunpack.c.l.s4 1983009808
        %v4463 = vunpack.c.0.s8 %v4462
        %v4464 = vlaneseq
        %v4465 = vshrl.u32 %v4464, 7
        %v4466 = vsub.s32 %v4463, %v4465
        %v4467 = vrot.slane %v4459, %v4466
        %v4469 = vunpack.c.l.s4 1983009808
        %v4470 = vunpack.c.0.s8 %v4469
        %v4471 = vlaneseq
        %v4472 = vshrl.u32 %v4471, 7
        %v4473 = vsub.s32 %v4470, %v4472
        %v4474 = vrot.slane %v4460, %v4473
        %v4475 = vcombine.low %v4042, %v4134
        %v4476 = vcombine.high %v4042, %v4134
        %v4478 = vunpack.c.l.s4 1983009808
        %v4479 = vunpack.c.0.s8 %v4478
        %v4480 = vlaneseq
        %v4481 = vshrl.u32 %v4480, 7
        %v4482 = vsub.s32 %v4479, %v4481
        %v4483 = vrot.slane %v4475, %v4482
        %v4485 = vunpack.c.l.s4 1983009808
        %v4486 = vunpack.c.0.s8 %v4485
        %v4487 = vlaneseq
        %v4488 = vshrl.u32 %v4487, 7
        %v4489 = vsub.s32 %v4486, %v4488
        %v4490 = vrot.slane %v4476, %v4489
        %v4491 = vcombine.low %v4180, %v4272
        %v4492 = vcombine.high %v4180, %v4272
        %v4494 = vunpack.c.l.s4 1983009808
        %v4495 = vunpack.c.0.s8 %v4494
        %v4496 = vlaneseq
        %v4497 = vshrl.u32 %v4496, 7
        %v4498 = vsub.s32 %v4495, %v4497
        %v4499 = vrot.slane %v4491, %v4498
        %v4501 = vunpack.c.l.s4 1983009808
        %v4502 = vunpack.c.0.s8 %v4501
        %v4503 = vlaneseq
        %v4504 = vshrl.u32 %v4503, 7
        %v4505 = vsub.s32 %v4502, %v4504
        %v4506 = vrot.slane %v4492, %v4505
        %v4507 = vcombine.low %v4226, %v4318
        %v4508 = vcombine.high %v4226, %v4318
        %v4510 = vunpack.c.l.s4 1983009808
        %v4511 = vunpack.c.0.s8 %v4510
        %v4512 = vlaneseq
        %v4513 = vshrl.u32 %v4512, 7
        %v4514 = vsub.s32 %v4511, %v4513
        %v4515 = vrot.slane %v4507, %v4514
        %v4517 = vunpack.c.l.s4 1983009808
        %v4518 = vunpack.c.0.s8 %v4517
        %v4519 = vlaneseq
        %v4520 = vshrl.u32 %v4519, 7
        %v4521 = vsub.s32 %v4518, %v4520
        %v4522 = vrot.slane %v4508, %v4521
        %v4523 = vcombine.low %v4467, %v4483
        %v4524 = vcombine.high %v4467, %v4483
        %v4526 = vunpack.c.l.s4 1934713408
        %v4527 = vunpack.c.0.s8 %v4526
        %v4528 = vlaneseq
        %v4529 = vshrl.u32 %v4528, 7
        %v4530 = vsub.s32 %v4527, %v4529
        %v4531 = vrot.slane %v4523, %v4530
        %v4533 = vunpack.c.l.s4 1934713408
        %v4534 = vunpack.c.0.s8 %v4533
        %v4535 = vlaneseq
        %v4536 = vshrl.u32 %v4535, 7
        %v4537 = vsub.s32 %v4534, %v4536
        %v4538 = vrot.slane %v4524, %v4537
        %v4539 = vcombine.low %v4474, %v4490
        %v4540 = vcombine.high %v4474, %v4490
        %v4542 = vunpack.c.l.s4 1934713408
        %v4543 = vunpack.c.0.s8 %v4542
        %v4544 = vlaneseq
        %v4545 = vshrl.u32 %v4544, 7
        %v4546 = vsub.s32 %v4543, %v4545
        %v4547 = vrot.slane %v4539, %v4546
        %v4549 = vunpack.c.l.s4 1934713408
        %v4550 = vunpack.c.0.s8 %v4549
        %v4551 = vlaneseq
        %v4552 = vshrl.u32 %v4551, 7
        %v4553 = vsub.s32 %v4550, %v4552
        %v4554 = vrot.slane %v4540, %v4553
        %v4555 = vcombine.low %v4499, %v4515
        %v4556 = vcombine.high %v4499, %v4515
        %v4558 = vunpack.c.l.s4 1934713408
        %v4559 = vunpack.c.0.s8 %v4558
        %v4560 = vlaneseq
        %v4561 = vshrl.u32 %v4560, 7
        %v4562 = vsub.s32 %v4559, %v4561
        %v4563 = vrot.slane %v4555, %v4562
        %v4565 = vunpack.c.l.s4 1934713408
        %v4566 = vunpack.c.0.s8 %v4565
        %v4567 = vlaneseq
        %v4568 = vshrl.u32 %v4567, 7
        %v4569 = vsub.s32 %v4566, %v4568
        %v4570 = vrot.slane %v4556, %v4569
        %v4571 = vcombine.low %v4506, %v4522
        %v4572 = vcombine.high %v4506, %v4522
        %v4574 = vunpack.c.l.s4 1934713408
        %v4575 = vunpack.c.0.s8 %v4574
        %v4576 = vlaneseq
        %v4577 = vshrl.u32 %v4576, 7
        %v4578 = vsub.s32 %v4575, %v4577
        %v4579 = vrot.slane %v4571, %v4578
        %v4581 = vunpack.c.l.s4 1934713408
        %v4582 = vunpack.c.0.s8 %v4581
        %v4583 = vlaneseq
        %v4584 = vshrl.u32 %v4583, 7
        %v4585 = vsub.s32 %v4582, %v4584
        %v4586 = vrot.slane %v4572, %v4585
        %v4587 = vcombine.low %v4531, %v4563
        %v4588 = vcombine.high %v4531, %v4563
        %v4589 = vcombine.low %v4538, %v4570
        %v4590 = vcombine.high %v4538, %v4570
        %v4591 = vcombine.low %v4547, %v4579
        %v4592 = vcombine.high %v4547, %v4579
        %v4593 = vcombine.low %v4554, %v4586
        %v4594 = vcombine.high %v4554, %v4586
        %v4595 = vcombine.low %v4451, %v4453
        %v4596 = vcombine.high %v4451, %v4453
        %v4598 = vunpack.c.l.s4 1983009808
        %v4599 = vunpack.c.0.s8 %v4598
        %v4600 = vlaneseq
        %v4601 = vshrl.u32 %v4600, 7
        %v4602 = vsub.s32 %v4599, %v4601
        %v4603 = vrot.slane %v4595, %v4602
        %v4605 = vunpack.c.l.s4 1983009808
        %v4606 = vunpack.c.0.s8 %v4605
        %v4607 = vlaneseq
        %v4608 = vshrl.u32 %v4607, 7
        %v4609 = vsub.s32 %v4606, %v4608
        %v4610 = vrot.slane %v4596, %v4609
        %v4611 = vcombine.low %v4452, %v4454
        %v4612 = vcombine.high %v4452, %v4454
        %v4614 = vunpack.c.l.s4 1983009808
        %v4615 = vunpack.c.0.s8 %v4614
        %v4616 = vlaneseq
        %v4617 = vshrl.u32 %v4616, 7
        %v4618 = vsub.s32 %v4615, %v4617
        %v4619 = vrot.slane %v4611, %v4618
        %v4621 = vunpack.c.l.s4 1983009808
        %v4622 = vunpack.c.0.s8 %v4621
        %v4623 = vlaneseq
        %v4624 = vshrl.u32 %v4623, 7
        %v4625 = vsub.s32 %v4622, %v4624
        %v4626 = vrot.slane %v4612, %v4625
        %v4627 = vcombine.low %v4455, %v4457
        %v4628 = vcombine.high %v4455, %v4457
        %v4630 = vunpack.c.l.s4 1983009808
        %v4631 = vunpack.c.0.s8 %v4630
        %v4632 = vlaneseq
        %v4633 = vshrl.u32 %v4632, 7
        %v4634 = vsub.s32 %v4631, %v4633
        %v4635 = vrot.slane %v4627, %v4634
        %v4637 = vunpack.c.l.s4 1983009808
        %v4638 = vunpack.c.0.s8 %v4637
        %v4639 = vlaneseq
        %v4640 = vshrl.u32 %v4639, 7
        %v4641 = vsub.s32 %v4638, %v4640
        %v4642 = vrot.slane %v4628, %v4641
        %v4643 = vcombine.low %v4456, %v4458
        %v4644 = vcombine.high %v4456, %v4458
        %v4646 = vunpack.c.l.s4 1983009808
        %v4647 = vunpack.c.0.s8 %v4646
        %v4648 = vlaneseq
        %v4649 = vshrl.u32 %v4648, 7
        %v4650 = vsub.s32 %v4647, %v4649
        %v4651 = vrot.slane %v4643, %v4650
        %v4653 = vunpack.c.l.s4 1983009808
        %v4654 = vunpack.c.0.s8 %v4653
        %v4655 = vlaneseq
        %v4656 = vshrl.u32 %v4655, 7
        %v4657 = vsub.s32 %v4654, %v4656
        %v4658 = vrot.slane %v4644, %v4657
        %v4659 = vcombine.low %v4603, %v4619
        %v4660 = vcombine.high %v4603, %v4619
        %v4662 = vunpack.c.l.s4 1934713408
        %v4663 = vunpack.c.0.s8 %v4662
        %v4664 = vlaneseq
        %v4665 = vshrl.u32 %v4664, 7
        %v4666 = vsub.s32 %v4663, %v4665
        %v4667 = vrot.slane %v4659, %v4666
        %v4669 = vunpack.c.l.s4 1934713408
        %v4670 = vunpack.c.0.s8 %v4669
        %v4671 = vlaneseq
        %v4672 = vshrl.u32 %v4671, 7
        %v4673 = vsub.s32 %v4670, %v4672
        %v4674 = vrot.slane %v4660, %v4673
        %v4675 = vcombine.low %v4610, %v4626
        %v4676 = vcombine.high %v4610, %v4626
        %v4678 = vunpack.c.l.s4 1934713408
        %v4679 = vunpack.c.0.s8 %v4678
        %v4680 = vlaneseq
        %v4681 = vshrl.u32 %v4680, 7
        %v4682 = vsub.s32 %v4679, %v4681
        %v4683 = vrot.slane %v4675, %v4682
        %v4685 = vunpack.c.l.s4 1934713408
        %v4686 = vunpack.c.0.s8 %v4685
        %v4687 = vlaneseq
        %v4688 = vshrl.u32 %v4687, 7
        %v4689 = vsub.s32 %v4686, %v4688
        %v4690 = vrot.slane %v4676, %v4689
        %v4691 = vcombine.low %v4635, %v4651
        %v4692 = vcombine.high %v4635, %v4651
        %v4694 = vunpack.c.l.s4 1934713408
        %v4695 = vunpack.c.0.s8 %v4694
        %v4696 = vlaneseq
        %v4697 = vshrl.u32 %v4696, 7
        %v4698 = vsub.s32 %v4695, %v4697
        %v4699 = vrot.slane %v4691, %v4698
        %v4701 = vunpack.c.l.s4 1934713408
        %v4702 = vunpack.c.0.s8 %v4701
        %v4703 = vlaneseq
        %v4704 = vshrl.u32 %v4703, 7
        %v4705 = vsub.s32 %v4702, %v4704
        %v4706 = vrot.slane %v4692, %v4705
        %v4707 = vcombine.low %v4642, %v4658
        %v4708 = vcombine.high %v4642, %v4658
        %v4710 = vunpack.c.l.s4 1934713408
        %v4711 = vunpack.c.0.s8 %v4710
        %v4712 = vlaneseq
        %v4713 = vshrl.u32 %v4712, 7
        %v4714 = vsub.s32 %v4711, %v4713
        %v4715 = vrot.slane %v4707, %v4714
        %v4717 = vunpack.c.l.s4 1934713408
        %v4718 = vunpack.c.0.s8 %v4717
        %v4719 = vlaneseq
        %v4720 = vshrl.u32 %v4719, 7
        %v4721 = vsub.s32 %v4718, %v4720
        %v4722 = vrot.slane %v4708, %v4721
        %v4723 = vcombine.low %v4667, %v4699
        %v4724 = vcombine.high %v4667, %v4699
        %v4725 = vcombine.low %v4674, %v4706
        %v4726 = vcombine.high %v4674, %v4706
        %v4727 = vcombine.low %v4683, %v4715
        %v4728 = vcombine.high %v4683, %v4715
        %v4729 = vcombine.low %v4690, %v4722
        %v4730 = vcombine.high %v4690, %v4722
        %v4731 = vcombine.low %v4587, %v4589
        %v4732 = vcombine.high %v4587, %v4589
        %v4734 = vunpack.c.l.s4 1983009808
        %v4735 = vunpack.c.0.s8 %v4734
        %v4736 = vlaneseq
        %v4737 = vshrl.u32 %v4736, 7
        %v4738 = vsub.s32 %v4735, %v4737
        %v4739 = vrot.slane %v4731, %v4738
        %v4741 = vunpack.c.l.s4 1983009808
        %v4742 = vunpack.c.0.s8 %v4741
        %v4743 = vlaneseq
        %v4744 = vshrl.u32 %v4743, 7
        %v4745 = vsub.s32 %v4742, %v4744
        %v4746 = vrot.slane %v4732, %v4745
        %v4747 = vcombine.low %v4588, %v4590
        %v4748 = vcombine.high %v4588, %v4590
        %v4750 = vunpack.c.l.s4 1983009808
        %v4751 = vunpack.c.0.s8 %v4750
        %v4752 = vlaneseq
        %v4753 = vshrl.u32 %v4752, 7
        %v4754 = vsub.s32 %v4751, %v4753
        %v4755 = vrot.slane %v4747, %v4754
        %v4757 = vunpack.c.l.s4 1983009808
        %v4758 = vunpack.c.0.s8 %v4757
        %v4759 = vlaneseq
        %v4760 = vshrl.u32 %v4759, 7
        %v4761 = vsub.s32 %v4758, %v4760
        %v4762 = vrot.slane %v4748, %v4761
        %v4763 = vcombine.low %v4591, %v4593
        %v4764 = vcombine.high %v4591, %v4593
        %v4766 = vunpack.c.l.s4 1983009808
        %v4767 = vunpack.c.0.s8 %v4766
        %v4768 = vlaneseq
        %v4769 = vshrl.u32 %v4768, 7
        %v4770 = vsub.s32 %v4767, %v4769
        %v4771 = vrot.slane %v4763, %v4770
        %v4773 = vunpack.c.l.s4 1983009808
        %v4774 = vunpack.c.0.s8 %v4773
        %v4775 = vlaneseq
        %v4776 = vshrl.u32 %v4775, 7
        %v4777 = vsub.s32 %v4774, %v4776
        %v4778 = vrot.slane %v4764, %v4777
        %v4779 = vcombine.low %v4592, %v4594
        %v4780 = vcombine.high %v4592, %v4594
        %v4782 = vunpack.c.l.s4 1983009808
        %v4783 = vunpack.c.0.s8 %v4782
        %v4784 = vlaneseq
        %v4785 = vshrl.u32 %v4784, 7
        %v4786 = vsub.s32 %v4783, %v4785
        %v4787 = vrot.slane %v4779, %v4786
        %v4789 = vunpack.c.l.s4 1983009808
        %v4790 = vunpack.c.0.s8 %v4789
        %v4791 = vlaneseq
        %v4792 = vshrl.u32 %v4791, 7
        %v4793 = vsub.s32 %v4790, %v4792
        %v4794 = vrot.slane %v4780, %v4793
        %v4795 = vcombine.low %v4739, %v4755
        %v4796 = vcombine.high %v4739, %v4755
        %v4798 = vunpack.c.l.s4 1934713408
        %v4799 = vunpack.c.0.s8 %v4798
        %v4800 = vlaneseq
        %v4801 = vshrl.u32 %v4800, 7
        %v4802 = vsub.s32 %v4799, %v4801
        %v4803 = vrot.slane %v4795, %v4802
        %v4805 = vunpack.c.l.s4 1934713408
        %v4806 = vunpack.c.0.s8 %v4805
        %v4807 = vlaneseq
        %v4808 = vshrl.u32 %v4807, 7
        %v4809 = vsub.s32 %v4806, %v4808
        %v4810 = vrot.slane %v4796, %v4809
        %v4811 = vcombine.low %v4746, %v4762
        %v4812 = vcombine.high %v4746, %v4762
        %v4814 = vunpack.c.l.s4 1934713408
        %v4815 = vunpack.c.0.s8 %v4814
        %v4816 = vlaneseq
        %v4817 = vshrl.u32 %v4816, 7
        %v4818 = vsub.s32 %v4815, %v4817
        %v4819 = vrot.slane %v4811, %v4818
        %v4821 = vunpack.c.l.s4 1934713408
        %v4822 = vunpack.c.0.s8 %v4821
        %v4823 = vlaneseq
        %v4824 = vshrl.u32 %v4823, 7
        %v4825 = vsub.s32 %v4822, %v4824
        %v4826 = vrot.slane %v4812, %v4825
        %v4827 = vcombine.low %v4771, %v4787
        %v4828 = vcombine.high %v4771, %v4787
        %v4830 = vunpack.c.l.s4 1934713408
        %v4831 = vunpack.c.0.s8 %v4830
        %v4832 = vlaneseq
        %v4833 = vshrl.u32 %v4832, 7
        %v4834 = vsub.s32 %v4831, %v4833
        %v4835 = vrot.slane %v4827, %v4834
        %v4837 = vunpack.c.l.s4 1934713408
        %v4838 = vunpack.c.0.s8 %v4837
        %v4839 = vlaneseq
        %v4840 = vshrl.u32 %v4839, 7
        %v4841 = vsub.s32 %v4838, %v4840
        %v4842 = vrot.slane %v4828, %v4841
        %v4843 = vcombine.low %v4778, %v4794
        %v4844 = vcombine.high %v4778, %v4794
        %v4846 = vunpack.c.l.s4 1934713408
        %v4847 = vunpack.c.0.s8 %v4846
        %v4848 = vlaneseq
        %v4849 = vshrl.u32 %v4848, 7
        %v4850 = vsub.s32 %v4847, %v4849
        %v4851 = vrot.slane %v4843, %v4850
        %v4853 = vunpack.c.l.s4 1934713408
        %v4854 = vunpack.c.0.s8 %v4853
        %v4855 = vlaneseq
        %v4856 = vshrl.u32 %v4855, 7
        %v4857 = vsub.s32 %v4854, %v4856
        %v4858 = vrot.slane %v4844, %v4857
        %v4859 = vcombine.low %v4803, %v4835
        %v4860 = vcombine.high %v4803, %v4835
        %v4861 = vcombine.low %v4810, %v4842
        %v4862 = vcombine.high %v4810, %v4842
        %v4863 = vcombine.low %v4819, %v4851
        %v4864 = vcombine.high %v4819, %v4851
        %v4865 = vcombine.low %v4826, %v4858
        %v4866 = vcombine.high %v4826, %v4858
        %4869 = vrot.lane.b32.xlu0 %v4724, 4
        %v4870 = vpop.permute.xlu0 %4869
        %4871 = vrot.lane.b32.xlu0 %v4860, 4
        %v4872 = vpop.permute.xlu0 %4871
        %4877 = vrot.lane.b32.xlu0 %v4725, 8
        %v4878 = vpop.permute.xlu0 %4877
        %4879 = vrot.lane.b32.xlu0 %v4861, 8
        %v4880 = vpop.permute.xlu0 %4879
        %4885 = vrot.lane.b32.xlu0 %v4726, 12
        %v4886 = vpop.permute.xlu0 %4885
        %4887 = vrot.lane.b32.xlu0 %v4862, 12
        %v4888 = vpop.permute.xlu0 %4887
        %4893 = vrot.lane.b32.xlu0 %v4727, 16
        %v4894 = vpop.permute.xlu0 %4893
        %4895 = vrot.lane.b32.xlu0 %v4863, 16
        %v4896 = vpop.permute.xlu0 %4895
        %4901 = vrot.lane.b32.xlu0 %v4728, 20
        %v4902 = vpop.permute.xlu0 %4901
        %4903 = vrot.lane.b32.xlu0 %v4864, 20
        %v4904 = vpop.permute.xlu0 %4903
        %4909 = vrot.lane.b32.xlu0 %v4729, 24
        %v4910 = vpop.permute.xlu0 %4909
        %4911 = vrot.lane.b32.xlu0 %v4865, 24
        %v4912 = vpop.permute.xlu0 %4911
        %4917 = vrot.lane.b32.xlu0 %v4730, 28
        %v4918 = vpop.permute.xlu0 %4917
        %4919 = vrot.lane.b32.xlu0 %v4866, 28
        %v4920 = vpop.permute.xlu0 %4919
        %v4923 = vsel %vm2640, %v4723, %v4870
        %v4924 = vsel %vm2640, %v4859, %v4872
        %v4925 = vsel %vm3393, %v4923, %v4878
        %v4926 = vsel %vm3393, %v4924, %v4880
        %vm4927 = vcmask 97280
        %v4928 = vsel %vm4927, %v4925, %v4886
        %v4929 = vsel %vm4927, %v4926, %v4888
        %vm4930 = vcmask 130048
        %v4931 = vsel %vm4930, %v4928, %v4894
        %v4932 = vsel %vm4930, %v4929, %v4896
        %vm4933 = vcmask 162816
        %v4934 = vsel %vm4933, %v4931, %v4902
        %v4935 = vsel %vm4933, %v4932, %v4904
        %vm4936 = vcmask 195584
        %v4937 = vsel %vm4936, %v4934, %v4910
        %v4938 = vsel %vm4936, %v4935, %v4912
        %vm4939 = vcmask 228352
        %v4940 = vsel %vm4939, %v4937, %v4918
        %v4941 = vsel %vm4939, %v4938, %v4920
        %v4942 = vpack.c.bf16 %v4941, %v4940
        %v4943 = vld [vmem:[%s610] sm:$0xf]
        %v4944 = vld [vmem:[%s610 + $0x4] sm:$0xf]
        %v4945 = vld [vmem:[%s610 + $0x8] sm:$0xf]
        %v4946 = vld [vmem:[%s610 + $0xc] sm:$0xf]
        %v4951 = vunpack.c.l.b16 %v4943
        %v4952 = vunpack.c.l.b16 %v4944
        %v4953 = vunpack.c.l.b16 %v4945
        %v4954 = vunpack.c.l.b16 %v4946
        %v4955 = vpack.c.b16 %v4952, %v4951
        %v4956 = vpack.c.b16 %v4954, %v4953
        %v4960 = vsel %vm669, %v4942, 0
        %4962 = vmatprep.subr.bf16.mxu0 0
        %4963 = vmatpush1.bf16.msra.mxu0 %v4955
        %4964 = vmatprep.subr.bf16.mxu0 0
        %4965 = vmatpush1.bf16.msra.mxu0 %v4956
        %4966 = vmatprep.subr.bf16.mxu0 0
        %4967 = vmatpush1.bf16.msra.mxu0 0
        %4968 = vmatprep.subr.bf16.mxu0 0
        %4969 = vmatpush1.bf16.msra.mxu0 0
        %4970 = vmatprep.subr.bf16.mxu0 0
        %4971 = vmatpush1.bf16.msra.mxu0 0
        %4972 = vmatprep.subr.bf16.mxu0 0
        %4973 = vmatpush1.bf16.msra.mxu0 0
        %4974 = vmatprep.subr.bf16.mxu0 0
        %4975 = vmatpush1.bf16.msra.mxu0 0
        %4976 = vmatprep.subr.bf16.mxu0 0
        %4977 = vmatpush1.bf16.msra.mxu0 0
        %4978 = vmatprep.subr.bf16.mxu0 0
        %4979 = vmatpush1.bf16.msra.mxu0 0
        %4980 = vmatprep.subr.bf16.mxu0 0
        %4981 = vmatpush1.bf16.msra.mxu0 0
        %4982 = vmatprep.subr.bf16.mxu0 0
        %4983 = vmatpush1.bf16.msra.mxu0 0
        %4984 = vmatprep.subr.bf16.mxu0 0
        %4985 = vmatpush1.bf16.msra.mxu0 0
        %4986 = vmatprep.subr.bf16.mxu0 0
        %4987 = vmatpush1.bf16.msra.mxu0 0
        %4988 = vmatprep.subr.bf16.mxu0 0
        %4989 = vmatpush1.bf16.msra.mxu0 0
        %4990 = vmatprep.subr.bf16.mxu0 0
        %4991 = vmatpush1.bf16.msra.mxu0 0
        %4992 = vmatprep.subr.bf16.mxu0 0
        %4993 = vmatpush1.bf16.msra.mxu0 0
        %4994 = vmatprep.mubr.bf16.mxu0 0
        %4995 = vmatmul.mubr.bf16.gmra.mrb[0].mxu0 %v4960
        %v4996 = vpop.f32.mrb[0].mxu0
        %v4997 = vadd.f32 0.0, %v4996
        %v4998 = vpop.f32.mrb[0].mxu0
        %v4999 = vpop.f32.mrb[0].mxu0
        %v5000 = vadd.f32 0.0, %v4999
        %v5001 = vpop.f32.mrb[0].mxu0
        %5002 = vdwg.mxu0
        %v5003 = vadd.f32 %v650, %v4997
        %v5004 = vadd.f32 %v651, %v5000
        %v5005 = vsel %vm669, %v5003, 0.0
        %v5006 = vsel %vm669, %v5004, 0.0
        %v5007 = vadd.f32 %v5005, %v5006
        %v5008 = vrot.slane %v5007, 4
        %v5009 = vadd.f32 %v5007, %v5008
        %v5010 = vrot.slane %v5009, 2
        %v5011 = vadd.f32 %v5009, %v5010
        %v5012 = vrot.slane %v5011, 1
        %v5013 = vadd.f32 %v5011, %v5012
        %v5014 = vrcp.pop 16.0
        %v5015 = vmul.f32 %v5013, %v5014
        %v5016 = vmul.f32 %v5003, %v5003
        %v5017 = vmul.f32 %v5004, %v5004
        %v5018 = vsel %vm669, %v5016, 0.0
        %v5019 = vsel %vm669, %v5017, 0.0
        %v5020 = vadd.f32 %v5018, %v5019
        %v5021 = vrot.slane %v5020, 4
        %v5022 = vadd.f32 %v5020, %v5021
        %v5023 = vrot.slane %v5022, 2
        %v5024 = vadd.f32 %v5022, %v5023
        %v5025 = vrot.slane %v5024, 1
        %v5026 = vadd.f32 %v5024, %v5025
        %v5027 = vmul.f32 %v5026, %v5014
        %v5028 = vmul.f32 %v5015, %v5015
        %v5029 = vsub.f32 %v5027, %v5028
        %v5030 = vsub.f32 %v5003, %v5015
        %v5031 = vsub.f32 %v5004, %v5015
        %v5032 = vadd.f32 %v5029, 1e-05
        %v5033 = vrsqrt.pop %v5032
        %v5034 = vmul.f32 %v5030, %v5033
        %v5035 = vmul.f32 %v5031, %v5033
        %v5036 = vld [vmem:[%s613] sm:$0x1]
        %v5038 = vlaneseq
        %v5039 = vshrl.u32 %v5038, 7
        %v5040 = vsub.s32 0, %v5039
        %v5041 = vrot.slane %v5036, %v5040
        %v5043 = vmul.f32 %v5034, %v5041
        %v5044 = vmul.f32 %v5035, %v5041
        %v5045 = vld [vmem:[%s616] sm:$0x1]
        %v5047 = vlaneseq
        %v5048 = vshrl.u32 %v5047, 7
        %v5049 = vsub.s32 0, %v5048
        %v5050 = vrot.slane %v5045, %v5049
        %v5052 = vadd.f32 %v5043, %v5050
        %v5053 = vadd.f32 %v5044, %v5050
        %v5054 = vpack.c.bf16 %v5053, %v5052
        %v5055 = vld [vmem:[%s621] sm:$0xff]
        %v5056 = vld [vmem:[%s621 + $0x8] sm:$0xff]
        %v5057 = vld [vmem:[%s621 + $0x10] sm:$0xff]
        %v5058 = vld [vmem:[%s621 + $0x18] sm:$0xff]
        %v5059 = vld [vmem:[%s621 + $0x20] sm:$0xff]
        %v5060 = vld [vmem:[%s621 + $0x28] sm:$0xff]
        %v5061 = vld [vmem:[%s621 + $0x30] sm:$0xff]
        %v5062 = vld [vmem:[%s621 + $0x38] sm:$0xff]
        %v5063 = vld [vmem:[%s625] sm:$0xf]
        %v5065 = vlaneseq
        %v5066 = vshrl.u32 %v5065, 7
        %v5067 = vsub.s32 0, %v5066
        %v5068 = vrot.slane %v5063, %v5067
        %v5069 = vlaneseq
        %v5070 = vshrl.u32 %v5069, 7
        %v5071 = vsub.s32 1, %v5070
        %v5072 = vrot.slane %v5063, %v5071
        %v5073 = vlaneseq
        %v5074 = vshrl.u32 %v5073, 7
        %v5075 = vsub.s32 2, %v5074
        %v5076 = vrot.slane %v5063, %v5075
        %v5077 = vlaneseq
        %v5078 = vshrl.u32 %v5077, 7
        %v5079 = vsub.s32 3, %v5078
        %v5080 = vrot.slane %v5063, %v5079
        %v5093 = vunpack.c.l.b16 %v5055
        %v5094 = vunpack.c.h.b16 %v5055
        %v5095 = vunpack.c.l.b16 %v5056
        %v5096 = vunpack.c.h.b16 %v5056
        %v5097 = vunpack.c.l.b16 %v5057
        %v5098 = vunpack.c.h.b16 %v5057
        %v5099 = vunpack.c.l.b16 %v5058
        %v5100 = vunpack.c.h.b16 %v5058
        %v5101 = vunpack.c.l.b16 %v5059
        %v5102 = vunpack.c.h.b16 %v5059
        %v5103 = vunpack.c.l.b16 %v5060
        %v5104 = vunpack.c.h.b16 %v5060
        %v5105 = vunpack.c.l.b16 %v5061
        %v5106 = vunpack.c.h.b16 %v5061
        %v5107 = vunpack.c.l.b16 %v5062
        %v5108 = vunpack.c.h.b16 %v5062
        %v5109 = vpack.c.b16 %v5097, %v5093
        %v5110 = vpack.c.b16 %v5098, %v5094
        %v5111 = vpack.c.b16 %v5099, %v5095
        %v5112 = vpack.c.b16 %v5100, %v5096
        %v5113 = vpack.c.b16 %v5105, %v5101
        %v5114 = vpack.c.b16 %v5106, %v5102
        %v5115 = vpack.c.b16 %v5107, %v5103
        %v5116 = vpack.c.b16 %v5108, %v5104
        %v5126 = vsel %vm669, %v5054, 0
        %5128 = vmatprep.subr.bf16.mxu0 %v5110
        %5129 = vmatpush1.bf16.msra.mxu0 %v5109
        %5130 = vmatprep.subr.bf16.mxu0 %v5114
        %5131 = vmatpush1.bf16.msra.mxu0 %v5113
        %5132 = vmatprep.subr.bf16.mxu0 0
        %5133 = vmatpush1.bf16.msra.mxu0 0
        %5134 = vmatprep.subr.bf16.mxu0 0
        %5135 = vmatpush1.bf16.msra.mxu0 0
        %5136 = vmatprep.subr.bf16.mxu0 0
        %5137 = vmatpush1.bf16.msra.mxu0 0
        %5138 = vmatprep.subr.bf16.mxu0 0
        %5139 = vmatpush1.bf16.msra.mxu0 0
        %5140 = vmatprep.subr.bf16.mxu0 0
        %5141 = vmatpush1.bf16.msra.mxu0 0
        %5142 = vmatprep.subr.bf16.mxu0 0
        %5143 = vmatpush1.bf16.msra.mxu0 0
        %5144 = vmatprep.subr.bf16.mxu0 0
        %5145 = vmatpush1.bf16.msra.mxu0 0
        %5146 = vmatprep.subr.bf16.mxu0 0
        %5147 = vmatpush1.bf16.msra.mxu0 0
        %5148 = vmatprep.subr.bf16.mxu0 0
        %5149 = vmatpush1.bf16.msra.mxu0 0
        %5150 = vmatprep.subr.bf16.mxu0 0
        %5151 = vmatpush1.bf16.msra.mxu0 0
        %5152 = vmatprep.subr.bf16.mxu0 0
        %5153 = vmatpush1.bf16.msra.mxu0 0
        %5154 = vmatprep.subr.bf16.mxu0 0
        %5155 = vmatpush1.bf16.msra.mxu0 0
        %5156 = vmatprep.subr.bf16.mxu0 0
        %5157 = vmatpush1.bf16.msra.mxu0 0
        %5158 = vmatprep.subr.bf16.mxu0 0
        %5159 = vmatpush1.bf16.msra.mxu0 0
        %5160 = vmatprep.mubr.bf16.mxu0 0
        %5161 = vmatmul.mubr.bf16.gmra.mrb[0].mxu0 %v5126
        %v5162 = vpop.f32.mrb[0].mxu0
        %v5163 = vadd.f32 %v5068, %v5162
        %v5164 = vpop.f32.mrb[0].mxu0
        %v5165 = vadd.f32 %v5072, %v5164
        %v5166 = vpop.f32.mrb[0].mxu0
        %v5167 = vadd.f32 %v5068, %v5166
        %v5168 = vpop.f32.mrb[0].mxu0
        %v5169 = vadd.f32 %v5072, %v5168
        %5170 = vdwg.mxu0
        %5171 = vmatprep.subr.bf16.mxu0 %v5112
        %5172 = vmatpush1.bf16.msra.mxu0 %v5111
        %5173 = vmatprep.subr.bf16.mxu0 %v5116
        %5174 = vmatpush1.bf16.msra.mxu0 %v5115
        %5175 = vmatprep.subr.bf16.mxu0 0
        %5176 = vmatpush1.bf16.msra.mxu0 0
        %5177 = vmatprep.subr.bf16.mxu0 0
        %5178 = vmatpush1.bf16.msra.mxu0 0
        %5179 = vmatprep.subr.bf16.mxu0 0
        %5180 = vmatpush1.bf16.msra.mxu0 0
        %5181 = vmatprep.subr.bf16.mxu0 0
        %5182 = vmatpush1.bf16.msra.mxu0 0
        %5183 = vmatprep.subr.bf16.mxu0 0
        %5184 = vmatpush1.bf16.msra.mxu0 0
        %5185 = vmatprep.subr.bf16.mxu0 0
        %5186 = vmatpush1.bf16.msra.mxu0 0
        %5187 = vmatprep.subr.bf16.mxu0 0
        %5188 = vmatpush1.bf16.msra.mxu0 0
        %5189 = vmatprep.subr.bf16.mxu0 0
        %5190 = vmatpush1.bf16.msra.mxu0 0
        %5191 = vmatprep.subr.bf16.mxu0 0
        %5192 = vmatpush1.bf16.msra.mxu0 0
        %5193 = vmatprep.subr.bf16.mxu0 0
        %5194 = vmatpush1.bf16.msra.mxu0 0
        %5195 = vmatprep.subr.bf16.mxu0 0
        %5196 = vmatpush1.bf16.msra.mxu0 0
        %5197 = vmatprep.subr.bf16.mxu0 0
        %5198 = vmatpush1.bf16.msra.mxu0 0
        %5199 = vmatprep.subr.bf16.mxu0 0
        %5200 = vmatpush1.bf16.msra.mxu0 0
        %5201 = vmatprep.subr.bf16.mxu0 0
        %5202 = vmatpush1.bf16.msra.mxu0 0
        %5203 = vmatprep.mubr.bf16.mxu0 0
        %5204 = vmatmul.mubr.bf16.gmra.mrb[0].mxu0 %v5126
        %v5205 = vpop.f32.mrb[0].mxu0
        %v5206 = vadd.f32 %v5076, %v5205
        %v5207 = vpop.f32.mrb[0].mxu0
        %v5208 = vadd.f32 %v5080, %v5207
        %v5209 = vpop.f32.mrb[0].mxu0
        %v5210 = vadd.f32 %v5076, %v5209
        %v5211 = vpop.f32.mrb[0].mxu0
        %v5212 = vadd.f32 %v5080, %v5211
        %5213 = vdwg.mxu0
        %v5214 = vmax.f32 %v5163, 0.0
        %v5215 = vmax.f32 %v5165, 0.0
        %v5216 = vmax.f32 %v5206, 0.0
        %v5217 = vmax.f32 %v5208, 0.0
        %v5218 = vmax.f32 %v5167, 0.0
        %v5219 = vmax.f32 %v5169, 0.0
        %v5220 = vmax.f32 %v5210, 0.0
        %v5221 = vmax.f32 %v5212, 0.0
        %v5222 = vpack.c.bf16 %v5218, %v5214
        %v5223 = vpack.c.bf16 %v5219, %v5215
        %v5224 = vpack.c.bf16 %v5220, %v5216
        %v5225 = vpack.c.bf16 %v5221, %v5217
        %v5226 = vld [vmem:[%s630] sm:$0xf]
        %v5227 = vld [vmem:[%s630 + $0x4] sm:$0xf]
        %v5228 = vld [vmem:[%s630 + $0x8] sm:$0xf]
        %v5229 = vld [vmem:[%s630 + $0xc] sm:$0xf]
        %v5230 = vld [vmem:[%s630 + $0x10] sm:$0xf]
        %v5231 = vld [vmem:[%s630 + $0x14] sm:$0xf]
        %v5232 = vld [vmem:[%s630 + $0x18] sm:$0xf]
        %v5233 = vld [vmem:[%s630 + $0x1c] sm:$0xf]
        %v5234 = vld [vmem:[%s630 + $0x20] sm:$0xf]
        %v5235 = vld [vmem:[%s630 + $0x24] sm:$0xf]
        %v5236 = vld [vmem:[%s630 + $0x28] sm:$0xf]
        %v5237 = vld [vmem:[%s630 + $0x2c] sm:$0xf]
        %v5238 = vld [vmem:[%s630 + $0x30] sm:$0xf]
        %v5239 = vld [vmem:[%s630 + $0x34] sm:$0xf]
        %v5240 = vld [vmem:[%s630 + $0x38] sm:$0xf]
        %v5241 = vld [vmem:[%s630 + $0x3c] sm:$0xf]
        %v5242 = vld [vmem:[%s630 + $0x40] sm:$0xf]
        %v5243 = vld [vmem:[%s630 + $0x44] sm:$0xf]
        %v5244 = vld [vmem:[%s630 + $0x48] sm:$0xf]
        %v5245 = vld [vmem:[%s630 + $0x4c] sm:$0xf]
        %v5246 = vld [vmem:[%s630 + $0x50] sm:$0xf]
        %v5247 = vld [vmem:[%s630 + $0x54] sm:$0xf]
        %v5248 = vld [vmem:[%s630 + $0x58] sm:$0xf]
        %v5249 = vld [vmem:[%s630 + $0x5c] sm:$0xf]
        %v5250 = vld [vmem:[%s630 + $0x60] sm:$0xf]
        %v5251 = vld [vmem:[%s630 + $0x64] sm:$0xf]
        %v5252 = vld [vmem:[%s630 + $0x68] sm:$0xf]
        %v5253 = vld [vmem:[%s630 + $0x6c] sm:$0xf]
        %v5254 = vld [vmem:[%s630 + $0x70] sm:$0xf]
        %v5255 = vld [vmem:[%s630 + $0x74] sm:$0xf]
        %v5256 = vld [vmem:[%s630 + $0x78] sm:$0xf]
        %v5257 = vld [vmem:[%s630 + $0x7c] sm:$0xf]
        %v5258 = vld [vmem:[%s630 + $0x80] sm:$0xf]
        %v5259 = vld [vmem:[%s630 + $0x84] sm:$0xf]
        %v5260 = vld [vmem:[%s630 + $0x88] sm:$0xf]
        %v5261 = vld [vmem:[%s630 + $0x8c] sm:$0xf]
        %v5262 = vld [vmem:[%s630 + $0x90] sm:$0xf]
        %v5263 = vld [vmem:[%s630 + $0x94] sm:$0xf]
        %v5264 = vld [vmem:[%s630 + $0x98] sm:$0xf]
        %v5265 = vld [vmem:[%s630 + $0x9c] sm:$0xf]
        %v5266 = vld [vmem:[%s630 + $0xa0] sm:$0xf]
        %v5267 = vld [vmem:[%s630 + $0xa4] sm:$0xf]
        %v5268 = vld [vmem:[%s630 + $0xa8] sm:$0xf]
        %v5269 = vld [vmem:[%s630 + $0xac] sm:$0xf]
        %v5270 = vld [vmem:[%s630 + $0xb0] sm:$0xf]
        %v5271 = vld [vmem:[%s630 + $0xb4] sm:$0xf]
        %v5272 = vld [vmem:[%s630 + $0xb8] sm:$0xf]
        %v5273 = vld [vmem:[%s630 + $0xbc] sm:$0xf]
        %v5274 = vld [vmem:[%s630 + $0xc0] sm:$0xf]
        %v5275 = vld [vmem:[%s630 + $0xc4] sm:$0xf]
        %v5276 = vld [vmem:[%s630 + $0xc8] sm:$0xf]
        %v5277 = vld [vmem:[%s630 + $0xcc] sm:$0xf]
        %v5278 = vld [vmem:[%s630 + $0xd0] sm:$0xf]
        %v5279 = vld [vmem:[%s630 + $0xd4] sm:$0xf]
        %v5280 = vld [vmem:[%s630 + $0xd8] sm:$0xf]
        %v5281 = vld [vmem:[%s630 + $0xdc] sm:$0xf]
        %v5282 = vld [vmem:[%s630 + $0xe0] sm:$0xf]
        %v5283 = vld [vmem:[%s630 + $0xe4] sm:$0xf]
        %v5284 = vld [vmem:[%s630 + $0xe8] sm:$0xf]
        %v5285 = vld [vmem:[%s630 + $0xec] sm:$0xf]
        %v5286 = vld [vmem:[%s630 + $0xf0] sm:$0xf]
        %v5287 = vld [vmem:[%s630 + $0xf4] sm:$0xf]
        %v5288 = vld [vmem:[%s630 + $0xf8] sm:$0xf]
        %v5289 = vld [vmem:[%s630 + $0xfc] sm:$0xf]
        %v5290 = vld [vmem:[%s633] sm:$0x1]
        %v5292 = vlaneseq
        %v5293 = vshrl.u32 %v5292, 7
        %v5294 = vsub.s32 0, %v5293
        %v5295 = vrot.slane %v5290, %v5294
        %v5361 = vunpack.c.l.b16 %v5226
        %v5362 = vunpack.c.l.b16 %v5227
        %v5363 = vunpack.c.l.b16 %v5228
        %v5364 = vunpack.c.l.b16 %v5229
        %v5365 = vunpack.c.l.b16 %v5230
        %v5366 = vunpack.c.l.b16 %v5231
        %v5367 = vunpack.c.l.b16 %v5232
        %v5368 = vunpack.c.l.b16 %v5233
        %v5369 = vunpack.c.l.b16 %v5234
        %v5370 = vunpack.c.l.b16 %v5235
        %v5371 = vunpack.c.l.b16 %v5236
        %v5372 = vunpack.c.l.b16 %v5237
        %v5373 = vunpack.c.l.b16 %v5238
        %v5374 = vunpack.c.l.b16 %v5239
        %v5375 = vunpack.c.l.b16 %v5240
        %v5376 = vunpack.c.l.b16 %v5241
        %v5377 = vunpack.c.l.b16 %v5242
        %v5378 = vunpack.c.l.b16 %v5243
        %v5379 = vunpack.c.l.b16 %v5244
        %v5380 = vunpack.c.l.b16 %v5245
        %v5381 = vunpack.c.l.b16 %v5246
        %v5382 = vunpack.c.l.b16 %v5247
        %v5383 = vunpack.c.l.b16 %v5248
        %v5384 = vunpack.c.l.b16 %v5249
        %v5385 = vunpack.c.l.b16 %v5250
        %v5386 = vunpack.c.l.b16 %v5251
        %v5387 = vunpack.c.l.b16 %v5252
        %v5388 = vunpack.c.l.b16 %v5253
        %v5389 = vunpack.c.l.b16 %v5254
        %v5390 = vunpack.c.l.b16 %v5255
        %v5391 = vunpack.c.l.b16 %v5256
        %v5392 = vunpack.c.l.b16 %v5257
        %v5393 = vunpack.c.l.b16 %v5258
        %v5394 = vunpack.c.l.b16 %v5259
        %v5395 = vunpack.c.l.b16 %v5260
        %v5396 = vunpack.c.l.b16 %v5261
        %v5397 = vunpack.c.l.b16 %v5262
        %v5398 = vunpack.c.l.b16 %v5263
        %v5399 = vunpack.c.l.b16 %v5264
        %v5400 = vunpack.c.l.b16 %v5265
        %v5401 = vunpack.c.l.b16 %v5266
        %v5402 = vunpack.c.l.b16 %v5267
        %v5403 = vunpack.c.l.b16 %v5268
        %v5404 = vunpack.c.l.b16 %v5269
        %v5405 = vunpack.c.l.b16 %v5270
        %v5406 = vunpack.c.l.b16 %v5271
        %v5407 = vunpack.c.l.b16 %v5272
        %v5408 = vunpack.c.l.b16 %v5273
        %v5409 = vunpack.c.l.b16 %v5274
        %v5410 = vunpack.c.l.b16 %v5275
        %v5411 = vunpack.c.l.b16 %v5276
        %v5412 = vunpack.c.l.b16 %v5277
        %v5413 = vunpack.c.l.b16 %v5278
        %v5414 = vunpack.c.l.b16 %v5279
        %v5415 = vunpack.c.l.b16 %v5280
        %v5416 = vunpack.c.l.b16 %v5281
        %v5417 = vunpack.c.l.b16 %v5282
        %v5418 = vunpack.c.l.b16 %v5283
        %v5419 = vunpack.c.l.b16 %v5284
        %v5420 = vunpack.c.l.b16 %v5285
        %v5421 = vunpack.c.l.b16 %v5286
        %v5422 = vunpack.c.l.b16 %v5287
        %v5423 = vunpack.c.l.b16 %v5288
        %v5424 = vunpack.c.l.b16 %v5289
        %v5425 = vpack.c.b16 %v5362, %v5361
        %v5426 = vpack.c.b16 %v5364, %v5363
        %v5427 = vpack.c.b16 %v5366, %v5365
        %v5428 = vpack.c.b16 %v5368, %v5367
        %v5429 = vpack.c.b16 %v5370, %v5369
        %v5430 = vpack.c.b16 %v5372, %v5371
        %v5431 = vpack.c.b16 %v5374, %v5373
        %v5432 = vpack.c.b16 %v5376, %v5375
        %v5433 = vpack.c.b16 %v5378, %v5377
        %v5434 = vpack.c.b16 %v5380, %v5379
        %v5435 = vpack.c.b16 %v5382, %v5381
        %v5436 = vpack.c.b16 %v5384, %v5383
        %v5437 = vpack.c.b16 %v5386, %v5385
        %v5438 = vpack.c.b16 %v5388, %v5387
        %v5439 = vpack.c.b16 %v5390, %v5389
        %v5440 = vpack.c.b16 %v5392, %v5391
        %v5441 = vpack.c.b16 %v5394, %v5393
        %v5442 = vpack.c.b16 %v5396, %v5395
        %v5443 = vpack.c.b16 %v5398, %v5397
        %v5444 = vpack.c.b16 %v5400, %v5399
        %v5445 = vpack.c.b16 %v5402, %v5401
        %v5446 = vpack.c.b16 %v5404, %v5403
        %v5447 = vpack.c.b16 %v5406, %v5405
        %v5448 = vpack.c.b16 %v5408, %v5407
        %v5449 = vpack.c.b16 %v5410, %v5409
        %v5450 = vpack.c.b16 %v5412, %v5411
        %v5451 = vpack.c.b16 %v5414, %v5413
        %v5452 = vpack.c.b16 %v5416, %v5415
        %v5453 = vpack.c.b16 %v5418, %v5417
        %v5454 = vpack.c.b16 %v5420, %v5419
        %v5455 = vpack.c.b16 %v5422, %v5421
        %v5456 = vpack.c.b16 %v5424, %v5423
        %5489 = vmatprep.subr.bf16.mxu0 0
        %5490 = vmatpush1.bf16.msra.mxu0 %v5425
        %5491 = vmatprep.subr.bf16.mxu0 0
        %5492 = vmatpush1.bf16.msra.mxu0 %v5426
        %5493 = vmatprep.subr.bf16.mxu0 0
        %5494 = vmatpush1.bf16.msra.mxu0 %v5427
        %5495 = vmatprep.subr.bf16.mxu0 0
        %5496 = vmatpush1.bf16.msra.mxu0 %v5428
        %5497 = vmatprep.subr.bf16.mxu0 0
        %5498 = vmatpush1.bf16.msra.mxu0 %v5429
        %5499 = vmatprep.subr.bf16.mxu0 0
        %5500 = vmatpush1.bf16.msra.mxu0 %v5430
        %5501 = vmatprep.subr.bf16.mxu0 0
        %5502 = vmatpush1.bf16.msra.mxu0 %v5431
        %5503 = vmatprep.subr.bf16.mxu0 0
        %5504 = vmatpush1.bf16.msra.mxu0 %v5432
        %5505 = vmatprep.subr.bf16.mxu0 0
        %5506 = vmatpush1.bf16.msra.mxu0 %v5433
        %5507 = vmatprep.subr.bf16.mxu0 0
        %5508 = vmatpush1.bf16.msra.mxu0 %v5434
        %5509 = vmatprep.subr.bf16.mxu0 0
        %5510 = vmatpush1.bf16.msra.mxu0 %v5435
        %5511 = vmatprep.subr.bf16.mxu0 0
        %5512 = vmatpush1.bf16.msra.mxu0 %v5436
        %5513 = vmatprep.subr.bf16.mxu0 0
        %5514 = vmatpush1.bf16.msra.mxu0 %v5437
        %5515 = vmatprep.subr.bf16.mxu0 0
        %5516 = vmatpush1.bf16.msra.mxu0 %v5438
        %5517 = vmatprep.subr.bf16.mxu0 0
        %5518 = vmatpush1.bf16.msra.mxu0 %v5439
        %5519 = vmatprep.subr.bf16.mxu0 0
        %5520 = vmatpush1.bf16.msra.mxu0 %v5440
        %5521 = vmatprep.mubr.bf16.mxu0 %v5223
        %5522 = vmatmul.mubr.bf16.gmra.mrb[0].mxu0 %v5222
        %v5523 = vpop.f32.mrb[0].mxu0
        %v5524 = vadd.f32 %v5295, %v5523
        %v5525 = vpop.f32.mrb[0].mxu0
        %v5526 = vpop.f32.mrb[0].mxu0
        %v5527 = vadd.f32 %v5295, %v5526
        %v5528 = vpop.f32.mrb[0].mxu0
        %5529 = vdwg.mxu0
        %5530 = vmatprep.subr.bf16.mxu0 0
        %5531 = vmatpush1.bf16.msra.mxu0 %v5441
        %5532 = vmatprep.subr.bf16.mxu0 0
        %5533 = vmatpush1.bf16.msra.mxu0 %v5442
        %5534 = vmatprep.subr.bf16.mxu0 0
        %5535 = vmatpush1.bf16.msra.mxu0 %v5443
        %5536 = vmatprep.subr.bf16.mxu0 0
        %5537 = vmatpush1.bf16.msra.mxu0 %v5444
        %5538 = vmatprep.subr.bf16.mxu0 0
        %5539 = vmatpush1.bf16.msra.mxu0 %v5445
        %5540 = vmatprep.subr.bf16.mxu0 0
        %5541 = vmatpush1.bf16.msra.mxu0 %v5446
        %5542 = vmatprep.subr.bf16.mxu0 0
        %5543 = vmatpush1.bf16.msra.mxu0 %v5447
        %5544 = vmatprep.subr.bf16.mxu0 0
        %5545 = vmatpush1.bf16.msra.mxu0 %v5448
        %5546 = vmatprep.subr.bf16.mxu0 0
        %5547 = vmatpush1.bf16.msra.mxu0 %v5449
        %5548 = vmatprep.subr.bf16.mxu0 0
        %5549 = vmatpush1.bf16.msra.mxu0 %v5450
        %5550 = vmatprep.subr.bf16.mxu0 0
        %5551 = vmatpush1.bf16.msra.mxu0 %v5451
        %5552 = vmatprep.subr.bf16.mxu0 0
        %5553 = vmatpush1.bf16.msra.mxu0 %v5452
        %5554 = vmatprep.subr.bf16.mxu0 0
        %5555 = vmatpush1.bf16.msra.mxu0 %v5453
        %5556 = vmatprep.subr.bf16.mxu0 0
        %5557 = vmatpush1.bf16.msra.mxu0 %v5454
        %5558 = vmatprep.subr.bf16.mxu0 0
        %5559 = vmatpush1.bf16.msra.mxu0 %v5455
        %5560 = vmatprep.subr.bf16.mxu0 0
        %5561 = vmatpush1.bf16.msra.mxu0 %v5456
        %5562 = vmatprep.mubr.bf16.mxu0 %v5225
        %5563 = vmatmul.mubr.bf16.gmra.mrb[0].mxu0 %v5224
        %v5564 = vpop.f32.mrb[0].mxu0
        %v5565 = vadd.f32 %v5524, %v5564
        %v5566 = vpop.f32.mrb[0].mxu0
        %v5567 = vpop.f32.mrb[0].mxu0
        %v5568 = vadd.f32 %v5527, %v5567
        %v5569 = vpop.f32.mrb[0].mxu0
        %5570 = vdwg.mxu0
        %v5571 = vadd.f32 %v5052, %v5565
        %v5572 = vadd.f32 %v5053, %v5568
        %v5573 = vsel %vm669, %v5571, 0.0
        %v5574 = vsel %vm669, %v5572, 0.0
        %v5575 = vadd.f32 %v5573, %v5574
        %v5576 = vrot.slane %v5575, 4
        %v5577 = vadd.f32 %v5575, %v5576
        %v5578 = vrot.slane %v5577, 2
        %v5579 = vadd.f32 %v5577, %v5578
        %v5580 = vrot.slane %v5579, 1
        %v5581 = vadd.f32 %v5579, %v5580
        %v5582 = vmul.f32 %v5581, %v5014
        %v5583 = vmul.f32 %v5571, %v5571
        %v5584 = vmul.f32 %v5572, %v5572
        %v5585 = vsel %vm669, %v5583, 0.0
        %v5586 = vsel %vm669, %v5584, 0.0
        %v5587 = vadd.f32 %v5585, %v5586
        %v5588 = vrot.slane %v5587, 4
        %v5589 = vadd.f32 %v5587, %v5588
        %v5590 = vrot.slane %v5589, 2
        %v5591 = vadd.f32 %v5589, %v5590
        %v5592 = vrot.slane %v5591, 1
        %v5593 = vadd.f32 %v5591, %v5592
        %v5594 = vmul.f32 %v5593, %v5014
        %v5595 = vmul.f32 %v5582, %v5582
        %v5596 = vsub.f32 %v5594, %v5595
        %v5597 = vsub.f32 %v5571, %v5582
        %v5598 = vsub.f32 %v5572, %v5582
        %v5599 = vadd.f32 %v5596, 1e-05
        %v5600 = vrsqrt.pop %v5599
        %v5601 = vmul.f32 %v5597, %v5600
        %v5602 = vmul.f32 %v5598, %v5600
        %v5603 = vld [vmem:[%s636] sm:$0x1]
        %v5605 = vlaneseq
        %v5606 = vshrl.u32 %v5605, 7
        %v5607 = vsub.s32 0, %v5606
        %v5608 = vrot.slane %v5603, %v5607
        %v5610 = vmul.f32 %v5601, %v5608
        %v5611 = vmul.f32 %v5602, %v5608
        %v5612 = vld [vmem:[%s639] sm:$0x1]
        %v5614 = vlaneseq
        %v5615 = vshrl.u32 %v5614, 7
        %v5616 = vsub.s32 0, %v5615
        %v5617 = vrot.slane %v5612, %v5616
        %v5619 = vadd.f32 %v5610, %v5617
        %v5620 = vadd.f32 %v5611, %v5617
        %5621 = vst.msk [vmem:[#allocation2] sm:$0xff] %vm669, %v5619
        %5622 = vst.msk [vmem:[#allocation2 + $0x8] sm:$0xff] %vm669, %v5620
        %p5623 = scmp.eq.s32.totalorder %s28, 1
        // Predicated region
        $region77: #{graph_attention_encoder.1} parent=71 // pred_check
          %p5624 = pneg %p5623
        $region78: #{graph_attention_encoder.1} parent=71 // pred_check_branch
          %5626 = sbr.rel (%p5624) target = $region80
        $region79: #{graph_attention_encoder.1} parent=71 // pred_region
          %v5627 = vsel %vm669, %v5619, 0.0
          %v5628 = vrot.slane %v5627, 4
          %v5629 = vadd.f32 %v5627, %v5628
          %v5630 = vrot.slane %v5629, 2
          %v5631 = vadd.f32 %v5629, %v5630
          %v5632 = vrot.slane %v5631, 1
          %v5633 = vadd.f32 %v5631, %v5632
          %v5634 = vsel %vm669, %v5620, 0.0
          %v5635 = vrot.slane %v5634, 4
          %v5636 = vadd.f32 %v5634, %v5635
          %v5637 = vrot.slane %v5636, 2
          %v5638 = vadd.f32 %v5636, %v5637
          %v5639 = vrot.slane %v5638, 1
          %v5640 = vadd.f32 %v5638, %v5639
          %v5641 = vrcp.pop 8.0
          %v5642 = vmul.f32 %v5633, %v5641
          %v5643 = vmul.f32 %v5640, %v5641
          %vm5646 = vcmask 1041409
          %v5647 = vsel %vm5646, %v5643, %v5642
          %vm5649 = vcmask 254976
          %5650 = vst.msk [vmem:[#allocation4] sm:$0x3] %vm5649, %v5647
        $region80: #{graph_attention_encoder.1} parent=71 // pred_fallthru
          _
        // Predicated region
        $region81: #{graph_attention_encoder.1} parent=71 // pred_check
          %p5651 = pneg %p374
        $region82: #{graph_attention_encoder.1} parent=71 // pred_check_branch
          %5653 = sbr.rel (%p5651) target = $region84
        $region83: #{graph_attention_encoder.1} parent=71 // pred_region
          %s5655 = ssub.s32 256, 256
          %5656 = vsyncadd [#allocation3], %s5655
          %s5657 = sshll.u32 [#allocation2], 4
          %s5658 = int_to_ptr.vmem [resolvable:$true] %s5657
          %5663 = dma.vmem_to_hbm [thread:$0]  %s5658, 256, %s13, [#allocation3], 128, 128, 8
        $region84: #{graph_attention_encoder.1} parent=71 // pred_fallthru
          _
        // Predicated region
        $region85: #{graph_attention_encoder.1} parent=71 // pred_check
          %p5664 = pneg %p395
        $region86: #{graph_attention_encoder.1} parent=71 // pred_check_branch
          %5666 = sbr.rel (%p5664) target = $region88
        $region87: #{graph_attention_encoder.1} parent=71 // pred_region
          %s5668 = ssub.s32 32, 32
          %5669 = vsyncadd [#allocation5], %s5668
          %s5671 = sshll.u32 [#allocation4], 4
          %s5672 = int_to_ptr.vmem [resolvable:$true] %s5671
          %5674 = dma.vmem_to_hbm [thread:$0]  %s5672, 32, %s14, [#allocation5]
        $region88: #{graph_attention_encoder.1} parent=71 // pred_fallthru
          _
        // Predicated region
        $region89: #{graph_attention_encoder.1} parent=71 // pred_check
          %p5675 = pneg %p374
        $region90: #{graph_attention_encoder.1} parent=71 // pred_check_branch
          %5677 = sbr.rel (%p5675) target = $region92
        $region91: #{graph_attention_encoder.1} parent=71 // pred_region
          %5678 = dma.done [#allocation3], 256
        $region92: #{graph_attention_encoder.1} parent=71 // pred_fallthru
          _
        // Predicated region
        $region93: #{graph_attention_encoder.1} parent=71 // pred_check
          %p5679 = pneg %p395
        $region94: #{graph_attention_encoder.1} parent=71 // pred_check_branch
          %5681 = sbr.rel (%p5679) target = $region96
        $region95: #{graph_attention_encoder.1} parent=71 // pred_region
          %5682 = dma.done [#allocation5], 32
        $region96: #{graph_attention_encoder.1} parent=71 // pred_fallthru
          _
      $region72: #{graph_attention_encoder.1} parent=5 // pred_fallthru
        _
      %p5683 = scmp.le.s32.totalorder 2, %s23
      // Predicated region
      $region97: #{graph_attention_encoder.1} parent=5 // pred_check
        %p5684 = pneg %p5683
      $region98: #{graph_attention_encoder.1} parent=5 // pred_check_branch
        %5686 = sbr.rel (%p5684) target = $region100
      $region99: #{graph_attention_encoder.1} parent=5 // pred_region
        %s5687 = ssub.s32 %s23, 2
      $region100: #{graph_attention_encoder.1} parent=5 // pred_fallthru
        _
    $region6: #{graph_attention_encoder.1} parent=1 // loop_footer
      %s27 = sadd.s32 1, %s23
    $region7: #{graph_attention_encoder.1} parent=1 // loop_footer_branch
      %22 = sbr.rel target = $region3
    $region8: #{graph_attention_encoder.1} parent=1 // loop_exit
      _
    %5688 = vsyncpa [#allocation3], 1
    %s5689 = scalar_lea.sflag [#allocation3], 1
    %5690 = vsyncpa %s5689, 1
    %5691 = vsyncpa [#allocation5], 1

</llo_original>
